<compile_context>
chip_gen: v6e
topology: v6e:2x2x1
jax: 0.10.0
libtpu: 0.0.40
codegen_flags: <defaults>
</compile_context>

<pallas_src>
import functools

import jax
import jax.numpy as jnp
from jax import lax
from jax.experimental import pallas as pl
from jax.experimental.pallas import tpu as pltpu

# ----------------------------- config (small, consistent with the module) ----
PAD = 0                 # s2s.Constants.PAD
VOCAB = 20              # dicts.size()
WORD_VEC_SIZE = 32      # opt.word_vec_size
ENC_RNN_SIZE = 32       # opt.enc_rnn_size
BRNN = True             # opt.brnn
NUM_DIRECTIONS = 2 if BRNN else 1
HIDDEN = ENC_RNN_SIZE // NUM_DIRECTIONS
LAYERS = 2              # opt.layers
T = 8                   # seq len
B = 2                   # batch

LANE = 128              # lane-dense output width
SUBLANE = 8             # batch padded to one sublane tile
VOCAB_PAD = ((VOCAB + 7) // 8) * 8

assert NUM_DIRECTIONS == 2, "this kernel is specialized for the brnn=True config"


# ----------------------------- fused encoder kernel --------------------------
def _encoder_kernel(tok_ref, mask_ref, table_ref, *rest,
                    T, Bp, H, layers, vocab_pad, lane):
    """Whole encoder in one kernel invocation (no grid).

    Inputs:
      tok_ref   : (T*Bp, 1)   int32  padded tokens (padded rows = PAD)
      mask_ref  : (T*Bp, 2H)  f32    cols[:H] = valid(t), cols[H:] = valid(T-1-t)
      table_ref : (vocab_pad, E) f32 embedding table (PAD row zero)
      per layer l (4 refs):
        wih_blk : (2*in_l, 6H) f32   block-diag input proj, gate cols permuted
        bih     : (1, 6H)
        whh_blk : (2H, 6H)           block-diag recurrent proj
        bhh     : (1, 6H)
    Outputs (lane-dense, written once each at kernel end):
      out_ref : (T*Bp, lane)          last-layer outputs in cols [:2H]
      hid_ref : (layers*2*Bp, lane)   final hiddens in cols [:H],
                                      row blocks ordered layer*2 + direction
    Gate-column order everywhere: [r_f, r_b, z_f, z_b, n_f, n_b].
    """
    w_refs = rest[:4 * layers]
    out_ref = rest[4 * layers]
    hid_ref = rest[4 * layers + 1]

    TB = T * Bp
    H2, H4 = 2 * H, 4 * H

    # ---- embedding as one-hot matmul (PAD row of the table is zero) --------
    tok = tok_ref[...]                                              # (TB, 1)
    iota = lax.broadcasted_iota(jnp.int32, (TB, vocab_pad), 1)
    onehot = jnp.where(tok == iota, 1.0, 0.0).astype(jnp.float32)
    x = jnp.dot(onehot, table_ref[...],
                preferred_element_type=jnp.float32)                 # (TB, E)

    mask_cat = mask_ref[...]                                        # (TB, 2H)

    def time_rev(a):
        # reverse along the (static) time axis of a (T*Bp, .) slab
        return jnp.concatenate(
            [a[(T - 1 - t) * Bp:(T - t) * Bp] for t in range(T)], axis=0)

    # layer-0 augmented input: [x(t) | x(T-1-t)]
    x_aug = jnp.concatenate([x, time_rev(x)], axis=1)               # (TB, 2E)

    hid_blocks = []
    for l in range(layers):
        wih_ref, bih_ref, whh_ref, bhh_ref = w_refs[4 * l:4 * l + 4]

        # Hoisted input projection for BOTH directions: one MXU pass.
        gi_all = jnp.dot(x_aug, wih_ref[...],
                         preferred_element_type=jnp.float32) + bih_ref[...]

        whh = whh_ref[...]                                          # (2H, 6H)
        bhh = bhh_ref[...]                                          # (1, 6H)

        h = jnp.zeros((Bp, H2), jnp.float32)                        # [h_f|h_b]
        fwd_at = [None] * T
        bwd_at = [None] * T

        # Fully-unrolled recurrence; fwd processes time s, bwd time T-1-s.
        for s in range(T):
            gi = gi_all[s * Bp:(s + 1) * Bp]                        # (Bp, 6H)
            gh = jnp.dot(h, whh, preferred_element_type=jnp.float32) + bhh

            rz = jax.nn.sigmoid(gi[:, :H4] + gh[:, :H4])            # 1 sigmoid
            r = rz[:, :H2]
            z = rz[:, H2:]
            n = jnp.tanh(gi[:, H4:] + r * gh[:, H4:])               # 1 tanh
            h_new = (1.0 - z) * n + z * h

            m = mask_cat[s * Bp:(s + 1) * Bp]                       # (Bp, 2H)
            out = m * h_new                 # pack/unpack semantics => zeros
            h = out + (1.0 - m) * h         # freeze state past sequence end

            fwd_at[s] = out[:, :H]          # fwd output at time s
            bwd_at[T - 1 - s] = out[:, H:]  # bwd output at time T-1-s

        hid_blocks.append(h[:, :H])         # layer l, direction 0
        hid_blocks.append(h[:, H:])         # layer l, direction 1

        # Assemble the layer output slab once (register-resident, no scratch).
        y_time = [jnp.concatenate([fwd_at[t], bwd_at[t]], axis=1)
                  for t in range(T)]                                 # (Bp, 2H)
        y = jnp.concatenate(y_time, axis=0)                          # (TB, 2H)

        if l < layers - 1:
            # TODO(synk): nn.GRU inter-layer dropout is training-only; eval => identity.
            y_rev = jnp.concatenate(y_time[::-1], axis=0)
            x_aug = jnp.concatenate([y, y_rev], axis=1)              # (TB, 4H)
        else:
            pad = jnp.zeros((TB, lane - H2), jnp.float32)
            out_ref[...] = jnp.concatenate([y, pad], axis=1)         # 1 store

    hid = jnp.concatenate(hid_blocks, axis=0)                        # (2L*Bp, H)
    hid_pad = jnp.zeros((hid.shape[0], lane - H), jnp.float32)
    hid_ref[...] = jnp.concatenate([hid, hid_pad], axis=1)           # 1 store


# ----------------------------- parameter init (deterministic) ----------------
def init_params(key):
    params = {}
    k_emb, k_rnn = jax.random.split(key)
    emb = jax.random.normal(k_emb, (VOCAB, WORD_VEC_SIZE), jnp.float32)
    emb = emb.at[PAD].set(0.0)   # nn.Embedding padding_idx row is zero
    params["embedding"] = emb

    bound = 1.0 / jnp.sqrt(jnp.float32(HIDDEN))  # PyTorch GRU default init
    rnn = {}
    for l in range(LAYERS):
        in_size = WORD_VEC_SIZE if l == 0 else HIDDEN * NUM_DIRECTIONS
        for d in range(NUM_DIRECTIONS):
            k = jax.random.fold_in(k_rnn, l * 10 + d)
            k1, k2, k3, k4 = jax.random.split(k, 4)
            w_ih = jax.random.uniform(k1, (3 * HIDDEN, in_size), jnp.float32,
                                      -bound, bound)
            w_hh = jax.random.uniform(k2, (3 * HIDDEN, HIDDEN), jnp.float32,
                                      -bound, bound)
            b_ih = jax.random.uniform(k3, (3 * HIDDEN,), jnp.float32,
                                      -bound, bound)
            b_hh = jax.random.uniform(k4, (3 * HIDDEN,), jnp.float32,
                                      -bound, bound)
            rnn[(l, d)] = (w_ih, w_hh, b_ih, b_hh)
    params["rnn"] = rnn
    return params


# ----------------------------- one-time weight prepack ------------------------
def prepack_params(params):
    """Hoisted out of the per-call path: transposes, gate-column permutation
    ([r_f, r_b, z_f, z_b, n_f, n_b]), block-diagonal assembly, vocab padding."""
    H = HIDDEN

    def permute_cols(f, b):
        # f, b: (in, 3H) with cols [r|z|n]; returns fwd/bwd halves of the
        # permuted 6H columns as the two block-diagonal row groups.
        zf = jnp.zeros_like(f[:, :H])
        zb = jnp.zeros_like(b[:, :H])
        top = jnp.concatenate([f[:, :H], zf, f[:, H:2 * H], zf, f[:, 2 * H:], zf],
                              axis=1)
        bot = jnp.concatenate([zb, b[:, :H], zb, b[:, H:2 * H], zb, b[:, 2 * H:]],
                              axis=1)
        return jnp.concatenate([top, bot], axis=0)

    def permute_bias(f, b):
        return jnp.concatenate([f[:H], b[:H], f[H:2 * H], b[H:2 * H],
                                f[2 * H:], b[2 * H:]]).reshape(1, 6 * H)

    table_pad = jnp.zeros((VOCAB_PAD, WORD_VEC_SIZE), jnp.float32)
    table_pad = table_pad.at[:VOCAB].set(params["embedding"].astype(jnp.float32))

    packed = [table_pad]
    for l in range(LAYERS):
        w_ih_f, w_hh_f, b_ih_f, b_hh_f = params["rnn"][(l, 0)]
        w_ih_b, w_hh_b, b_ih_b, b_hh_b = params["rnn"][(l, 1)]
        wih_blk = permute_cols(w_ih_f.T, w_ih_b.T)      # (2*in, 6H)
        whh_blk = permute_cols(w_hh_f.T, w_hh_b.T)      # (2H, 6H)
        bih = permute_bias(b_ih_f, b_ih_b)              # (1, 6H)
        bhh = permute_bias(b_hh_f, b_hh_b)              # (1, 6H)
        packed += [wih_blk.astype(jnp.float32), bih.astype(jnp.float32),
                   whh_blk.astype(jnp.float32), bhh.astype(jnp.float32)]
    return tuple(packed)


# ----------------------------- Encoder.forward --------------------------------
@jax.jit
def encoder_forward(packed, tokens, lengths):
    """Returns (hidden_t, outputs) like the PyTorch module."""
    H = HIDDEN
    T_, B_ = tokens.shape
    Bp = ((B_ + SUBLANE - 1) // SUBLANE) * SUBLANE

    # Pad batch to a full sublane tile; padded rows get PAD tokens / length 0.
    tok_pad = jnp.pad(tokens.astype(jnp.int32), ((0, 0), (0, Bp - B_)),
                      constant_values=PAD)
    len_pad = jnp.pad(lengths.astype(jnp.int32), (0, Bp - B_))

    # Validity mask pre-broadcast to lane width H for both directions:
    # cols[:H] follow time t, cols[H:] follow time T-1-t.
    pos = jnp.arange(T_, dtype=jnp.int32)[:, None]                  # (T, 1)
    valid = (pos < len_pad[None, :]).astype(jnp.float32)            # (T, Bp)
    m_f = jnp.broadcast_to(valid[:, :, None], (T_, Bp, H))
    m_b = jnp.broadcast_to(valid[::-1][:, :, None], (T_, Bp, H))
    mask_cat = jnp.concatenate([m_f, m_b], axis=-1).reshape(T_ * Bp, 2 * H)

    tok_col = tok_pad.reshape(T_ * Bp, 1)

    kernel = functools.partial(_encoder_kernel, T=T_, Bp=Bp, H=H,
                               layers=LAYERS, vocab_pad=VOCAB_PAD, lane=LANE)
    n_in = 3 + 4 * LAYERS
    vmem_spec = pl.BlockSpec(memory_space=pltpu.MemorySpace.VMEM)

    out_pad, hid_pad = pl.pallas_call(
        kernel,
        out_shape=(jax.ShapeDtypeStruct((T_ * Bp, LANE), jnp.float32),
                   jax.ShapeDtypeStruct((LAYERS * 2 * Bp, LANE), jnp.float32)),
        in_specs=[vmem_spec] * n_in,
        out_specs=(vmem_spec, vmem_spec),
    )(tok_col, mask_cat, *packed)

    outputs = out_pad.reshape(T_, Bp, LANE)[:, :B_, :2 * H]         # (T, B, 2H)
    hidden_t = hid_pad.reshape(LAYERS * 2, Bp, LANE)[:, :B_, :H]    # (2L, B, H)
    return hidden_t, outputs


# ----------------------------- pure-JAX reference (for verification) ---------
def _gru_dir_ref(x, lengths, w_ih, w_hh, b_ih, b_hh, H, reverse):
    T_, B_, _ = x.shape
    ts = jnp.arange(T_)
    if reverse:
        ts = ts[::-1]

    def step(h, t):
        x_t = x[t]
        gi = x_t @ w_ih.T + b_ih
        gh = h @ w_hh.T + b_hh
        r = jax.nn.sigmoid(gi[:, :H] + gh[:, :H])
        z = jax.nn.sigmoid(gi[:, H:2 * H] + gh[:, H:2 * H])
        n = jnp.tanh(gi[:, 2 * H:] + r * gh[:, 2 * H:])
        h_new = (1.0 - z) * n + z * h
        valid = (t < lengths)[:, None]
        h_next = jnp.where(valid, h_new, h)
        o = jnp.where(valid, h_new, 0.0)
        return h_next, (t, o)

    h_fin, (ts_out, outs) = lax.scan(step, jnp.zeros((B_, H), jnp.float32), ts)
    out = jnp.zeros((T_, B_, H), jnp.float32).at[ts_out].set(outs)
    return out, h_fin


def encoder_forward_ref(params, tokens, lengths):
    emb = jnp.take(params["embedding"], tokens, axis=0)
    layer_input = emb
    hiddens = []
    for l in range(LAYERS):
        dir_outs = []
        for d in range(NUM_DIRECTIONS):
            w_ih, w_hh, b_ih, b_hh = params["rnn"][(l, d)]
            out, h = _gru_dir_ref(layer_input, lengths, w_ih, w_hh, b_ih,
                                  b_hh, HIDDEN, reverse=(d == 1))
            dir_outs.append(out)
            hiddens.append(h)
        layer_input = jnp.concatenate(dir_outs, axis=-1)
    return jnp.stack(hiddens, axis=0), layer_input


# ----------------------------- main -------------------------------------------
if __name__ == "__main__":
    key = jax.random.PRNGKey(0)
    params = init_params(key)
    packed = prepack_params(params)          # one-time, outside per-call path

    # tokens: (T, B) in [1, VOCAB), with positions past each length set to PAD
    tok_key = jax.random.fold_in(key, 123)
    tokens = jax.random.randint(tok_key, (T, B), 1, VOCAB, dtype=jnp.int32)
    lengths = jnp.array([T, 5], dtype=jnp.int32)            # sorted descending
    pos = jnp.arange(T)[:, None]
    tokens = jnp.where(pos < lengths[None, :], tokens, PAD)

    hidden_t, outputs = encoder_forward(packed, tokens, lengths)
    hidden_t = jax.block_until_ready(hidden_t)
    outputs = jax.block_until_ready(outputs)

    # verify against pure-JAX reference
    hidden_ref, outputs_ref = encoder_forward_ref(params, tokens, lengths)
    assert hidden_t.shape == (LAYERS * NUM_DIRECTIONS, B, HIDDEN)
    assert outputs.shape == (T, B, NUM_DIRECTIONS * HIDDEN)
    assert jnp.allclose(hidden_t, hidden_ref, atol=2e-3, rtol=2e-3)
    assert jnp.allclose(outputs, outputs_ref, atol=2e-3, rtol=2e-3)

    print("KERNEL_OK")
</pallas_src>

<mosaic_0001>
module attributes {stable_mosaic.version = 11 : i64} {
  func.func @_encoder_kernel(%arg0: memref<64x1xi32, #tpu.memory_space<vmem>>, %arg1: memref<64x32xf32, #tpu.memory_space<vmem>>, %arg2: memref<24x32xf32, #tpu.memory_space<vmem>>, %arg3: memref<64x96xf32, #tpu.memory_space<vmem>>, %arg4: memref<1x96xf32, #tpu.memory_space<vmem>>, %arg5: memref<32x96xf32, #tpu.memory_space<vmem>>, %arg6: memref<1x96xf32, #tpu.memory_space<vmem>>, %arg7: memref<64x96xf32, #tpu.memory_space<vmem>>, %arg8: memref<1x96xf32, #tpu.memory_space<vmem>>, %arg9: memref<32x96xf32, #tpu.memory_space<vmem>>, %arg10: memref<1x96xf32, #tpu.memory_space<vmem>>, %arg11: memref<64x128xf32, #tpu.memory_space<vmem>>, %arg12: memref<32x128xf32, #tpu.memory_space<vmem>>) attributes {dimension_semantics = [], scalar_prefetch = 0 : i64, scratch_operands = 0 : i64, tpu.core_type = #tpu.core_type<tc>} {
    %c0 = arith.constant 0 : index
    %c0_0 = arith.constant 0 : index
    %0 = vector.load %arg0[%c0, %c0_0] : memref<64x1xi32, #tpu.memory_space<vmem>>, vector<64x1xi32>
    %1 = tpu.iota {dimensions = array<i32: 1>} : vector<64x24xi32>
    %2 = vector.broadcast %0 : vector<64x1xi32> to vector<64x24xi32>
    %3 = arith.cmpi eq, %2, %1 : vector<64x24xi32>
    %cst = arith.constant 1.000000e+00 : f32
    %cst_1 = arith.constant 0.000000e+00 : f32
    %4 = vector.broadcast %cst : f32 to vector<64x24xf32>
    %5 = vector.broadcast %cst_1 : f32 to vector<64x24xf32>
    %6 = arith.select %3, %4, %5 : vector<64x24xi1>, vector<64x24xf32>
    %c0_2 = arith.constant 0 : index
    %c0_3 = arith.constant 0 : index
    %7 = vector.load %arg2[%c0_2, %c0_3] : memref<24x32xf32, #tpu.memory_space<vmem>>, vector<24x32xf32>
    %cst_4 = arith.constant dense<0.000000e+00> : vector<64x32xf32>
    %8 = tpu.matmul %6, %7, %cst_4 {dimension_numbers = #tpu.dot_dimension_numbers<[1], [0], [0], [1], [0, 0, 1, 1], [], []>} : vector<64x24xf32>, vector<24x32xf32>, vector<64x32xf32> -> vector<64x32xf32>
    %c0_5 = arith.constant 0 : index
    %c0_6 = arith.constant 0 : index
    %9 = vector.load %arg1[%c0_5, %c0_6] : memref<64x32xf32, #tpu.memory_space<vmem>>, vector<64x32xf32>
    %10 = vector.extract_strided_slice %8 {offsets = [56, 0], sizes = [8, 32], strides = [1, 1]} : vector<64x32xf32> to vector<8x32xf32>
    %11 = vector.extract_strided_slice %8 {offsets = [48, 0], sizes = [8, 32], strides = [1, 1]} : vector<64x32xf32> to vector<8x32xf32>
    %12 = vector.extract_strided_slice %8 {offsets = [40, 0], sizes = [8, 32], strides = [1, 1]} : vector<64x32xf32> to vector<8x32xf32>
    %13 = vector.extract_strided_slice %8 {offsets = [32, 0], sizes = [8, 32], strides = [1, 1]} : vector<64x32xf32> to vector<8x32xf32>
    %14 = vector.extract_strided_slice %8 {offsets = [24, 0], sizes = [8, 32], strides = [1, 1]} : vector<64x32xf32> to vector<8x32xf32>
    %15 = vector.extract_strided_slice %8 {offsets = [16, 0], sizes = [8, 32], strides = [1, 1]} : vector<64x32xf32> to vector<8x32xf32>
    %16 = vector.extract_strided_slice %8 {offsets = [8, 0], sizes = [8, 32], strides = [1, 1]} : vector<64x32xf32> to vector<8x32xf32>
    %17 = vector.extract_strided_slice %8 {offsets = [0, 0], sizes = [8, 32], strides = [1, 1]} : vector<64x32xf32> to vector<8x32xf32>
    %18 = tpu.concatenate %10, %11, %12, %13, %14, %15, %16, %17 in 0 : vector<8x32xf32>, vector<8x32xf32>, vector<8x32xf32>, vector<8x32xf32>, vector<8x32xf32>, vector<8x32xf32>, vector<8x32xf32>, vector<8x32xf32> -> vector<64x32xf32>
    %19 = tpu.concatenate %8, %18 in 1 : vector<64x32xf32>, vector<64x32xf32> -> vector<64x64xf32>
    %c0_7 = arith.constant 0 : index
    %c0_8 = arith.constant 0 : index
    %20 = vector.load %arg3[%c0_7, %c0_8] : memref<64x96xf32, #tpu.memory_space<vmem>>, vector<64x96xf32>
    %cst_9 = arith.constant dense<0.000000e+00> : vector<64x96xf32>
    %21 = tpu.matmul %19, %20, %cst_9 {dimension_numbers = #tpu.dot_dimension_numbers<[1], [0], [0], [1], [0, 0, 1, 1], [], []>} : vector<64x64xf32>, vector<64x96xf32>, vector<64x96xf32> -> vector<64x96xf32>
    %c0_10 = arith.constant 0 : index
    %c0_11 = arith.constant 0 : index
    %22 = vector.load %arg4[%c0_10, %c0_11] : memref<1x96xf32, #tpu.memory_space<vmem>>, vector<1x96xf32>
    %23 = vector.broadcast %22 : vector<1x96xf32> to vector<64x96xf32>
    %24 = arith.addf %21, %23 : vector<64x96xf32>
    %c0_12 = arith.constant 0 : index
    %c0_13 = arith.constant 0 : index
    %25 = vector.load %arg5[%c0_12, %c0_13] : memref<32x96xf32, #tpu.memory_space<vmem>>, vector<32x96xf32>
    %c0_14 = arith.constant 0 : index
    %c0_15 = arith.constant 0 : index
    %26 = vector.load %arg6[%c0_14, %c0_15] : memref<1x96xf32, #tpu.memory_space<vmem>>, vector<1x96xf32>
    %cst_16 = arith.constant 0.000000e+00 : f32
    %27 = vector.broadcast %cst_16 : f32 to vector<8x32xf32>
    %28 = vector.extract_strided_slice %24 {offsets = [0, 0], sizes = [8, 96], strides = [1, 1]} : vector<64x96xf32> to vector<8x96xf32>
    %cst_17 = arith.constant dense<0.000000e+00> : vector<8x96xf32>
    %29 = tpu.matmul %27, %25, %cst_17 {dimension_numbers = #tpu.dot_dimension_numbers<[1], [0], [0], [1], [0, 0, 1, 1], [], []>} : vector<8x32xf32>, vector<32x96xf32>, vector<8x96xf32> -> vector<8x96xf32>
    %30 = vector.broadcast %26 : vector<1x96xf32> to vector<8x96xf32>
    %31 = arith.addf %29, %30 : vector<8x96xf32>
    %32 = vector.extract_strided_slice %28 {offsets = [0, 0], sizes = [8, 64], strides = [1, 1]} : vector<8x96xf32> to vector<8x64xf32>
    %33 = vector.extract_strided_slice %31 {offsets = [0, 0], sizes = [8, 64], strides = [1, 1]} : vector<8x96xf32> to vector<8x64xf32>
    %34 = arith.addf %32, %33 : vector<8x64xf32>
    %35 = arith.negf %34 : vector<8x64xf32>
    %36 = math.exp %35 : vector<8x64xf32>
    %cst_18 = arith.constant 1.000000e+00 : f32
    %37 = vector.broadcast %cst_18 : f32 to vector<8x64xf32>
    %38 = arith.addf %37, %36 : vector<8x64xf32>
    %39 = arith.divf %37, %38 : vector<8x64xf32>
    %40 = vector.extract_strided_slice %39 {offsets = [0, 0], sizes = [8, 32], strides = [1, 1]} : vector<8x64xf32> to vector<8x32xf32>
    %41 = vector.extract_strided_slice %39 {offsets = [0, 32], sizes = [8, 32], strides = [1, 1]} : vector<8x64xf32> to vector<8x32xf32>
    %42 = vector.extract_strided_slice %28 {offsets = [0, 64], sizes = [8, 32], strides = [1, 1]} : vector<8x96xf32> to vector<8x32xf32>
    %43 = vector.extract_strided_slice %31 {offsets = [0, 64], sizes = [8, 32], strides = [1, 1]} : vector<8x96xf32> to vector<8x32xf32>
    %44 = arith.mulf %40, %43 : vector<8x32xf32>
    %45 = arith.addf %42, %44 : vector<8x32xf32>
    %46 = math.tanh %45 : vector<8x32xf32>
    %cst_19 = arith.constant 1.000000e+00 : f32
    %47 = vector.broadcast %cst_19 : f32 to vector<8x32xf32>
    %48 = arith.subf %47, %41 : vector<8x32xf32>
    %49 = arith.mulf %48, %46 : vector<8x32xf32>
    %50 = arith.mulf %41, %27 : vector<8x32xf32>
    %51 = arith.addf %49, %50 : vector<8x32xf32>
    %52 = vector.extract_strided_slice %9 {offsets = [0, 0], sizes = [8, 32], strides = [1, 1]} : vector<64x32xf32> to vector<8x32xf32>
    %53 = arith.mulf %52, %51 : vector<8x32xf32>
    %cst_20 = arith.constant 1.000000e+00 : f32
    %54 = vector.broadcast %cst_20 : f32 to vector<8x32xf32>
    %55 = arith.subf %54, %52 : vector<8x32xf32>
    %56 = arith.mulf %55, %27 : vector<8x32xf32>
    %57 = arith.addf %53, %56 : vector<8x32xf32>
    %58 = vector.extract_strided_slice %53 {offsets = [0, 0], sizes = [8, 16], strides = [1, 1]} : vector<8x32xf32> to vector<8x16xf32>
    %59 = vector.extract_strided_slice %53 {offsets = [0, 16], sizes = [8, 16], strides = [1, 1]} : vector<8x32xf32> to vector<8x16xf32>
    %60 = vector.extract_strided_slice %24 {offsets = [8, 0], sizes = [8, 96], strides = [1, 1]} : vector<64x96xf32> to vector<8x96xf32>
    %cst_21 = arith.constant dense<0.000000e+00> : vector<8x96xf32>
    %61 = tpu.matmul %57, %25, %cst_21 {dimension_numbers = #tpu.dot_dimension_numbers<[1], [0], [0], [1], [0, 0, 1, 1], [], []>} : vector<8x32xf32>, vector<32x96xf32>, vector<8x96xf32> -> vector<8x96xf32>
    %62 = vector.broadcast %26 : vector<1x96xf32> to vector<8x96xf32>
    %63 = arith.addf %61, %62 : vector<8x96xf32>
    %64 = vector.extract_strided_slice %60 {offsets = [0, 0], sizes = [8, 64], strides = [1, 1]} : vector<8x96xf32> to vector<8x64xf32>
    %65 = vector.extract_strided_slice %63 {offsets = [0, 0], sizes = [8, 64], strides = [1, 1]} : vector<8x96xf32> to vector<8x64xf32>
    %66 = arith.addf %64, %65 : vector<8x64xf32>
    %67 = arith.negf %66 : vector<8x64xf32>
    %68 = math.exp %67 : vector<8x64xf32>
    %cst_22 = arith.constant 1.000000e+00 : f32
    %69 = vector.broadcast %cst_22 : f32 to vector<8x64xf32>
    %70 = arith.addf %69, %68 : vector<8x64xf32>
    %71 = arith.divf %69, %70 : vector<8x64xf32>
    %72 = vector.extract_strided_slice %71 {offsets = [0, 0], sizes = [8, 32], strides = [1, 1]} : vector<8x64xf32> to vector<8x32xf32>
    %73 = vector.extract_strided_slice %71 {offsets = [0, 32], sizes = [8, 32], strides = [1, 1]} : vector<8x64xf32> to vector<8x32xf32>
    %74 = vector.extract_strided_slice %60 {offsets = [0, 64], sizes = [8, 32], strides = [1, 1]} : vector<8x96xf32> to vector<8x32xf32>
    %75 = vector.extract_strided_slice %63 {offsets = [0, 64], sizes = [8, 32], strides = [1, 1]} : vector<8x96xf32> to vector<8x32xf32>
    %76 = arith.mulf %72, %75 : vector<8x32xf32>
    %77 = arith.addf %74, %76 : vector<8x32xf32>
    %78 = math.tanh %77 : vector<8x32xf32>
    %cst_23 = arith.constant 1.000000e+00 : f32
    %79 = vector.broadcast %cst_23 : f32 to vector<8x32xf32>
    %80 = arith.subf %79, %73 : vector<8x32xf32>
    %81 = arith.mulf %80, %78 : vector<8x32xf32>
    %82 = arith.mulf %73, %57 : vector<8x32xf32>
    %83 = arith.addf %81, %82 : vector<8x32xf32>
    %84 = vector.extract_strided_slice %9 {offsets = [8, 0], sizes = [8, 32], strides = [1, 1]} : vector<64x32xf32> to vector<8x32xf32>
    %85 = arith.mulf %84, %83 : vector<8x32xf32>
    %cst_24 = arith.constant 1.000000e+00 : f32
    %86 = vector.broadcast %cst_24 : f32 to vector<8x32xf32>
    %87 = arith.subf %86, %84 : vector<8x32xf32>
    %88 = arith.mulf %87, %57 : vector<8x32xf32>
    %89 = arith.addf %85, %88 : vector<8x32xf32>
    %90 = vector.extract_strided_slice %85 {offsets = [0, 0], sizes = [8, 16], strides = [1, 1]} : vector<8x32xf32> to vector<8x16xf32>
    %91 = vector.extract_strided_slice %85 {offsets = [0, 16], sizes = [8, 16], strides = [1, 1]} : vector<8x32xf32> to vector<8x16xf32>
    %92 = vector.extract_strided_slice %24 {offsets = [16, 0], sizes = [8, 96], strides = [1, 1]} : vector<64x96xf32> to vector<8x96xf32>
    %cst_25 = arith.constant dense<0.000000e+00> : vector<8x96xf32>
    %93 = tpu.matmul %89, %25, %cst_25 {dimension_numbers = #tpu.dot_dimension_numbers<[1], [0], [0], [1], [0, 0, 1, 1], [], []>} : vector<8x32xf32>, vector<32x96xf32>, vector<8x96xf32> -> vector<8x96xf32>
    %94 = vector.broadcast %26 : vector<1x96xf32> to vector<8x96xf32>
    %95 = arith.addf %93, %94 : vector<8x96xf32>
    %96 = vector.extract_strided_slice %92 {offsets = [0, 0], sizes = [8, 64], strides = [1, 1]} : vector<8x96xf32> to vector<8x64xf32>
    %97 = vector.extract_strided_slice %95 {offsets = [0, 0], sizes = [8, 64], strides = [1, 1]} : vector<8x96xf32> to vector<8x64xf32>
    %98 = arith.addf %96, %97 : vector<8x64xf32>
    %99 = arith.negf %98 : vector<8x64xf32>
    %100 = math.exp %99 : vector<8x64xf32>
    %cst_26 = arith.constant 1.000000e+00 : f32
    %101 = vector.broadcast %cst_26 : f32 to vector<8x64xf32>
    %102 = arith.addf %101, %100 : vector<8x64xf32>
    %103 = arith.divf %101, %102 : vector<8x64xf32>
    %104 = vector.extract_strided_slice %103 {offsets = [0, 0], sizes = [8, 32], strides = [1, 1]} : vector<8x64xf32> to vector<8x32xf32>
    %105 = vector.extract_strided_slice %103 {offsets = [0, 32], sizes = [8, 32], strides = [1, 1]} : vector<8x64xf32> to vector<8x32xf32>
    %106 = vector.extract_strided_slice %92 {offsets = [0, 64], sizes = [8, 32], strides = [1, 1]} : vector<8x96xf32> to vector<8x32xf32>
    %107 = vector.extract_strided_slice %95 {offsets = [0, 64], sizes = [8, 32], strides = [1, 1]} : vector<8x96xf32> to vector<8x32xf32>
    %108 = arith.mulf %104, %107 : vector<8x32xf32>
    %109 = arith.addf %106, %108 : vector<8x32xf32>
    %110 = math.tanh %109 : vector<8x32xf32>
    %cst_27 = arith.constant 1.000000e+00 : f32
    %111 = vector.broadcast %cst_27 : f32 to vector<8x32xf32>
    %112 = arith.subf %111, %105 : vector<8x32xf32>
    %113 = arith.mulf %112, %110 : vector<8x32xf32>
    %114 = arith.mulf %105, %89 : vector<8x32xf32>
    %115 = arith.addf %113, %114 : vector<8x32xf32>
    %116 = vector.extract_strided_slice %9 {offsets = [16, 0], sizes = [8, 32], strides = [1, 1]} : vector<64x32xf32> to vector<8x32xf32>
    %117 = arith.mulf %116, %115 : vector<8x32xf32>
    %cst_28 = arith.constant 1.000000e+00 : f32
    %118 = vector.broadcast %cst_28 : f32 to vector<8x32xf32>
    %119 = arith.subf %118, %116 : vector<8x32xf32>
    %120 = arith.mulf %119, %89 : vector<8x32xf32>
    %121 = arith.addf %117, %120 : vector<8x32xf32>
    %122 = vector.extract_strided_slice %117 {offsets = [0, 0], sizes = [8, 16], strides = [1, 1]} : vector<8x32xf32> to vector<8x16xf32>
    %123 = vector.extract_strided_slice %117 {offsets = [0, 16], sizes = [8, 16], strides = [1, 1]} : vector<8x32xf32> to vector<8x16xf32>
    %124 = vector.extract_strided_slice %24 {offsets = [24, 0], sizes = [8, 96], strides = [1, 1]} : vector<64x96xf32> to vector<8x96xf32>
    %cst_29 = arith.constant dense<0.000000e+00> : vector<8x96xf32>
    %125 = tpu.matmul %121, %25, %cst_29 {dimension_numbers = #tpu.dot_dimension_numbers<[1], [0], [0], [1], [0, 0, 1, 1], [], []>} : vector<8x32xf32>, vector<32x96xf32>, vector<8x96xf32> -> vector<8x96xf32>
    %126 = vector.broadcast %26 : vector<1x96xf32> to vector<8x96xf32>
    %127 = arith.addf %125, %126 : vector<8x96xf32>
    %128 = vector.extract_strided_slice %124 {offsets = [0, 0], sizes = [8, 64], strides = [1, 1]} : vector<8x96xf32> to vector<8x64xf32>
    %129 = vector.extract_strided_slice %127 {offsets = [0, 0], sizes = [8, 64], strides = [1, 1]} : vector<8x96xf32> to vector<8x64xf32>
    %130 = arith.addf %128, %129 : vector<8x64xf32>
    %131 = arith.negf %130 : vector<8x64xf32>
    %132 = math.exp %131 : vector<8x64xf32>
    %cst_30 = arith.constant 1.000000e+00 : f32
    %133 = vector.broadcast %cst_30 : f32 to vector<8x64xf32>
    %134 = arith.addf %133, %132 : vector<8x64xf32>
    %135 = arith.divf %133, %134 : vector<8x64xf32>
    %136 = vector.extract_strided_slice %135 {offsets = [0, 0], sizes = [8, 32], strides = [1, 1]} : vector<8x64xf32> to vector<8x32xf32>
    %137 = vector.extract_strided_slice %135 {offsets = [0, 32], sizes = [8, 32], strides = [1, 1]} : vector<8x64xf32> to vector<8x32xf32>
    %138 = vector.extract_strided_slice %124 {offsets = [0, 64], sizes = [8, 32], strides = [1, 1]} : vector<8x96xf32> to vector<8x32xf32>
    %139 = vector.extract_strided_slice %127 {offsets = [0, 64], sizes = [8, 32], strides = [1, 1]} : vector<8x96xf32> to vector<8x32xf32>
    %140 = arith.mulf %136, %139 : vector<8x32xf32>
    %141 = arith.addf %138, %140 : vector<8x32xf32>
    %142 = math.tanh %141 : vector<8x32xf32>
    %cst_31 = arith.constant 1.000000e+00 : f32
    %143 = vector.broadcast %cst_31 : f32 to vector<8x32xf32>
    %144 = arith.subf %143, %137 : vector<8x32xf32>
    %145 = arith.mulf %144, %142 : vector<8x32xf32>
    %146 = arith.mulf %137, %121 : vector<8x32xf32>
    %147 = arith.addf %145, %146 : vector<8x32xf32>
    %148 = vector.extract_strided_slice %9 {offsets = [24, 0], sizes = [8, 32], strides = [1, 1]} : vector<64x32xf32> to vector<8x32xf32>
    %149 = arith.mulf %148, %147 : vector<8x32xf32>
    %cst_32 = arith.constant 1.000000e+00 : f32
    %150 = vector.broadcast %cst_32 : f32 to vector<8x32xf32>
    %151 = arith.subf %150, %148 : vector<8x32xf32>
    %152 = arith.mulf %151, %121 : vector<8x32xf32>
    %153 = arith.addf %149, %152 : vector<8x32xf32>
    %154 = vector.extract_strided_slice %149 {offsets = [0, 0], sizes = [8, 16], strides = [1, 1]} : vector<8x32xf32> to vector<8x16xf32>
    %155 = vector.extract_strided_slice %149 {offsets = [0, 16], sizes = [8, 16], strides = [1, 1]} : vector<8x32xf32> to vector<8x16xf32>
    %156 = vector.extract_strided_slice %24 {offsets = [32, 0], sizes = [8, 96], strides = [1, 1]} : vector<64x96xf32> to vector<8x96xf32>
    %cst_33 = arith.constant dense<0.000000e+00> : vector<8x96xf32>
    %157 = tpu.matmul %153, %25, %cst_33 {dimension_numbers = #tpu.dot_dimension_numbers<[1], [0], [0], [1], [0, 0, 1, 1], [], []>} : vector<8x32xf32>, vector<32x96xf32>, vector<8x96xf32> -> vector<8x96xf32>
    %158 = vector.broadcast %26 : vector<1x96xf32> to vector<8x96xf32>
    %159 = arith.addf %157, %158 : vector<8x96xf32>
    %160 = vector.extract_strided_slice %156 {offsets = [0, 0], sizes = [8, 64], strides = [1, 1]} : vector<8x96xf32> to vector<8x64xf32>
    %161 = vector.extract_strided_slice %159 {offsets = [0, 0], sizes = [8, 64], strides = [1, 1]} : vector<8x96xf32> to vector<8x64xf32>
    %162 = arith.addf %160, %161 : vector<8x64xf32>
    %163 = arith.negf %162 : vector<8x64xf32>
    %164 = math.exp %163 : vector<8x64xf32>
    %cst_34 = arith.constant 1.000000e+00 : f32
    %165 = vector.broadcast %cst_34 : f32 to vector<8x64xf32>
    %166 = arith.addf %165, %164 : vector<8x64xf32>
    %167 = arith.divf %165, %166 : vector<8x64xf32>
    %168 = vector.extract_strided_slice %167 {offsets = [0, 0], sizes = [8, 32], strides = [1, 1]} : vector<8x64xf32> to vector<8x32xf32>
    %169 = vector.extract_strided_slice %167 {offsets = [0, 32], sizes = [8, 32], strides = [1, 1]} : vector<8x64xf32> to vector<8x32xf32>
    %170 = vector.extract_strided_slice %156 {offsets = [0, 64], sizes = [8, 32], strides = [1, 1]} : vector<8x96xf32> to vector<8x32xf32>
    %171 = vector.extract_strided_slice %159 {offsets = [0, 64], sizes = [8, 32], strides = [1, 1]} : vector<8x96xf32> to vector<8x32xf32>
    %172 = arith.mulf %168, %171 : vector<8x32xf32>
    %173 = arith.addf %170, %172 : vector<8x32xf32>
    %174 = math.tanh %173 : vector<8x32xf32>
    %cst_35 = arith.constant 1.000000e+00 : f32
    %175 = vector.broadcast %cst_35 : f32 to vector<8x32xf32>
    %176 = arith.subf %175, %169 : vector<8x32xf32>
    %177 = arith.mulf %176, %174 : vector<8x32xf32>
    %178 = arith.mulf %169, %153 : vector<8x32xf32>
    %179 = arith.addf %177, %178 : vector<8x32xf32>
    %180 = vector.extract_strided_slice %9 {offsets = [32, 0], sizes = [8, 32], strides = [1, 1]} : vector<64x32xf32> to vector<8x32xf32>
    %181 = arith.mulf %180, %179 : vector<8x32xf32>
    %cst_36 = arith.constant 1.000000e+00 : f32
    %182 = vector.broadcast %cst_36 : f32 to vector<8x32xf32>
    %183 = arith.subf %182, %180 : vector<8x32xf32>
    %184 = arith.mulf %183, %153 : vector<8x32xf32>
    %185 = arith.addf %181, %184 : vector<8x32xf32>
    %186 = vector.extract_strided_slice %181 {offsets = [0, 0], sizes = [8, 16], strides = [1, 1]} : vector<8x32xf32> to vector<8x16xf32>
    %187 = vector.extract_strided_slice %181 {offsets = [0, 16], sizes = [8, 16], strides = [1, 1]} : vector<8x32xf32> to vector<8x16xf32>
    %188 = vector.extract_strided_slice %24 {offsets = [40, 0], sizes = [8, 96], strides = [1, 1]} : vector<64x96xf32> to vector<8x96xf32>
    %cst_37 = arith.constant dense<0.000000e+00> : vector<8x96xf32>
    %189 = tpu.matmul %185, %25, %cst_37 {dimension_numbers = #tpu.dot_dimension_numbers<[1], [0], [0], [1], [0, 0, 1, 1], [], []>} : vector<8x32xf32>, vector<32x96xf32>, vector<8x96xf32> -> vector<8x96xf32>
    %190 = vector.broadcast %26 : vector<1x96xf32> to vector<8x96xf32>
    %191 = arith.addf %189, %190 : vector<8x96xf32>
    %192 = vector.extract_strided_slice %188 {offsets = [0, 0], sizes = [8, 64], strides = [1, 1]} : vector<8x96xf32> to vector<8x64xf32>
    %193 = vector.extract_strided_slice %191 {offsets = [0, 0], sizes = [8, 64], strides = [1, 1]} : vector<8x96xf32> to vector<8x64xf32>
    %194 = arith.addf %192, %193 : vector<8x64xf32>
    %195 = arith.negf %194 : vector<8x64xf32>
    %196 = math.exp %195 : vector<8x64xf32>
    %cst_38 = arith.constant 1.000000e+00 : f32
    %197 = vector.broadcast %cst_38 : f32 to vector<8x64xf32>
    %198 = arith.addf %197, %196 : vector<8x64xf32>
    %199 = arith.divf %197, %198 : vector<8x64xf32>
    %200 = vector.extract_strided_slice %199 {offsets = [0, 0], sizes = [8, 32], strides = [1, 1]} : vector<8x64xf32> to vector<8x32xf32>
    %201 = vector.extract_strided_slice %199 {offsets = [0, 32], sizes = [8, 32], strides = [1, 1]} : vector<8x64xf32> to vector<8x32xf32>
    %202 = vector.extract_strided_slice %188 {offsets = [0, 64], sizes = [8, 32], strides = [1, 1]} : vector<8x96xf32> to vector<8x32xf32>
    %203 = vector.extract_strided_slice %191 {offsets = [0, 64], sizes = [8, 32], strides = [1, 1]} : vector<8x96xf32> to vector<8x32xf32>
    %204 = arith.mulf %200, %203 : vector<8x32xf32>
    %205 = arith.addf %202, %204 : vector<8x32xf32>
    %206 = math.tanh %205 : vector<8x32xf32>
    %cst_39 = arith.constant 1.000000e+00 : f32
    %207 = vector.broadcast %cst_39 : f32 to vector<8x32xf32>
    %208 = arith.subf %207, %201 : vector<8x32xf32>
    %209 = arith.mulf %208, %206 : vector<8x32xf32>
    %210 = arith.mulf %201, %185 : vector<8x32xf32>
    %211 = arith.addf %209, %210 : vector<8x32xf32>
    %212 = vector.extract_strided_slice %9 {offsets = [40, 0], sizes = [8, 32], strides = [1, 1]} : vector<64x32xf32> to vector<8x32xf32>
    %213 = arith.mulf %212, %211 : vector<8x32xf32>
    %cst_40 = arith.constant 1.000000e+00 : f32
    %214 = vector.broadcast %cst_40 : f32 to vector<8x32xf32>
    %215 = arith.subf %214, %212 : vector<8x32xf32>
    %216 = arith.mulf %215, %185 : vector<8x32xf32>
    %217 = arith.addf %213, %216 : vector<8x32xf32>
    %218 = vector.extract_strided_slice %213 {offsets = [0, 0], sizes = [8, 16], strides = [1, 1]} : vector<8x32xf32> to vector<8x16xf32>
    %219 = vector.extract_strided_slice %213 {offsets = [0, 16], sizes = [8, 16], strides = [1, 1]} : vector<8x32xf32> to vector<8x16xf32>
    %220 = vector.extract_strided_slice %24 {offsets = [48, 0], sizes = [8, 96], strides = [1, 1]} : vector<64x96xf32> to vector<8x96xf32>
    %cst_41 = arith.constant dense<0.000000e+00> : vector<8x96xf32>
    %221 = tpu.matmul %217, %25, %cst_41 {dimension_numbers = #tpu.dot_dimension_numbers<[1], [0], [0], [1], [0, 0, 1, 1], [], []>} : vector<8x32xf32>, vector<32x96xf32>, vector<8x96xf32> -> vector<8x96xf32>
    %222 = vector.broadcast %26 : vector<1x96xf32> to vector<8x96xf32>
    %223 = arith.addf %221, %222 : vector<8x96xf32>
    %224 = vector.extract_strided_slice %220 {offsets = [0, 0], sizes = [8, 64], strides = [1, 1]} : vector<8x96xf32> to vector<8x64xf32>
    %225 = vector.extract_strided_slice %223 {offsets = [0, 0], sizes = [8, 64], strides = [1, 1]} : vector<8x96xf32> to vector<8x64xf32>
    %226 = arith.addf %224, %225 : vector<8x64xf32>
    %227 = arith.negf %226 : vector<8x64xf32>
    %228 = math.exp %227 : vector<8x64xf32>
    %cst_42 = arith.constant 1.000000e+00 : f32
    %229 = vector.broadcast %cst_42 : f32 to vector<8x64xf32>
    %230 = arith.addf %229, %228 : vector<8x64xf32>
    %231 = arith.divf %229, %230 : vector<8x64xf32>
    %232 = vector.extract_strided_slice %231 {offsets = [0, 0], sizes = [8, 32], strides = [1, 1]} : vector<8x64xf32> to vector<8x32xf32>
    %233 = vector.extract_strided_slice %231 {offsets = [0, 32], sizes = [8, 32], strides = [1, 1]} : vector<8x64xf32> to vector<8x32xf32>
    %234 = vector.extract_strided_slice %220 {offsets = [0, 64], sizes = [8, 32], strides = [1, 1]} : vector<8x96xf32> to vector<8x32xf32>
    %235 = vector.extract_strided_slice %223 {offsets = [0, 64], sizes = [8, 32], strides = [1, 1]} : vector<8x96xf32> to vector<8x32xf32>
    %236 = arith.mulf %232, %235 : vector<8x32xf32>
    %237 = arith.addf %234, %236 : vector<8x32xf32>
    %238 = math.tanh %237 : vector<8x32xf32>
    %cst_43 = arith.constant 1.000000e+00 : f32
    %239 = vector.broadcast %cst_43 : f32 to vector<8x32xf32>
    %240 = arith.subf %239, %233 : vector<8x32xf32>
    %241 = arith.mulf %240, %238 : vector<8x32xf32>
    %242 = arith.mulf %233, %217 : vector<8x32xf32>
    %243 = arith.addf %241, %242 : vector<8x32xf32>
    %244 = vector.extract_strided_slice %9 {offsets = [48, 0], sizes = [8, 32], strides = [1, 1]} : vector<64x32xf32> to vector<8x32xf32>
    %245 = arith.mulf %244, %243 : vector<8x32xf32>
    %cst_44 = arith.constant 1.000000e+00 : f32
    %246 = vector.broadcast %cst_44 : f32 to vector<8x32xf32>
    %247 = arith.subf %246, %244 : vector<8x32xf32>
    %248 = arith.mulf %247, %217 : vector<8x32xf32>
    %249 = arith.addf %245, %248 : vector<8x32xf32>
    %250 = vector.extract_strided_slice %245 {offsets = [0, 0], sizes = [8, 16], strides = [1, 1]} : vector<8x32xf32> to vector<8x16xf32>
    %251 = vector.extract_strided_slice %245 {offsets = [0, 16], sizes = [8, 16], strides = [1, 1]} : vector<8x32xf32> to vector<8x16xf32>
    %252 = vector.extract_strided_slice %24 {offsets = [56, 0], sizes = [8, 96], strides = [1, 1]} : vector<64x96xf32> to vector<8x96xf32>
    %cst_45 = arith.constant dense<0.000000e+00> : vector<8x96xf32>
    %253 = tpu.matmul %249, %25, %cst_45 {dimension_numbers = #tpu.dot_dimension_numbers<[1], [0], [0], [1], [0, 0, 1, 1], [], []>} : vector<8x32xf32>, vector<32x96xf32>, vector<8x96xf32> -> vector<8x96xf32>
    %254 = vector.broadcast %26 : vector<1x96xf32> to vector<8x96xf32>
    %255 = arith.addf %253, %254 : vector<8x96xf32>
    %256 = vector.extract_strided_slice %252 {offsets = [0, 0], sizes = [8, 64], strides = [1, 1]} : vector<8x96xf32> to vector<8x64xf32>
    %257 = vector.extract_strided_slice %255 {offsets = [0, 0], sizes = [8, 64], strides = [1, 1]} : vector<8x96xf32> to vector<8x64xf32>
    %258 = arith.addf %256, %257 : vector<8x64xf32>
    %259 = arith.negf %258 : vector<8x64xf32>
    %260 = math.exp %259 : vector<8x64xf32>
    %cst_46 = arith.constant 1.000000e+00 : f32
    %261 = vector.broadcast %cst_46 : f32 to vector<8x64xf32>
    %262 = arith.addf %261, %260 : vector<8x64xf32>
    %263 = arith.divf %261, %262 : vector<8x64xf32>
    %264 = vector.extract_strided_slice %263 {offsets = [0, 0], sizes = [8, 32], strides = [1, 1]} : vector<8x64xf32> to vector<8x32xf32>
    %265 = vector.extract_strided_slice %263 {offsets = [0, 32], sizes = [8, 32], strides = [1, 1]} : vector<8x64xf32> to vector<8x32xf32>
    %266 = vector.extract_strided_slice %252 {offsets = [0, 64], sizes = [8, 32], strides = [1, 1]} : vector<8x96xf32> to vector<8x32xf32>
    %267 = vector.extract_strided_slice %255 {offsets = [0, 64], sizes = [8, 32], strides = [1, 1]} : vector<8x96xf32> to vector<8x32xf32>
    %268 = arith.mulf %264, %267 : vector<8x32xf32>
    %269 = arith.addf %266, %268 : vector<8x32xf32>
    %270 = math.tanh %269 : vector<8x32xf32>
    %cst_47 = arith.constant 1.000000e+00 : f32
    %271 = vector.broadcast %cst_47 : f32 to vector<8x32xf32>
    %272 = arith.subf %271, %265 : vector<8x32xf32>
    %273 = arith.mulf %272, %270 : vector<8x32xf32>
    %274 = arith.mulf %265, %249 : vector<8x32xf32>
    %275 = arith.addf %273, %274 : vector<8x32xf32>
    %276 = vector.extract_strided_slice %9 {offsets = [56, 0], sizes = [8, 32], strides = [1, 1]} : vector<64x32xf32> to vector<8x32xf32>
    %277 = arith.mulf %276, %275 : vector<8x32xf32>
    %cst_48 = arith.constant 1.000000e+00 : f32
    %278 = vector.broadcast %cst_48 : f32 to vector<8x32xf32>
    %279 = arith.subf %278, %276 : vector<8x32xf32>
    %280 = arith.mulf %279, %249 : vector<8x32xf32>
    %281 = arith.addf %277, %280 : vector<8x32xf32>
    %282 = vector.extract_strided_slice %277 {offsets = [0, 0], sizes = [8, 16], strides = [1, 1]} : vector<8x32xf32> to vector<8x16xf32>
    %283 = vector.extract_strided_slice %277 {offsets = [0, 16], sizes = [8, 16], strides = [1, 1]} : vector<8x32xf32> to vector<8x16xf32>
    %284 = vector.extract_strided_slice %281 {offsets = [0, 0], sizes = [8, 16], strides = [1, 1]} : vector<8x32xf32> to vector<8x16xf32>
    %285 = vector.extract_strided_slice %281 {offsets = [0, 16], sizes = [8, 16], strides = [1, 1]} : vector<8x32xf32> to vector<8x16xf32>
    %286 = tpu.concatenate %58, %283 in 1 : vector<8x16xf32>, vector<8x16xf32> -> vector<8x32xf32>
    %287 = tpu.concatenate %90, %251 in 1 : vector<8x16xf32>, vector<8x16xf32> -> vector<8x32xf32>
    %288 = tpu.concatenate %122, %219 in 1 : vector<8x16xf32>, vector<8x16xf32> -> vector<8x32xf32>
    %289 = tpu.concatenate %154, %187 in 1 : vector<8x16xf32>, vector<8x16xf32> -> vector<8x32xf32>
    %290 = tpu.concatenate %186, %155 in 1 : vector<8x16xf32>, vector<8x16xf32> -> vector<8x32xf32>
    %291 = tpu.concatenate %218, %123 in 1 : vector<8x16xf32>, vector<8x16xf32> -> vector<8x32xf32>
    %292 = tpu.concatenate %250, %91 in 1 : vector<8x16xf32>, vector<8x16xf32> -> vector<8x32xf32>
    %293 = tpu.concatenate %282, %59 in 1 : vector<8x16xf32>, vector<8x16xf32> -> vector<8x32xf32>
    %294 = tpu.concatenate %286, %287, %288, %289, %290, %291, %292, %293 in 0 : vector<8x32xf32>, vector<8x32xf32>, vector<8x32xf32>, vector<8x32xf32>, vector<8x32xf32>, vector<8x32xf32>, vector<8x32xf32>, vector<8x32xf32> -> vector<64x32xf32>
    %295 = tpu.concatenate %293, %292, %291, %290, %289, %288, %287, %286 in 0 : vector<8x32xf32>, vector<8x32xf32>, vector<8x32xf32>, vector<8x32xf32>, vector<8x32xf32>, vector<8x32xf32>, vector<8x32xf32>, vector<8x32xf32> -> vector<64x32xf32>
    %296 = tpu.concatenate %294, %295 in 1 : vector<64x32xf32>, vector<64x32xf32> -> vector<64x64xf32>
    %c0_49 = arith.constant 0 : index
    %c0_50 = arith.constant 0 : index
    %297 = vector.load %arg7[%c0_49, %c0_50] : memref<64x96xf32, #tpu.memory_space<vmem>>, vector<64x96xf32>
    %cst_51 = arith.constant dense<0.000000e+00> : vector<64x96xf32>
    %298 = tpu.matmul %296, %297, %cst_51 {dimension_numbers = #tpu.dot_dimension_numbers<[1], [0], [0], [1], [0, 0, 1, 1], [], []>} : vector<64x64xf32>, vector<64x96xf32>, vector<64x96xf32> -> vector<64x96xf32>
    %c0_52 = arith.constant 0 : index
    %c0_53 = arith.constant 0 : index
    %299 = vector.load %arg8[%c0_52, %c0_53] : memref<1x96xf32, #tpu.memory_space<vmem>>, vector<1x96xf32>
    %300 = vector.broadcast %299 : vector<1x96xf32> to vector<64x96xf32>
    %301 = arith.addf %298, %300 : vector<64x96xf32>
    %c0_54 = arith.constant 0 : index
    %c0_55 = arith.constant 0 : index
    %302 = vector.load %arg9[%c0_54, %c0_55] : memref<32x96xf32, #tpu.memory_space<vmem>>, vector<32x96xf32>
    %c0_56 = arith.constant 0 : index
    %c0_57 = arith.constant 0 : index
    %303 = vector.load %arg10[%c0_56, %c0_57] : memref<1x96xf32, #tpu.memory_space<vmem>>, vector<1x96xf32>
    %cst_58 = arith.constant 0.000000e+00 : f32
    %304 = vector.broadcast %cst_58 : f32 to vector<8x32xf32>
    %305 = vector.extract_strided_slice %301 {offsets = [0, 0], sizes = [8, 96], strides = [1, 1]} : vector<64x96xf32> to vector<8x96xf32>
    %cst_59 = arith.constant dense<0.000000e+00> : vector<8x96xf32>
    %306 = tpu.matmul %304, %302, %cst_59 {dimension_numbers = #tpu.dot_dimension_numbers<[1], [0], [0], [1], [0, 0, 1, 1], [], []>} : vector<8x32xf32>, vector<32x96xf32>, vector<8x96xf32> -> vector<8x96xf32>
    %307 = vector.broadcast %303 : vector<1x96xf32> to vector<8x96xf32>
    %308 = arith.addf %306, %307 : vector<8x96xf32>
    %309 = vector.extract_strided_slice %305 {offsets = [0, 0], sizes = [8, 64], strides = [1, 1]} : vector<8x96xf32> to vector<8x64xf32>
    %310 = vector.extract_strided_slice %308 {offsets = [0, 0], sizes = [8, 64], strides = [1, 1]} : vector<8x96xf32> to vector<8x64xf32>
    %311 = arith.addf %309, %310 : vector<8x64xf32>
    %312 = arith.negf %311 : vector<8x64xf32>
    %313 = math.exp %312 : vector<8x64xf32>
    %cst_60 = arith.constant 1.000000e+00 : f32
    %314 = vector.broadcast %cst_60 : f32 to vector<8x64xf32>
    %315 = arith.addf %314, %313 : vector<8x64xf32>
    %316 = arith.divf %314, %315 : vector<8x64xf32>
    %317 = vector.extract_strided_slice %316 {offsets = [0, 0], sizes = [8, 32], strides = [1, 1]} : vector<8x64xf32> to vector<8x32xf32>
    %318 = vector.extract_strided_slice %316 {offsets = [0, 32], sizes = [8, 32], strides = [1, 1]} : vector<8x64xf32> to vector<8x32xf32>
    %319 = vector.extract_strided_slice %305 {offsets = [0, 64], sizes = [8, 32], strides = [1, 1]} : vector<8x96xf32> to vector<8x32xf32>
    %320 = vector.extract_strided_slice %308 {offsets = [0, 64], sizes = [8, 32], strides = [1, 1]} : vector<8x96xf32> to vector<8x32xf32>
    %321 = arith.mulf %317, %320 : vector<8x32xf32>
    %322 = arith.addf %319, %321 : vector<8x32xf32>
    %323 = math.tanh %322 : vector<8x32xf32>
    %cst_61 = arith.constant 1.000000e+00 : f32
    %324 = vector.broadcast %cst_61 : f32 to vector<8x32xf32>
    %325 = arith.subf %324, %318 : vector<8x32xf32>
    %326 = arith.mulf %325, %323 : vector<8x32xf32>
    %327 = arith.mulf %318, %304 : vector<8x32xf32>
    %328 = arith.addf %326, %327 : vector<8x32xf32>
    %329 = vector.extract_strided_slice %9 {offsets = [0, 0], sizes = [8, 32], strides = [1, 1]} : vector<64x32xf32> to vector<8x32xf32>
    %330 = arith.mulf %329, %328 : vector<8x32xf32>
    %cst_62 = arith.constant 1.000000e+00 : f32
    %331 = vector.broadcast %cst_62 : f32 to vector<8x32xf32>
    %332 = arith.subf %331, %329 : vector<8x32xf32>
    %333 = arith.mulf %332, %304 : vector<8x32xf32>
    %334 = arith.addf %330, %333 : vector<8x32xf32>
    %335 = vector.extract_strided_slice %330 {offsets = [0, 0], sizes = [8, 16], strides = [1, 1]} : vector<8x32xf32> to vector<8x16xf32>
    %336 = vector.extract_strided_slice %330 {offsets = [0, 16], sizes = [8, 16], strides = [1, 1]} : vector<8x32xf32> to vector<8x16xf32>
    %337 = vector.extract_strided_slice %301 {offsets = [8, 0], sizes = [8, 96], strides = [1, 1]} : vector<64x96xf32> to vector<8x96xf32>
    %cst_63 = arith.constant dense<0.000000e+00> : vector<8x96xf32>
    %338 = tpu.matmul %334, %302, %cst_63 {dimension_numbers = #tpu.dot_dimension_numbers<[1], [0], [0], [1], [0, 0, 1, 1], [], []>} : vector<8x32xf32>, vector<32x96xf32>, vector<8x96xf32> -> vector<8x96xf32>
    %339 = vector.broadcast %303 : vector<1x96xf32> to vector<8x96xf32>
    %340 = arith.addf %338, %339 : vector<8x96xf32>
    %341 = vector.extract_strided_slice %337 {offsets = [0, 0], sizes = [8, 64], strides = [1, 1]} : vector<8x96xf32> to vector<8x64xf32>
    %342 = vector.extract_strided_slice %340 {offsets = [0, 0], sizes = [8, 64], strides = [1, 1]} : vector<8x96xf32> to vector<8x64xf32>
    %343 = arith.addf %341, %342 : vector<8x64xf32>
    %344 = arith.negf %343 : vector<8x64xf32>
    %345 = math.exp %344 : vector<8x64xf32>
    %cst_64 = arith.constant 1.000000e+00 : f32
    %346 = vector.broadcast %cst_64 : f32 to vector<8x64xf32>
    %347 = arith.addf %346, %345 : vector<8x64xf32>
    %348 = arith.divf %346, %347 : vector<8x64xf32>
    %349 = vector.extract_strided_slice %348 {offsets = [0, 0], sizes = [8, 32], strides = [1, 1]} : vector<8x64xf32> to vector<8x32xf32>
    %350 = vector.extract_strided_slice %348 {offsets = [0, 32], sizes = [8, 32], strides = [1, 1]} : vector<8x64xf32> to vector<8x32xf32>
    %351 = vector.extract_strided_slice %337 {offsets = [0, 64], sizes = [8, 32], strides = [1, 1]} : vector<8x96xf32> to vector<8x32xf32>
    %352 = vector.extract_strided_slice %340 {offsets = [0, 64], sizes = [8, 32], strides = [1, 1]} : vector<8x96xf32> to vector<8x32xf32>
    %353 = arith.mulf %349, %352 : vector<8x32xf32>
    %354 = arith.addf %351, %353 : vector<8x32xf32>
    %355 = math.tanh %354 : vector<8x32xf32>
    %cst_65 = arith.constant 1.000000e+00 : f32
    %356 = vector.broadcast %cst_65 : f32 to vector<8x32xf32>
    %357 = arith.subf %356, %350 : vector<8x32xf32>
    %358 = arith.mulf %357, %355 : vector<8x32xf32>
    %359 = arith.mulf %350, %334 : vector<8x32xf32>
    %360 = arith.addf %358, %359 : vector<8x32xf32>
    %361 = vector.extract_strided_slice %9 {offsets = [8, 0], sizes = [8, 32], strides = [1, 1]} : vector<64x32xf32> to vector<8x32xf32>
    %362 = arith.mulf %361, %360 : vector<8x32xf32>
    %cst_66 = arith.constant 1.000000e+00 : f32
    %363 = vector.broadcast %cst_66 : f32 to vector<8x32xf32>
    %364 = arith.subf %363, %361 : vector<8x32xf32>
    %365 = arith.mulf %364, %334 : vector<8x32xf32>
    %366 = arith.addf %362, %365 : vector<8x32xf32>
    %367 = vector.extract_strided_slice %362 {offsets = [0, 0], sizes = [8, 16], strides = [1, 1]} : vector<8x32xf32> to vector<8x16xf32>
    %368 = vector.extract_strided_slice %362 {offsets = [0, 16], sizes = [8, 16], strides = [1, 1]} : vector<8x32xf32> to vector<8x16xf32>
    %369 = vector.extract_strided_slice %301 {offsets = [16, 0], sizes = [8, 96], strides = [1, 1]} : vector<64x96xf32> to vector<8x96xf32>
    %cst_67 = arith.constant dense<0.000000e+00> : vector<8x96xf32>
    %370 = tpu.matmul %366, %302, %cst_67 {dimension_numbers = #tpu.dot_dimension_numbers<[1], [0], [0], [1], [0, 0, 1, 1], [], []>} : vector<8x32xf32>, vector<32x96xf32>, vector<8x96xf32> -> vector<8x96xf32>
    %371 = vector.broadcast %303 : vector<1x96xf32> to vector<8x96xf32>
    %372 = arith.addf %370, %371 : vector<8x96xf32>
    %373 = vector.extract_strided_slice %369 {offsets = [0, 0], sizes = [8, 64], strides = [1, 1]} : vector<8x96xf32> to vector<8x64xf32>
    %374 = vector.extract_strided_slice %372 {offsets = [0, 0], sizes = [8, 64], strides = [1, 1]} : vector<8x96xf32> to vector<8x64xf32>
    %375 = arith.addf %373, %374 : vector<8x64xf32>
    %376 = arith.negf %375 : vector<8x64xf32>
    %377 = math.exp %376 : vector<8x64xf32>
    %cst_68 = arith.constant 1.000000e+00 : f32
    %378 = vector.broadcast %cst_68 : f32 to vector<8x64xf32>
    %379 = arith.addf %378, %377 : vector<8x64xf32>
    %380 = arith.divf %378, %379 : vector<8x64xf32>
    %381 = vector.extract_strided_slice %380 {offsets = [0, 0], sizes = [8, 32], strides = [1, 1]} : vector<8x64xf32> to vector<8x32xf32>
    %382 = vector.extract_strided_slice %380 {offsets = [0, 32], sizes = [8, 32], strides = [1, 1]} : vector<8x64xf32> to vector<8x32xf32>
    %383 = vector.extract_strided_slice %369 {offsets = [0, 64], sizes = [8, 32], strides = [1, 1]} : vector<8x96xf32> to vector<8x32xf32>
    %384 = vector.extract_strided_slice %372 {offsets = [0, 64], sizes = [8, 32], strides = [1, 1]} : vector<8x96xf32> to vector<8x32xf32>
    %385 = arith.mulf %381, %384 : vector<8x32xf32>
    %386 = arith.addf %383, %385 : vector<8x32xf32>
    %387 = math.tanh %386 : vector<8x32xf32>
    %cst_69 = arith.constant 1.000000e+00 : f32
    %388 = vector.broadcast %cst_69 : f32 to vector<8x32xf32>
    %389 = arith.subf %388, %382 : vector<8x32xf32>
    %390 = arith.mulf %389, %387 : vector<8x32xf32>
    %391 = arith.mulf %382, %366 : vector<8x32xf32>
    %392 = arith.addf %390, %391 : vector<8x32xf32>
    %393 = vector.extract_strided_slice %9 {offsets = [16, 0], sizes = [8, 32], strides = [1, 1]} : vector<64x32xf32> to vector<8x32xf32>
    %394 = arith.mulf %393, %392 : vector<8x32xf32>
    %cst_70 = arith.constant 1.000000e+00 : f32
    %395 = vector.broadcast %cst_70 : f32 to vector<8x32xf32>
    %396 = arith.subf %395, %393 : vector<8x32xf32>
    %397 = arith.mulf %396, %366 : vector<8x32xf32>
    %398 = arith.addf %394, %397 : vector<8x32xf32>
    %399 = vector.extract_strided_slice %394 {offsets = [0, 0], sizes = [8, 16], strides = [1, 1]} : vector<8x32xf32> to vector<8x16xf32>
    %400 = vector.extract_strided_slice %394 {offsets = [0, 16], sizes = [8, 16], strides = [1, 1]} : vector<8x32xf32> to vector<8x16xf32>
    %401 = vector.extract_strided_slice %301 {offsets = [24, 0], sizes = [8, 96], strides = [1, 1]} : vector<64x96xf32> to vector<8x96xf32>
    %cst_71 = arith.constant dense<0.000000e+00> : vector<8x96xf32>
    %402 = tpu.matmul %398, %302, %cst_71 {dimension_numbers = #tpu.dot_dimension_numbers<[1], [0], [0], [1], [0, 0, 1, 1], [], []>} : vector<8x32xf32>, vector<32x96xf32>, vector<8x96xf32> -> vector<8x96xf32>
    %403 = vector.broadcast %303 : vector<1x96xf32> to vector<8x96xf32>
    %404 = arith.addf %402, %403 : vector<8x96xf32>
    %405 = vector.extract_strided_slice %401 {offsets = [0, 0], sizes = [8, 64], strides = [1, 1]} : vector<8x96xf32> to vector<8x64xf32>
    %406 = vector.extract_strided_slice %404 {offsets = [0, 0], sizes = [8, 64], strides = [1, 1]} : vector<8x96xf32> to vector<8x64xf32>
    %407 = arith.addf %405, %406 : vector<8x64xf32>
    %408 = arith.negf %407 : vector<8x64xf32>
    %409 = math.exp %408 : vector<8x64xf32>
    %cst_72 = arith.constant 1.000000e+00 : f32
    %410 = vector.broadcast %cst_72 : f32 to vector<8x64xf32>
    %411 = arith.addf %410, %409 : vector<8x64xf32>
    %412 = arith.divf %410, %411 : vector<8x64xf32>
    %413 = vector.extract_strided_slice %412 {offsets = [0, 0], sizes = [8, 32], strides = [1, 1]} : vector<8x64xf32> to vector<8x32xf32>
    %414 = vector.extract_strided_slice %412 {offsets = [0, 32], sizes = [8, 32], strides = [1, 1]} : vector<8x64xf32> to vector<8x32xf32>
    %415 = vector.extract_strided_slice %401 {offsets = [0, 64], sizes = [8, 32], strides = [1, 1]} : vector<8x96xf32> to vector<8x32xf32>
    %416 = vector.extract_strided_slice %404 {offsets = [0, 64], sizes = [8, 32], strides = [1, 1]} : vector<8x96xf32> to vector<8x32xf32>
    %417 = arith.mulf %413, %416 : vector<8x32xf32>
    %418 = arith.addf %415, %417 : vector<8x32xf32>
    %419 = math.tanh %418 : vector<8x32xf32>
    %cst_73 = arith.constant 1.000000e+00 : f32
    %420 = vector.broadcast %cst_73 : f32 to vector<8x32xf32>
    %421 = arith.subf %420, %414 : vector<8x32xf32>
    %422 = arith.mulf %421, %419 : vector<8x32xf32>
    %423 = arith.mulf %414, %398 : vector<8x32xf32>
    %424 = arith.addf %422, %423 : vector<8x32xf32>
    %425 = vector.extract_strided_slice %9 {offsets = [24, 0], sizes = [8, 32], strides = [1, 1]} : vector<64x32xf32> to vector<8x32xf32>
    %426 = arith.mulf %425, %424 : vector<8x32xf32>
    %cst_74 = arith.constant 1.000000e+00 : f32
    %427 = vector.broadcast %cst_74 : f32 to vector<8x32xf32>
    %428 = arith.subf %427, %425 : vector<8x32xf32>
    %429 = arith.mulf %428, %398 : vector<8x32xf32>
    %430 = arith.addf %426, %429 : vector<8x32xf32>
    %431 = vector.extract_strided_slice %426 {offsets = [0, 0], sizes = [8, 16], strides = [1, 1]} : vector<8x32xf32> to vector<8x16xf32>
    %432 = vector.extract_strided_slice %426 {offsets = [0, 16], sizes = [8, 16], strides = [1, 1]} : vector<8x32xf32> to vector<8x16xf32>
    %433 = vector.extract_strided_slice %301 {offsets = [32, 0], sizes = [8, 96], strides = [1, 1]} : vector<64x96xf32> to vector<8x96xf32>
    %cst_75 = arith.constant dense<0.000000e+00> : vector<8x96xf32>
    %434 = tpu.matmul %430, %302, %cst_75 {dimension_numbers = #tpu.dot_dimension_numbers<[1], [0], [0], [1], [0, 0, 1, 1], [], []>} : vector<8x32xf32>, vector<32x96xf32>, vector<8x96xf32> -> vector<8x96xf32>
    %435 = vector.broadcast %303 : vector<1x96xf32> to vector<8x96xf32>
    %436 = arith.addf %434, %435 : vector<8x96xf32>
    %437 = vector.extract_strided_slice %433 {offsets = [0, 0], sizes = [8, 64], strides = [1, 1]} : vector<8x96xf32> to vector<8x64xf32>
    %438 = vector.extract_strided_slice %436 {offsets = [0, 0], sizes = [8, 64], strides = [1, 1]} : vector<8x96xf32> to vector<8x64xf32>
    %439 = arith.addf %437, %438 : vector<8x64xf32>
    %440 = arith.negf %439 : vector<8x64xf32>
    %441 = math.exp %440 : vector<8x64xf32>
    %cst_76 = arith.constant 1.000000e+00 : f32
    %442 = vector.broadcast %cst_76 : f32 to vector<8x64xf32>
    %443 = arith.addf %442, %441 : vector<8x64xf32>
    %444 = arith.divf %442, %443 : vector<8x64xf32>
    %445 = vector.extract_strided_slice %444 {offsets = [0, 0], sizes = [8, 32], strides = [1, 1]} : vector<8x64xf32> to vector<8x32xf32>
    %446 = vector.extract_strided_slice %444 {offsets = [0, 32], sizes = [8, 32], strides = [1, 1]} : vector<8x64xf32> to vector<8x32xf32>
    %447 = vector.extract_strided_slice %433 {offsets = [0, 64], sizes = [8, 32], strides = [1, 1]} : vector<8x96xf32> to vector<8x32xf32>
    %448 = vector.extract_strided_slice %436 {offsets = [0, 64], sizes = [8, 32], strides = [1, 1]} : vector<8x96xf32> to vector<8x32xf32>
    %449 = arith.mulf %445, %448 : vector<8x32xf32>
    %450 = arith.addf %447, %449 : vector<8x32xf32>
    %451 = math.tanh %450 : vector<8x32xf32>
    %cst_77 = arith.constant 1.000000e+00 : f32
    %452 = vector.broadcast %cst_77 : f32 to vector<8x32xf32>
    %453 = arith.subf %452, %446 : vector<8x32xf32>
    %454 = arith.mulf %453, %451 : vector<8x32xf32>
    %455 = arith.mulf %446, %430 : vector<8x32xf32>
    %456 = arith.addf %454, %455 : vector<8x32xf32>
    %457 = vector.extract_strided_slice %9 {offsets = [32, 0], sizes = [8, 32], strides = [1, 1]} : vector<64x32xf32> to vector<8x32xf32>
    %458 = arith.mulf %457, %456 : vector<8x32xf32>
    %cst_78 = arith.constant 1.000000e+00 : f32
    %459 = vector.broadcast %cst_78 : f32 to vector<8x32xf32>
    %460 = arith.subf %459, %457 : vector<8x32xf32>
    %461 = arith.mulf %460, %430 : vector<8x32xf32>
    %462 = arith.addf %458, %461 : vector<8x32xf32>
    %463 = vector.extract_strided_slice %458 {offsets = [0, 0], sizes = [8, 16], strides = [1, 1]} : vector<8x32xf32> to vector<8x16xf32>
    %464 = vector.extract_strided_slice %458 {offsets = [0, 16], sizes = [8, 16], strides = [1, 1]} : vector<8x32xf32> to vector<8x16xf32>
    %465 = vector.extract_strided_slice %301 {offsets = [40, 0], sizes = [8, 96], strides = [1, 1]} : vector<64x96xf32> to vector<8x96xf32>
    %cst_79 = arith.constant dense<0.000000e+00> : vector<8x96xf32>
    %466 = tpu.matmul %462, %302, %cst_79 {dimension_numbers = #tpu.dot_dimension_numbers<[1], [0], [0], [1], [0, 0, 1, 1], [], []>} : vector<8x32xf32>, vector<32x96xf32>, vector<8x96xf32> -> vector<8x96xf32>
    %467 = vector.broadcast %303 : vector<1x96xf32> to vector<8x96xf32>
    %468 = arith.addf %466, %467 : vector<8x96xf32>
    %469 = vector.extract_strided_slice %465 {offsets = [0, 0], sizes = [8, 64], strides = [1, 1]} : vector<8x96xf32> to vector<8x64xf32>
    %470 = vector.extract_strided_slice %468 {offsets = [0, 0], sizes = [8, 64], strides = [1, 1]} : vector<8x96xf32> to vector<8x64xf32>
    %471 = arith.addf %469, %470 : vector<8x64xf32>
    %472 = arith.negf %471 : vector<8x64xf32>
    %473 = math.exp %472 : vector<8x64xf32>
    %cst_80 = arith.constant 1.000000e+00 : f32
    %474 = vector.broadcast %cst_80 : f32 to vector<8x64xf32>
    %475 = arith.addf %474, %473 : vector<8x64xf32>
    %476 = arith.divf %474, %475 : vector<8x64xf32>
    %477 = vector.extract_strided_slice %476 {offsets = [0, 0], sizes = [8, 32], strides = [1, 1]} : vector<8x64xf32> to vector<8x32xf32>
    %478 = vector.extract_strided_slice %476 {offsets = [0, 32], sizes = [8, 32], strides = [1, 1]} : vector<8x64xf32> to vector<8x32xf32>
    %479 = vector.extract_strided_slice %465 {offsets = [0, 64], sizes = [8, 32], strides = [1, 1]} : vector<8x96xf32> to vector<8x32xf32>
    %480 = vector.extract_strided_slice %468 {offsets = [0, 64], sizes = [8, 32], strides = [1, 1]} : vector<8x96xf32> to vector<8x32xf32>
    %481 = arith.mulf %477, %480 : vector<8x32xf32>
    %482 = arith.addf %479, %481 : vector<8x32xf32>
    %483 = math.tanh %482 : vector<8x32xf32>
    %cst_81 = arith.constant 1.000000e+00 : f32
    %484 = vector.broadcast %cst_81 : f32 to vector<8x32xf32>
    %485 = arith.subf %484, %478 : vector<8x32xf32>
    %486 = arith.mulf %485, %483 : vector<8x32xf32>
    %487 = arith.mulf %478, %462 : vector<8x32xf32>
    %488 = arith.addf %486, %487 : vector<8x32xf32>
    %489 = vector.extract_strided_slice %9 {offsets = [40, 0], sizes = [8, 32], strides = [1, 1]} : vector<64x32xf32> to vector<8x32xf32>
    %490 = arith.mulf %489, %488 : vector<8x32xf32>
    %cst_82 = arith.constant 1.000000e+00 : f32
    %491 = vector.broadcast %cst_82 : f32 to vector<8x32xf32>
    %492 = arith.subf %491, %489 : vector<8x32xf32>
    %493 = arith.mulf %492, %462 : vector<8x32xf32>
    %494 = arith.addf %490, %493 : vector<8x32xf32>
    %495 = vector.extract_strided_slice %490 {offsets = [0, 0], sizes = [8, 16], strides = [1, 1]} : vector<8x32xf32> to vector<8x16xf32>
    %496 = vector.extract_strided_slice %490 {offsets = [0, 16], sizes = [8, 16], strides = [1, 1]} : vector<8x32xf32> to vector<8x16xf32>
    %497 = vector.extract_strided_slice %301 {offsets = [48, 0], sizes = [8, 96], strides = [1, 1]} : vector<64x96xf32> to vector<8x96xf32>
    %cst_83 = arith.constant dense<0.000000e+00> : vector<8x96xf32>
    %498 = tpu.matmul %494, %302, %cst_83 {dimension_numbers = #tpu.dot_dimension_numbers<[1], [0], [0], [1], [0, 0, 1, 1], [], []>} : vector<8x32xf32>, vector<32x96xf32>, vector<8x96xf32> -> vector<8x96xf32>
    %499 = vector.broadcast %303 : vector<1x96xf32> to vector<8x96xf32>
    %500 = arith.addf %498, %499 : vector<8x96xf32>
    %501 = vector.extract_strided_slice %497 {offsets = [0, 0], sizes = [8, 64], strides = [1, 1]} : vector<8x96xf32> to vector<8x64xf32>
    %502 = vector.extract_strided_slice %500 {offsets = [0, 0], sizes = [8, 64], strides = [1, 1]} : vector<8x96xf32> to vector<8x64xf32>
    %503 = arith.addf %501, %502 : vector<8x64xf32>
    %504 = arith.negf %503 : vector<8x64xf32>
    %505 = math.exp %504 : vector<8x64xf32>
    %cst_84 = arith.constant 1.000000e+00 : f32
    %506 = vector.broadcast %cst_84 : f32 to vector<8x64xf32>
    %507 = arith.addf %506, %505 : vector<8x64xf32>
    %508 = arith.divf %506, %507 : vector<8x64xf32>
    %509 = vector.extract_strided_slice %508 {offsets = [0, 0], sizes = [8, 32], strides = [1, 1]} : vector<8x64xf32> to vector<8x32xf32>
    %510 = vector.extract_strided_slice %508 {offsets = [0, 32], sizes = [8, 32], strides = [1, 1]} : vector<8x64xf32> to vector<8x32xf32>
    %511 = vector.extract_strided_slice %497 {offsets = [0, 64], sizes = [8, 32], strides = [1, 1]} : vector<8x96xf32> to vector<8x32xf32>
    %512 = vector.extract_strided_slice %500 {offsets = [0, 64], sizes = [8, 32], strides = [1, 1]} : vector<8x96xf32> to vector<8x32xf32>
    %513 = arith.mulf %509, %512 : vector<8x32xf32>
    %514 = arith.addf %511, %513 : vector<8x32xf32>
    %515 = math.tanh %514 : vector<8x32xf32>
    %cst_85 = arith.constant 1.000000e+00 : f32
    %516 = vector.broadcast %cst_85 : f32 to vector<8x32xf32>
    %517 = arith.subf %516, %510 : vector<8x32xf32>
    %518 = arith.mulf %517, %515 : vector<8x32xf32>
    %519 = arith.mulf %510, %494 : vector<8x32xf32>
    %520 = arith.addf %518, %519 : vector<8x32xf32>
    %521 = vector.extract_strided_slice %9 {offsets = [48, 0], sizes = [8, 32], strides = [1, 1]} : vector<64x32xf32> to vector<8x32xf32>
    %522 = arith.mulf %521, %520 : vector<8x32xf32>
    %cst_86 = arith.constant 1.000000e+00 : f32
    %523 = vector.broadcast %cst_86 : f32 to vector<8x32xf32>
    %524 = arith.subf %523, %521 : vector<8x32xf32>
    %525 = arith.mulf %524, %494 : vector<8x32xf32>
    %526 = arith.addf %522, %525 : vector<8x32xf32>
    %527 = vector.extract_strided_slice %522 {offsets = [0, 0], sizes = [8, 16], strides = [1, 1]} : vector<8x32xf32> to vector<8x16xf32>
    %528 = vector.extract_strided_slice %522 {offsets = [0, 16], sizes = [8, 16], strides = [1, 1]} : vector<8x32xf32> to vector<8x16xf32>
    %529 = vector.extract_strided_slice %301 {offsets = [56, 0], sizes = [8, 96], strides = [1, 1]} : vector<64x96xf32> to vector<8x96xf32>
    %cst_87 = arith.constant dense<0.000000e+00> : vector<8x96xf32>
    %530 = tpu.matmul %526, %302, %cst_87 {dimension_numbers = #tpu.dot_dimension_numbers<[1], [0], [0], [1], [0, 0, 1, 1], [], []>} : vector<8x32xf32>, vector<32x96xf32>, vector<8x96xf32> -> vector<8x96xf32>
    %531 = vector.broadcast %303 : vector<1x96xf32> to vector<8x96xf32>
    %532 = arith.addf %530, %531 : vector<8x96xf32>
    %533 = vector.extract_strided_slice %529 {offsets = [0, 0], sizes = [8, 64], strides = [1, 1]} : vector<8x96xf32> to vector<8x64xf32>
    %534 = vector.extract_strided_slice %532 {offsets = [0, 0], sizes = [8, 64], strides = [1, 1]} : vector<8x96xf32> to vector<8x64xf32>
    %535 = arith.addf %533, %534 : vector<8x64xf32>
    %536 = arith.negf %535 : vector<8x64xf32>
    %537 = math.exp %536 : vector<8x64xf32>
    %cst_88 = arith.constant 1.000000e+00 : f32
    %538 = vector.broadcast %cst_88 : f32 to vector<8x64xf32>
    %539 = arith.addf %538, %537 : vector<8x64xf32>
    %540 = arith.divf %538, %539 : vector<8x64xf32>
    %541 = vector.extract_strided_slice %540 {offsets = [0, 0], sizes = [8, 32], strides = [1, 1]} : vector<8x64xf32> to vector<8x32xf32>
    %542 = vector.extract_strided_slice %540 {offsets = [0, 32], sizes = [8, 32], strides = [1, 1]} : vector<8x64xf32> to vector<8x32xf32>
    %543 = vector.extract_strided_slice %529 {offsets = [0, 64], sizes = [8, 32], strides = [1, 1]} : vector<8x96xf32> to vector<8x32xf32>
    %544 = vector.extract_strided_slice %532 {offsets = [0, 64], sizes = [8, 32], strides = [1, 1]} : vector<8x96xf32> to vector<8x32xf32>
    %545 = arith.mulf %541, %544 : vector<8x32xf32>
    %546 = arith.addf %543, %545 : vector<8x32xf32>
    %547 = math.tanh %546 : vector<8x32xf32>
    %cst_89 = arith.constant 1.000000e+00 : f32
    %548 = vector.broadcast %cst_89 : f32 to vector<8x32xf32>
    %549 = arith.subf %548, %542 : vector<8x32xf32>
    %550 = arith.mulf %549, %547 : vector<8x32xf32>
    %551 = arith.mulf %542, %526 : vector<8x32xf32>
    %552 = arith.addf %550, %551 : vector<8x32xf32>
    %553 = vector.extract_strided_slice %9 {offsets = [56, 0], sizes = [8, 32], strides = [1, 1]} : vector<64x32xf32> to vector<8x32xf32>
    %554 = arith.mulf %553, %552 : vector<8x32xf32>
    %cst_90 = arith.constant 1.000000e+00 : f32
    %555 = vector.broadcast %cst_90 : f32 to vector<8x32xf32>
    %556 = arith.subf %555, %553 : vector<8x32xf32>
    %557 = arith.mulf %556, %526 : vector<8x32xf32>
    %558 = arith.addf %554, %557 : vector<8x32xf32>
    %559 = vector.extract_strided_slice %554 {offsets = [0, 0], sizes = [8, 16], strides = [1, 1]} : vector<8x32xf32> to vector<8x16xf32>
    %560 = vector.extract_strided_slice %554 {offsets = [0, 16], sizes = [8, 16], strides = [1, 1]} : vector<8x32xf32> to vector<8x16xf32>
    %561 = vector.extract_strided_slice %558 {offsets = [0, 0], sizes = [8, 16], strides = [1, 1]} : vector<8x32xf32> to vector<8x16xf32>
    %562 = vector.extract_strided_slice %558 {offsets = [0, 16], sizes = [8, 16], strides = [1, 1]} : vector<8x32xf32> to vector<8x16xf32>
    %563 = tpu.concatenate %335, %560 in 1 : vector<8x16xf32>, vector<8x16xf32> -> vector<8x32xf32>
    %564 = tpu.concatenate %367, %528 in 1 : vector<8x16xf32>, vector<8x16xf32> -> vector<8x32xf32>
    %565 = tpu.concatenate %399, %496 in 1 : vector<8x16xf32>, vector<8x16xf32> -> vector<8x32xf32>
    %566 = tpu.concatenate %431, %464 in 1 : vector<8x16xf32>, vector<8x16xf32> -> vector<8x32xf32>
    %567 = tpu.concatenate %463, %432 in 1 : vector<8x16xf32>, vector<8x16xf32> -> vector<8x32xf32>
    %568 = tpu.concatenate %495, %400 in 1 : vector<8x16xf32>, vector<8x16xf32> -> vector<8x32xf32>
    %569 = tpu.concatenate %527, %368 in 1 : vector<8x16xf32>, vector<8x16xf32> -> vector<8x32xf32>
    %570 = tpu.concatenate %559, %336 in 1 : vector<8x16xf32>, vector<8x16xf32> -> vector<8x32xf32>
    %571 = tpu.concatenate %563, %564, %565, %566, %567, %568, %569, %570 in 0 : vector<8x32xf32>, vector<8x32xf32>, vector<8x32xf32>, vector<8x32xf32>, vector<8x32xf32>, vector<8x32xf32>, vector<8x32xf32>, vector<8x32xf32> -> vector<64x32xf32>
    %cst_91 = arith.constant 0.000000e+00 : f32
    %572 = vector.broadcast %cst_91 : f32 to vector<64x96xf32>
    %573 = tpu.concatenate %571, %572 in 1 : vector<64x32xf32>, vector<64x96xf32> -> vector<64x128xf32>
    %c0_92 = arith.constant 0 : index
    %c0_93 = arith.constant 0 : index
    %574 = vector.load %arg11[%c0_92, %c0_93] : memref<64x128xf32, #tpu.memory_space<vmem>>, vector<64x128xf32>
    tpu.vector_store %arg11[%c0_92, %c0_93], %573 {strides = array<i32>} : memref<64x128xf32, #tpu.memory_space<vmem>>, vector<64x128xf32>,
    %575 = tpu.concatenate %284, %285, %561, %562 in 0 : vector<8x16xf32>, vector<8x16xf32>, vector<8x16xf32>, vector<8x16xf32> -> vector<32x16xf32>
    %cst_94 = arith.constant 0.000000e+00 : f32
    %576 = vector.broadcast %cst_94 : f32 to vector<32x112xf32>
    %577 = tpu.concatenate %575, %576 in 1 : vector<32x16xf32>, vector<32x112xf32> -> vector<32x128xf32>
    %c0_95 = arith.constant 0 : index
    %c0_96 = arith.constant 0 : index
    %578 = vector.load %arg12[%c0_95, %c0_96] : memref<32x128xf32, #tpu.memory_space<vmem>>, vector<32x128xf32>
    tpu.vector_store %arg12[%c0_95, %c0_96], %577 {strides = array<i32>} : memref<32x128xf32, #tpu.memory_space<vmem>>, vector<32x128xf32>,
    return
  }
}

</mosaic_0001>

<llo_original>
// kernel: encoder_forward.1
$region0: #{encoder_forward.1}
  #allocation0 [shape = 'u32[]', space=smem, size = 0x4, offset = 0x4, fixed_abs, tag = 'smem constant byte address 0x4 - core index']
  #allocation1 [shape = 'u32[144,128]{1,0:T(1,128)}', space=vmem, size = 0x12000, scoped, tag = 'internal scratch']
  %s0 = inlined_call_operand.vmem [shape: s32[64,1], index: 0, kind: input, shape index: {}]
  %s1 = inlined_call_operand.vmem [shape: f32[64,32], index: 1, kind: input, shape index: {}]
  %s2 = inlined_call_operand.vmem [shape: f32[24,32], index: 2, kind: input, shape index: {}]
  %s3 = inlined_call_operand.vmem [shape: f32[64,96], index: 3, kind: input, shape index: {}]
  %s4 = inlined_call_operand.vmem [shape: f32[1,96], index: 4, kind: input, shape index: {}]
  %s5 = inlined_call_operand.vmem [shape: f32[32,96], index: 5, kind: input, shape index: {}]
  %s6 = inlined_call_operand.vmem [shape: f32[1,96], index: 6, kind: input, shape index: {}]
  %s7 = inlined_call_operand.vmem [shape: f32[64,96], index: 7, kind: input, shape index: {}]
  %s8 = inlined_call_operand.vmem [shape: f32[1,96], index: 8, kind: input, shape index: {}]
  %s9 = inlined_call_operand.vmem [shape: f32[32,96], index: 9, kind: input, shape index: {}]
  %s10 = inlined_call_operand.vmem [shape: f32[1,96], index: 10, kind: input, shape index: {}]
  %s11 = inlined_call_operand.vmem [shape: f32[64,128], index: 11, kind: output, shape index: {0}]
  %s12 = inlined_call_operand.vmem [shape: f32[32,128], index: 12, kind: output, shape index: {1}]
  %13 = xla_tuple %s11, %s12
  %s14 = sld [smem:[#allocation0]]
  $region62: #{encoder_forward.1} parent=0
    _
  %s16 = ssub.s32 1, %s14
  %s17 = scalar_select 0, %s16, %s14
  // Predicated region
  $region2: #{encoder_forward.1} parent=0 // pred_check
    _
  $region3: #{encoder_forward.1} parent=0 // pred_check_branch
    %19 = sbr.rel (0) target = $region5
  $region4: #{encoder_forward.1} parent=0 // pred_region
    _
  $region5: #{encoder_forward.1} parent=0 // pred_fallthru
    _
  // Predicated region
  $region6: #{encoder_forward.1} parent=0 // pred_check
    _
  $region7: #{encoder_forward.1} parent=0 // pred_check_branch
    %21 = sbr.rel (0) target = $region9
  $region8: #{encoder_forward.1} parent=0 // pred_region
    _
  $region9: #{encoder_forward.1} parent=0 // pred_fallthru
    _
  // Predicated region
  $region10: #{encoder_forward.1} parent=0 // pred_check
    _
  $region11: #{encoder_forward.1} parent=0 // pred_check_branch
    %23 = sbr.rel (0) target = $region13
  $region12: #{encoder_forward.1} parent=0 // pred_region
    _
  $region13: #{encoder_forward.1} parent=0 // pred_fallthru
    _
  // Predicated region
  $region14: #{encoder_forward.1} parent=0 // pred_check
    _
  $region15: #{encoder_forward.1} parent=0 // pred_check_branch
    %25 = sbr.rel (0) target = $region17
  $region16: #{encoder_forward.1} parent=0 // pred_region
    _
  $region17: #{encoder_forward.1} parent=0 // pred_fallthru
    _
  // Predicated region
  $region18: #{encoder_forward.1} parent=0 // pred_check
    _
  $region19: #{encoder_forward.1} parent=0 // pred_check_branch
    %27 = sbr.rel (0) target = $region21
  $region20: #{encoder_forward.1} parent=0 // pred_region
    _
  $region21: #{encoder_forward.1} parent=0 // pred_fallthru
    _
  // Predicated region
  $region22: #{encoder_forward.1} parent=0 // pred_check
    _
  $region23: #{encoder_forward.1} parent=0 // pred_check_branch
    %29 = sbr.rel (0) target = $region25
  $region24: #{encoder_forward.1} parent=0 // pred_region
    _
  $region25: #{encoder_forward.1} parent=0 // pred_fallthru
    _
  // Predicated region
  $region26: #{encoder_forward.1} parent=0 // pred_check
    _
  $region27: #{encoder_forward.1} parent=0 // pred_check_branch
    %31 = sbr.rel (0) target = $region29
  $region28: #{encoder_forward.1} parent=0 // pred_region
    _
  $region29: #{encoder_forward.1} parent=0 // pred_fallthru
    _
  // Predicated region
  $region30: #{encoder_forward.1} parent=0 // pred_check
    _
  $region31: #{encoder_forward.1} parent=0 // pred_check_branch
    %33 = sbr.rel (0) target = $region33
  $region32: #{encoder_forward.1} parent=0 // pred_region
    _
  $region33: #{encoder_forward.1} parent=0 // pred_fallthru
    _
  // Predicated region
  $region34: #{encoder_forward.1} parent=0 // pred_check
    _
  $region35: #{encoder_forward.1} parent=0 // pred_check_branch
    %35 = sbr.rel (0) target = $region37
  $region36: #{encoder_forward.1} parent=0 // pred_region
    _
  $region37: #{encoder_forward.1} parent=0 // pred_fallthru
    _
  // Predicated region
  $region38: #{encoder_forward.1} parent=0 // pred_check
    _
  $region39: #{encoder_forward.1} parent=0 // pred_check_branch
    %37 = sbr.rel (0) target = $region41
  $region40: #{encoder_forward.1} parent=0 // pred_region
    _
  $region41: #{encoder_forward.1} parent=0 // pred_fallthru
    _
  // Predicated region
  $region42: #{encoder_forward.1} parent=0 // pred_check
    _
  $region43: #{encoder_forward.1} parent=0 // pred_check_branch
    %39 = sbr.rel (0) target = $region45
  $region44: #{encoder_forward.1} parent=0 // pred_region
    _
  $region45: #{encoder_forward.1} parent=0 // pred_fallthru
    _
  %v40 = vld [vmem:[%s0] sm:$0xff]
  %v41 = vld [vmem:[%s0 + $0x8] sm:$0xff]
  %v42 = vld [vmem:[%s0 + $0x10] sm:$0xff]
  %v43 = vld [vmem:[%s0 + $0x18] sm:$0xff]
  %v44 = vld [vmem:[%s0 + $0x20] sm:$0xff]
  %v45 = vld [vmem:[%s0 + $0x28] sm:$0xff]
  %v46 = vld [vmem:[%s0 + $0x30] sm:$0xff]
  %v47 = vld [vmem:[%s0 + $0x38] sm:$0xff]
  %v48 = vlaneseq
  %v49 = vand.u32 %v48, 127
  %50 = vset.pattern.permute.xlu0 0
  %51 = vperm.xlu0 %50, %v40
  %v52 = vpop.permute.xlu0 %51
  %53 = vset.pattern.permute.xlu0 0
  %54 = vperm.xlu0 %53, %v41
  %v55 = vpop.permute.xlu0 %54
  %56 = vset.pattern.permute.xlu0 0
  %57 = vperm.xlu0 %56, %v42
  %v58 = vpop.permute.xlu0 %57
  %59 = vset.pattern.permute.xlu0 0
  %60 = vperm.xlu0 %59, %v43
  %v61 = vpop.permute.xlu0 %60
  %62 = vset.pattern.permute.xlu0 0
  %63 = vperm.xlu0 %62, %v44
  %v64 = vpop.permute.xlu0 %63
  %65 = vset.pattern.permute.xlu0 0
  %66 = vperm.xlu0 %65, %v45
  %v67 = vpop.permute.xlu0 %66
  %68 = vset.pattern.permute.xlu0 0
  %69 = vperm.xlu0 %68, %v46
  %v70 = vpop.permute.xlu0 %69
  %71 = vset.pattern.permute.xlu0 0
  %72 = vperm.xlu0 %71, %v47
  %v73 = vpop.permute.xlu0 %72
  %vm74 = vcmp.eq.s32.totalorder %v52, %v49
  %vm75 = vcmp.eq.s32.totalorder %v55, %v49
  %vm76 = vcmp.eq.s32.totalorder %v58, %v49
  %vm77 = vcmp.eq.s32.totalorder %v61, %v49
  %vm78 = vcmp.eq.s32.totalorder %v64, %v49
  %vm79 = vcmp.eq.s32.totalorder %v67, %v49
  %vm80 = vcmp.eq.s32.totalorder %v70, %v49
  %vm81 = vcmp.eq.s32.totalorder %v73, %v49
  %v82 = vsel %vm74, 1.0, 0.0
  %v83 = vsel %vm75, 1.0, 0.0
  %v84 = vsel %vm76, 1.0, 0.0
  %v85 = vsel %vm77, 1.0, 0.0
  %v86 = vsel %vm78, 1.0, 0.0
  %v87 = vsel %vm79, 1.0, 0.0
  %v88 = vsel %vm80, 1.0, 0.0
  %v89 = vsel %vm81, 1.0, 0.0
  %v90 = vld [vmem:[%s2] sm:$0xff]
  %v91 = vld [vmem:[%s2 + $0x8] sm:$0xff]
  %v92 = vld [vmem:[%s2 + $0x10] sm:$0xff]
  %vm93 = vcmask 195584
  %v95 = vsel %vm93, %v82, 0
  %v98 = vsel %vm93, %v83, 0
  %v101 = vsel %vm93, %v84, 0
  %v104 = vsel %vm93, %v85, 0
  %v107 = vsel %vm93, %v86, 0
  %v110 = vsel %vm93, %v87, 0
  %v113 = vsel %vm93, %v88, 0
  %v116 = vsel %vm93, %v89, 0
  %118 = vmatprep.subr.mxu0 0.0
  %119 = vmatpush1.msra.mxu0 0.0
  %120 = vmatprep.subr.mxu0 0.0
  %121 = vmatpush1.msra.mxu0 0.0
  %122 = vmatprep.subr.mxu0 0.0
  %123 = vmatpush1.msra.mxu0 0.0
  %124 = vmatprep.subr.mxu0 0.0
  %125 = vmatpush1.msra.mxu0 0.0
  %126 = vmatprep.subr.mxu0 0.0
  %127 = vmatpush1.msra.mxu0 0.0
  %128 = vmatprep.subr.mxu0 0.0
  %129 = vmatpush1.msra.mxu0 0.0
  %130 = vmatprep.subr.mxu0 0.0
  %131 = vmatpush1.msra.mxu0 0.0
  %132 = vmatprep.subr.mxu0 0.0
  %133 = vmatpush1.msra.mxu0 0.0
  %134 = vmatprep.subr.mxu0 0.0
  %135 = vmatpush1.msra.mxu0 0.0
  %136 = vmatprep.subr.mxu0 0.0
  %137 = vmatpush1.msra.mxu0 0.0
  %138 = vmatprep.subr.mxu0 0.0
  %139 = vmatpush1.msra.mxu0 0.0
  %140 = vmatprep.subr.mxu0 0.0
  %141 = vmatpush1.msra.mxu0 0.0
  %142 = vmatprep.subr.mxu0 0.0
  %143 = vmatpush1.msra.mxu0 0.0
  %144 = vmatprep.subr.mxu0 0.0
  %145 = vmatpush1.msra.mxu0 %v92
  %146 = vmatprep.subr.mxu0 0.0
  %147 = vmatpush1.msra.mxu0 %v91
  %148 = vmatprep.subr.mxu0 0.0
  %149 = vmatpush1.msra.mxu0 %v90
  %150 = vmatprep.subr.mxu0 0.0
  %151 = vmatpush2.msra.mxu0 0.0
  %152 = vmatprep.subr.mxu0 0.0
  %153 = vmatpush2.msra.mxu0 0.0
  %154 = vmatprep.subr.mxu0 0.0
  %155 = vmatpush2.msra.mxu0 0.0
  %156 = vmatprep.subr.mxu0 0.0
  %157 = vmatpush2.msra.mxu0 0.0
  %158 = vmatprep.subr.mxu0 0.0
  %159 = vmatpush2.msra.mxu0 0.0
  %160 = vmatprep.subr.mxu0 0.0
  %161 = vmatpush2.msra.mxu0 0.0
  %162 = vmatprep.subr.mxu0 0.0
  %163 = vmatpush2.msra.mxu0 0.0
  %164 = vmatprep.subr.mxu0 0.0
  %165 = vmatpush2.msra.mxu0 0.0
  %166 = vmatprep.subr.mxu0 0.0
  %167 = vmatpush2.msra.mxu0 0.0
  %168 = vmatprep.subr.mxu0 0.0
  %169 = vmatpush2.msra.mxu0 0.0
  %170 = vmatprep.subr.mxu0 0.0
  %171 = vmatpush2.msra.mxu0 0.0
  %172 = vmatprep.subr.mxu0 0.0
  %173 = vmatpush2.msra.mxu0 0.0
  %174 = vmatprep.subr.mxu0 0.0
  %175 = vmatpush2.msra.mxu0 0.0
  %176 = vmatprep.subr.mxu0 0.0
  %177 = vmatpush2.msra.mxu0 0.0
  %178 = vmatprep.subr.mxu0 0.0
  %179 = vmatpush2.msra.mxu0 0.0
  %180 = vmatprep.subr.mxu0 0.0
  %181 = vmatpush2.msra.mxu0 0.0
  %182 = vmatprep.mubr.f32.mxu0 0.0
  %183 = vmatmul.mubr.f32.gmra.mxu0 %v95
  %v184 = vpop.f32.mrf.mxu0
  %v185 = vadd.f32 0.0, %v184
  %v186 = vpop.f32.mrf.mxu0
  %187 = vmatprep.mubr.f32.mxu0 0.0
  %188 = vmatmul.mubr.f32.gmra.mxu0 %v98
  %v189 = vpop.f32.mrf.mxu0
  %v190 = vadd.f32 0.0, %v189
  %v191 = vpop.f32.mrf.mxu0
  %192 = vmatprep.mubr.f32.mxu0 0.0
  %193 = vmatmul.mubr.f32.gmra.mxu0 %v101
  %v194 = vpop.f32.mrf.mxu0
  %v195 = vadd.f32 0.0, %v194
  %v196 = vpop.f32.mrf.mxu0
  %197 = vmatprep.mubr.f32.mxu0 0.0
  %198 = vmatmul.mubr.f32.gmra.mxu0 %v104
  %v199 = vpop.f32.mrf.mxu0
  %v200 = vadd.f32 0.0, %v199
  %v201 = vpop.f32.mrf.mxu0
  %202 = vmatprep.mubr.f32.mxu0 0.0
  %203 = vmatmul.mubr.f32.gmra.mxu0 %v107
  %v204 = vpop.f32.mrf.mxu0
  %v205 = vadd.f32 0.0, %v204
  %v206 = vpop.f32.mrf.mxu0
  %207 = vmatprep.mubr.f32.mxu0 0.0
  %208 = vmatmul.mubr.f32.gmra.mxu0 %v110
  %v209 = vpop.f32.mrf.mxu0
  %v210 = vadd.f32 0.0, %v209
  %v211 = vpop.f32.mrf.mxu0
  %212 = vmatprep.mubr.f32.mxu0 0.0
  %213 = vmatmul.mubr.f32.gmra.mxu0 %v113
  %v214 = vpop.f32.mrf.mxu0
  %v215 = vadd.f32 0.0, %v214
  %v216 = vpop.f32.mrf.mxu0
  %217 = vmatprep.mubr.f32.mxu0 0.0
  %218 = vmatmul.mubr.f32.gmra.mxu0 %v116
  %v219 = vpop.f32.mrf.mxu0
  %v220 = vadd.f32 0.0, %v219
  %v221 = vpop.f32.mrf.mxu0
  %222 = vdwg.mxu0
  %v223 = vld [vmem:[%s1] sm:$0xff]
  %v224 = vld [vmem:[%s1 + $0x8] sm:$0xff]
  %v225 = vld [vmem:[%s1 + $0x10] sm:$0xff]
  %v226 = vld [vmem:[%s1 + $0x18] sm:$0xff]
  %v227 = vld [vmem:[%s1 + $0x20] sm:$0xff]
  %v228 = vld [vmem:[%s1 + $0x28] sm:$0xff]
  %v229 = vld [vmem:[%s1 + $0x30] sm:$0xff]
  %v230 = vld [vmem:[%s1 + $0x38] sm:$0xff]
  %239 = vrot.lane.b32.xlu0 %v220, 32
  %v240 = vpop.permute.xlu0 %239
  %241 = vrot.lane.b32.xlu0 %v215, 32
  %v242 = vpop.permute.xlu0 %241
  %243 = vrot.lane.b32.xlu0 %v210, 32
  %v244 = vpop.permute.xlu0 %243
  %245 = vrot.lane.b32.xlu0 %v205, 32
  %v246 = vpop.permute.xlu0 %245
  %247 = vrot.lane.b32.xlu0 %v200, 32
  %v248 = vpop.permute.xlu0 %247
  %249 = vrot.lane.b32.xlu0 %v195, 32
  %v250 = vpop.permute.xlu0 %249
  %251 = vrot.lane.b32.xlu0 %v190, 32
  %v252 = vpop.permute.xlu0 %251
  %253 = vrot.lane.b32.xlu0 %v185, 32
  %v254 = vpop.permute.xlu0 %253
  %vm263 = vcmask 261120
  %v264 = vsel %vm263, %v185, %v240
  %v265 = vsel %vm263, %v190, %v242
  %v266 = vsel %vm263, %v195, %v244
  %v267 = vsel %vm263, %v200, %v246
  %v268 = vsel %vm263, %v205, %v248
  %v269 = vsel %vm263, %v210, %v250
  %v270 = vsel %vm263, %v215, %v252
  %v271 = vsel %vm263, %v220, %v254
  %v272 = vld [vmem:[%s3] sm:$0xff]
  %v273 = vld [vmem:[%s3 + $0x8] sm:$0xff]
  %v274 = vld [vmem:[%s3 + $0x10] sm:$0xff]
  %v275 = vld [vmem:[%s3 + $0x18] sm:$0xff]
  %v276 = vld [vmem:[%s3 + $0x20] sm:$0xff]
  %v277 = vld [vmem:[%s3 + $0x28] sm:$0xff]
  %v278 = vld [vmem:[%s3 + $0x30] sm:$0xff]
  %v279 = vld [vmem:[%s3 + $0x38] sm:$0xff]
  %v280 = vld [vmem:[%s4] sm:$0x1]
  %v282 = vlaneseq
  %v283 = vshrl.u32 %v282, 7
  %v284 = vsub.s32 0, %v283
  %v285 = vrot.slane %v280, %v284
  %vm287 = vcmask 523264
  %v289 = vsel %vm287, %v264, 0
  %v292 = vsel %vm287, %v265, 0
  %v295 = vsel %vm287, %v266, 0
  %v298 = vsel %vm287, %v267, 0
  %v301 = vsel %vm287, %v268, 0
  %v304 = vsel %vm287, %v269, 0
  %v307 = vsel %vm287, %v270, 0
  %v310 = vsel %vm287, %v271, 0
  %312 = vmatprep.subr.mxu0 0.0
  %313 = vmatpush1.msra.mxu0 0.0
  %314 = vmatprep.subr.mxu0 0.0
  %315 = vmatpush1.msra.mxu0 0.0
  %316 = vmatprep.subr.mxu0 0.0
  %317 = vmatpush1.msra.mxu0 0.0
  %318 = vmatprep.subr.mxu0 0.0
  %319 = vmatpush1.msra.mxu0 0.0
  %320 = vmatprep.subr.mxu0 0.0
  %321 = vmatpush1.msra.mxu0 0.0
  %322 = vmatprep.subr.mxu0 0.0
  %323 = vmatpush1.msra.mxu0 0.0
  %324 = vmatprep.subr.mxu0 0.0
  %325 = vmatpush1.msra.mxu0 0.0
  %326 = vmatprep.subr.mxu0 0.0
  %327 = vmatpush1.msra.mxu0 0.0
  %328 = vmatprep.subr.mxu0 0.0
  %329 = vmatpush1.msra.mxu0 %v279
  %330 = vmatprep.subr.mxu0 0.0
  %331 = vmatpush1.msra.mxu0 %v278
  %332 = vmatprep.subr.mxu0 0.0
  %333 = vmatpush1.msra.mxu0 %v277
  %334 = vmatprep.subr.mxu0 0.0
  %335 = vmatpush1.msra.mxu0 %v276
  %336 = vmatprep.subr.mxu0 0.0
  %337 = vmatpush1.msra.mxu0 %v275
  %338 = vmatprep.subr.mxu0 0.0
  %339 = vmatpush1.msra.mxu0 %v274
  %340 = vmatprep.subr.mxu0 0.0
  %341 = vmatpush1.msra.mxu0 %v273
  %342 = vmatprep.subr.mxu0 0.0
  %343 = vmatpush1.msra.mxu0 %v272
  %344 = vmatprep.subr.mxu0 0.0
  %345 = vmatpush2.msra.mxu0 0.0
  %346 = vmatprep.subr.mxu0 0.0
  %347 = vmatpush2.msra.mxu0 0.0
  %348 = vmatprep.subr.mxu0 0.0
  %349 = vmatpush2.msra.mxu0 0.0
  %350 = vmatprep.subr.mxu0 0.0
  %351 = vmatpush2.msra.mxu0 0.0
  %352 = vmatprep.subr.mxu0 0.0
  %353 = vmatpush2.msra.mxu0 0.0
  %354 = vmatprep.subr.mxu0 0.0
  %355 = vmatpush2.msra.mxu0 0.0
  %356 = vmatprep.subr.mxu0 0.0
  %357 = vmatpush2.msra.mxu0 0.0
  %358 = vmatprep.subr.mxu0 0.0
  %359 = vmatpush2.msra.mxu0 0.0
  %360 = vmatprep.subr.mxu0 0.0
  %361 = vmatpush2.msra.mxu0 0.0
  %362 = vmatprep.subr.mxu0 0.0
  %363 = vmatpush2.msra.mxu0 0.0
  %364 = vmatprep.subr.mxu0 0.0
  %365 = vmatpush2.msra.mxu0 0.0
  %366 = vmatprep.subr.mxu0 0.0
  %367 = vmatpush2.msra.mxu0 0.0
  %368 = vmatprep.subr.mxu0 0.0
  %369 = vmatpush2.msra.mxu0 0.0
  %370 = vmatprep.subr.mxu0 0.0
  %371 = vmatpush2.msra.mxu0 0.0
  %372 = vmatprep.subr.mxu0 0.0
  %373 = vmatpush2.msra.mxu0 0.0
  %374 = vmatprep.subr.mxu0 0.0
  %375 = vmatpush2.msra.mxu0 0.0
  %376 = vmatprep.mubr.f32.mxu0 0.0
  %377 = vmatmul.mubr.f32.gmra.mxu0 %v289
  %v378 = vpop.f32.mrf.mxu0
  %v379 = vadd.f32 %v285, %v378
  %v380 = vpop.f32.mrf.mxu0
  %381 = vmatprep.mubr.f32.mxu0 0.0
  %382 = vmatmul.mubr.f32.gmra.mxu0 %v292
  %v383 = vpop.f32.mrf.mxu0
  %v384 = vadd.f32 %v285, %v383
  %v385 = vpop.f32.mrf.mxu0
  %386 = vmatprep.mubr.f32.mxu0 0.0
  %387 = vmatmul.mubr.f32.gmra.mxu0 %v295
  %v388 = vpop.f32.mrf.mxu0
  %v389 = vadd.f32 %v285, %v388
  %v390 = vpop.f32.mrf.mxu0
  %391 = vmatprep.mubr.f32.mxu0 0.0
  %392 = vmatmul.mubr.f32.gmra.mxu0 %v298
  %v393 = vpop.f32.mrf.mxu0
  %v394 = vadd.f32 %v285, %v393
  %v395 = vpop.f32.mrf.mxu0
  %396 = vmatprep.mubr.f32.mxu0 0.0
  %397 = vmatmul.mubr.f32.gmra.mxu0 %v301
  %v398 = vpop.f32.mrf.mxu0
  %v399 = vadd.f32 %v285, %v398
  %v400 = vpop.f32.mrf.mxu0
  %401 = vmatprep.mubr.f32.mxu0 0.0
  %402 = vmatmul.mubr.f32.gmra.mxu0 %v304
  %v403 = vpop.f32.mrf.mxu0
  %v404 = vadd.f32 %v285, %v403
  %v405 = vpop.f32.mrf.mxu0
  %406 = vmatprep.mubr.f32.mxu0 0.0
  %407 = vmatmul.mubr.f32.gmra.mxu0 %v307
  %v408 = vpop.f32.mrf.mxu0
  %v409 = vadd.f32 %v285, %v408
  %v410 = vpop.f32.mrf.mxu0
  %411 = vmatprep.mubr.f32.mxu0 0.0
  %412 = vmatmul.mubr.f32.gmra.mxu0 %v310
  %v413 = vpop.f32.mrf.mxu0
  %v414 = vadd.f32 %v285, %v413
  %v415 = vpop.f32.mrf.mxu0
  %416 = vdwg.mxu0
  %v417 = vld [vmem:[%s5] sm:$0xff]
  %v418 = vld [vmem:[%s5 + $0x8] sm:$0xff]
  %v419 = vld [vmem:[%s5 + $0x10] sm:$0xff]
  %v420 = vld [vmem:[%s5 + $0x18] sm:$0xff]
  %v421 = vld [vmem:[%s6] sm:$0x1]
  %v423 = vlaneseq
  %v424 = vshrl.u32 %v423, 7
  %v425 = vsub.s32 0, %v424
  %v426 = vrot.slane %v421, %v425
  %v429 = vsel %vm263, 0.0, 0
  %431 = vmatprep.subr.mxu0 0.0
  %432 = vmatpush1.msra.mxu0 0.0
  %433 = vmatprep.subr.mxu0 0.0
  %434 = vmatpush1.msra.mxu0 0.0
  %435 = vmatprep.subr.mxu0 0.0
  %436 = vmatpush1.msra.mxu0 0.0
  %437 = vmatprep.subr.mxu0 0.0
  %438 = vmatpush1.msra.mxu0 0.0
  %439 = vmatprep.subr.mxu0 0.0
  %440 = vmatpush1.msra.mxu0 0.0
  %441 = vmatprep.subr.mxu0 0.0
  %442 = vmatpush1.msra.mxu0 0.0
  %443 = vmatprep.subr.mxu0 0.0
  %444 = vmatpush1.msra.mxu0 0.0
  %445 = vmatprep.subr.mxu0 0.0
  %446 = vmatpush1.msra.mxu0 0.0
  %447 = vmatprep.subr.mxu0 0.0
  %448 = vmatpush1.msra.mxu0 0.0
  %449 = vmatprep.subr.mxu0 0.0
  %450 = vmatpush1.msra.mxu0 0.0
  %451 = vmatprep.subr.mxu0 0.0
  %452 = vmatpush1.msra.mxu0 0.0
  %453 = vmatprep.subr.mxu0 0.0
  %454 = vmatpush1.msra.mxu0 0.0
  %455 = vmatprep.subr.mxu0 0.0
  %456 = vmatpush1.msra.mxu0 %v420
  %457 = vmatprep.subr.mxu0 0.0
  %458 = vmatpush1.msra.mxu0 %v419
  %459 = vmatprep.subr.mxu0 0.0
  %460 = vmatpush1.msra.mxu0 %v418
  %461 = vmatprep.subr.mxu0 0.0
  %462 = vmatpush1.msra.mxu0 %v417
  %463 = vmatprep.subr.mxu0 0.0
  %464 = vmatpush2.msra.mxu0 0.0
  %465 = vmatprep.subr.mxu0 0.0
  %466 = vmatpush2.msra.mxu0 0.0
  %467 = vmatprep.subr.mxu0 0.0
  %468 = vmatpush2.msra.mxu0 0.0
  %469 = vmatprep.subr.mxu0 0.0
  %470 = vmatpush2.msra.mxu0 0.0
  %471 = vmatprep.subr.mxu0 0.0
  %472 = vmatpush2.msra.mxu0 0.0
  %473 = vmatprep.subr.mxu0 0.0
  %474 = vmatpush2.msra.mxu0 0.0
  %475 = vmatprep.subr.mxu0 0.0
  %476 = vmatpush2.msra.mxu0 0.0
  %477 = vmatprep.subr.mxu0 0.0
  %478 = vmatpush2.msra.mxu0 0.0
  %479 = vmatprep.subr.mxu0 0.0
  %480 = vmatpush2.msra.mxu0 0.0
  %481 = vmatprep.subr.mxu0 0.0
  %482 = vmatpush2.msra.mxu0 0.0
  %483 = vmatprep.subr.mxu0 0.0
  %484 = vmatpush2.msra.mxu0 0.0
  %485 = vmatprep.subr.mxu0 0.0
  %486 = vmatpush2.msra.mxu0 0.0
  %487 = vmatprep.subr.mxu0 0.0
  %488 = vmatpush2.msra.mxu0 0.0
  %489 = vmatprep.subr.mxu0 0.0
  %490 = vmatpush2.msra.mxu0 0.0
  %491 = vmatprep.subr.mxu0 0.0
  %492 = vmatpush2.msra.mxu0 0.0
  %493 = vmatprep.subr.mxu0 0.0
  %494 = vmatpush2.msra.mxu0 0.0
  %495 = vmatprep.mubr.f32.mxu0 0.0
  %496 = vmatmul.mubr.f32.gmra.mxu0 %v429
  %v497 = vpop.f32.mrf.mxu0
  %v498 = vadd.f32 %v426, %v497
  %v499 = vpop.f32.mrf.mxu0
  %500 = vdwg.mxu0
  %v501 = vadd.f32 %v379, %v498
  %v502 = vxor.u32 %v501, 2147483648
  %v503 = vmul.f32 %v502, 1.442695
  %v504 = vpow.pop %v503
  %v505 = vadd.f32 %v504, 1.0
  %v506 = vrcp.pop %v505
  %v507 = vmul.f32 1.0, %v506
  %509 = vrot.lane.b32.xlu0 %v498, 64
  %v510 = vpop.permute.xlu0 %509
  %v512 = vmul.f32 %v507, %v510
  %514 = vrot.lane.b32.xlu0 %v512, 64
  %v515 = vpop.permute.xlu0 %514
  %v517 = vadd.f32 %v379, %v515
  %v518 = vtanh.pop %v517
  %v519 = vsub.f32 1.0, %v507
  %521 = vrot.lane.b32.xlu0 %v518, 96
  %v522 = vpop.permute.xlu0 %521
  %v524 = vmul.f32 %v519, %v522
  %v525 = vmul.f32 %v507, 0.0
  %v526 = vadd.f32 %v524, %v525
  %528 = vrot.lane.b32.xlu0 %v526, 96
  %v529 = vpop.permute.xlu0 %528
  %v531 = vmul.f32 %v223, %v529
  %v532 = vsub.f32 1.0, %v223
  %v533 = vmul.f32 %v532, 0.0
  %v534 = vadd.f32 %v531, %v533
  %v536 = vsel %vm263, %v534, 0
  %538 = vmatprep.subr.mxu0 0.0
  %539 = vmatpush1.msra.mxu0 0.0
  %540 = vmatprep.subr.mxu0 0.0
  %541 = vmatpush1.msra.mxu0 0.0
  %542 = vmatprep.subr.mxu0 0.0
  %543 = vmatpush1.msra.mxu0 0.0
  %544 = vmatprep.subr.mxu0 0.0
  %545 = vmatpush1.msra.mxu0 0.0
  %546 = vmatprep.subr.mxu0 0.0
  %547 = vmatpush1.msra.mxu0 0.0
  %548 = vmatprep.subr.mxu0 0.0
  %549 = vmatpush1.msra.mxu0 0.0
  %550 = vmatprep.subr.mxu0 0.0
  %551 = vmatpush1.msra.mxu0 0.0
  %552 = vmatprep.subr.mxu0 0.0
  %553 = vmatpush1.msra.mxu0 0.0
  %554 = vmatprep.subr.mxu0 0.0
  %555 = vmatpush1.msra.mxu0 0.0
  %556 = vmatprep.subr.mxu0 0.0
  %557 = vmatpush1.msra.mxu0 0.0
  %558 = vmatprep.subr.mxu0 0.0
  %559 = vmatpush1.msra.mxu0 0.0
  %560 = vmatprep.subr.mxu0 0.0
  %561 = vmatpush1.msra.mxu0 0.0
  %562 = vmatprep.subr.mxu0 0.0
  %563 = vmatpush1.msra.mxu0 %v420
  %564 = vmatprep.subr.mxu0 0.0
  %565 = vmatpush1.msra.mxu0 %v419
  %566 = vmatprep.subr.mxu0 0.0
  %567 = vmatpush1.msra.mxu0 %v418
  %568 = vmatprep.subr.mxu0 0.0
  %569 = vmatpush1.msra.mxu0 %v417
  %570 = vmatprep.subr.mxu0 0.0
  %571 = vmatpush2.msra.mxu0 0.0
  %572 = vmatprep.subr.mxu0 0.0
  %573 = vmatpush2.msra.mxu0 0.0
  %574 = vmatprep.subr.mxu0 0.0
  %575 = vmatpush2.msra.mxu0 0.0
  %576 = vmatprep.subr.mxu0 0.0
  %577 = vmatpush2.msra.mxu0 0.0
  %578 = vmatprep.subr.mxu0 0.0
  %579 = vmatpush2.msra.mxu0 0.0
  %580 = vmatprep.subr.mxu0 0.0
  %581 = vmatpush2.msra.mxu0 0.0
  %582 = vmatprep.subr.mxu0 0.0
  %583 = vmatpush2.msra.mxu0 0.0
  %584 = vmatprep.subr.mxu0 0.0
  %585 = vmatpush2.msra.mxu0 0.0
  %586 = vmatprep.subr.mxu0 0.0
  %587 = vmatpush2.msra.mxu0 0.0
  %588 = vmatprep.subr.mxu0 0.0
  %589 = vmatpush2.msra.mxu0 0.0
  %590 = vmatprep.subr.mxu0 0.0
  %591 = vmatpush2.msra.mxu0 0.0
  %592 = vmatprep.subr.mxu0 0.0
  %593 = vmatpush2.msra.mxu0 0.0
  %594 = vmatprep.subr.mxu0 0.0
  %595 = vmatpush2.msra.mxu0 0.0
  %596 = vmatprep.subr.mxu0 0.0
  %597 = vmatpush2.msra.mxu0 0.0
  %598 = vmatprep.subr.mxu0 0.0
  %599 = vmatpush2.msra.mxu0 0.0
  %600 = vmatprep.subr.mxu0 0.0
  %601 = vmatpush2.msra.mxu0 0.0
  %602 = vmatprep.mubr.f32.mxu0 0.0
  %603 = vmatmul.mubr.f32.gmra.mxu0 %v536
  %v604 = vpop.f32.mrf.mxu0
  %v605 = vadd.f32 %v426, %v604
  %v606 = vpop.f32.mrf.mxu0
  %607 = vdwg.mxu0
  %v608 = vadd.f32 %v384, %v605
  %v609 = vxor.u32 %v608, 2147483648
  %v610 = vmul.f32 %v609, 1.442695
  %v611 = vpow.pop %v610
  %v612 = vadd.f32 %v611, 1.0
  %v613 = vrcp.pop %v612
  %v614 = vmul.f32 1.0, %v613
  %616 = vrot.lane.b32.xlu0 %v605, 64
  %v617 = vpop.permute.xlu0 %616
  %v619 = vmul.f32 %v614, %v617
  %621 = vrot.lane.b32.xlu0 %v619, 64
  %v622 = vpop.permute.xlu0 %621
  %v624 = vadd.f32 %v384, %v622
  %v625 = vtanh.pop %v624
  %v626 = vsub.f32 1.0, %v614
  %628 = vrot.lane.b32.xlu0 %v625, 96
  %v629 = vpop.permute.xlu0 %628
  %v631 = vmul.f32 %v626, %v629
  %632 = vrot.lane.b32.xlu0 %v534, 32
  %v633 = vpop.permute.xlu0 %632
  %v635 = vmul.f32 %v614, %v633
  %v636 = vadd.f32 %v631, %v635
  %638 = vrot.lane.b32.xlu0 %v636, 96
  %v639 = vpop.permute.xlu0 %638
  %v641 = vmul.f32 %v224, %v639
  %v642 = vsub.f32 1.0, %v224
  %v643 = vmul.f32 %v642, %v534
  %v644 = vadd.f32 %v641, %v643
  %v646 = vsel %vm263, %v644, 0
  %648 = vmatprep.subr.mxu0 0.0
  %649 = vmatpush1.msra.mxu0 0.0
  %650 = vmatprep.subr.mxu0 0.0
  %651 = vmatpush1.msra.mxu0 0.0
  %652 = vmatprep.subr.mxu0 0.0
  %653 = vmatpush1.msra.mxu0 0.0
  %654 = vmatprep.subr.mxu0 0.0
  %655 = vmatpush1.msra.mxu0 0.0
  %656 = vmatprep.subr.mxu0 0.0
  %657 = vmatpush1.msra.mxu0 0.0
  %658 = vmatprep.subr.mxu0 0.0
  %659 = vmatpush1.msra.mxu0 0.0
  %660 = vmatprep.subr.mxu0 0.0
  %661 = vmatpush1.msra.mxu0 0.0
  %662 = vmatprep.subr.mxu0 0.0
  %663 = vmatpush1.msra.mxu0 0.0
  %664 = vmatprep.subr.mxu0 0.0
  %665 = vmatpush1.msra.mxu0 0.0
  %666 = vmatprep.subr.mxu0 0.0
  %667 = vmatpush1.msra.mxu0 0.0
  %668 = vmatprep.subr.mxu0 0.0
  %669 = vmatpush1.msra.mxu0 0.0
  %670 = vmatprep.subr.mxu0 0.0
  %671 = vmatpush1.msra.mxu0 0.0
  %672 = vmatprep.subr.mxu0 0.0
  %673 = vmatpush1.msra.mxu0 %v420
  %674 = vmatprep.subr.mxu0 0.0
  %675 = vmatpush1.msra.mxu0 %v419
  %676 = vmatprep.subr.mxu0 0.0
  %677 = vmatpush1.msra.mxu0 %v418
  %678 = vmatprep.subr.mxu0 0.0
  %679 = vmatpush1.msra.mxu0 %v417
  %680 = vmatprep.subr.mxu0 0.0
  %681 = vmatpush2.msra.mxu0 0.0
  %682 = vmatprep.subr.mxu0 0.0
  %683 = vmatpush2.msra.mxu0 0.0
  %684 = vmatprep.subr.mxu0 0.0
  %685 = vmatpush2.msra.mxu0 0.0
  %686 = vmatprep.subr.mxu0 0.0
  %687 = vmatpush2.msra.mxu0 0.0
  %688 = vmatprep.subr.mxu0 0.0
  %689 = vmatpush2.msra.mxu0 0.0
  %690 = vmatprep.subr.mxu0 0.0
  %691 = vmatpush2.msra.mxu0 0.0
  %692 = vmatprep.subr.mxu0 0.0
  %693 = vmatpush2.msra.mxu0 0.0
  %694 = vmatprep.subr.mxu0 0.0
  %695 = vmatpush2.msra.mxu0 0.0
  %696 = vmatprep.subr.mxu0 0.0
  %697 = vmatpush2.msra.mxu0 0.0
  %698 = vmatprep.subr.mxu0 0.0
  %699 = vmatpush2.msra.mxu0 0.0
  %700 = vmatprep.subr.mxu0 0.0
  %701 = vmatpush2.msra.mxu0 0.0
  %702 = vmatprep.subr.mxu0 0.0
  %703 = vmatpush2.msra.mxu0 0.0
  %704 = vmatprep.subr.mxu0 0.0
  %705 = vmatpush2.msra.mxu0 0.0
  %706 = vmatprep.subr.mxu0 0.0
  %707 = vmatpush2.msra.mxu0 0.0
  %708 = vmatprep.subr.mxu0 0.0
  %709 = vmatpush2.msra.mxu0 0.0
  %710 = vmatprep.subr.mxu0 0.0
  %711 = vmatpush2.msra.mxu0 0.0
  %712 = vmatprep.mubr.f32.mxu0 0.0
  %713 = vmatmul.mubr.f32.gmra.mxu0 %v646
  %v714 = vpop.f32.mrf.mxu0
  %v715 = vadd.f32 %v426, %v714
  %v716 = vpop.f32.mrf.mxu0
  %717 = vdwg.mxu0
  %v718 = vadd.f32 %v389, %v715
  %v719 = vxor.u32 %v718, 2147483648
  %v720 = vmul.f32 %v719, 1.442695
  %v721 = vpow.pop %v720
  %v722 = vadd.f32 %v721, 1.0
  %v723 = vrcp.pop %v722
  %v724 = vmul.f32 1.0, %v723
  %726 = vrot.lane.b32.xlu0 %v715, 64
  %v727 = vpop.permute.xlu0 %726
  %v729 = vmul.f32 %v724, %v727
  %731 = vrot.lane.b32.xlu0 %v729, 64
  %v732 = vpop.permute.xlu0 %731
  %v734 = vadd.f32 %v389, %v732
  %v735 = vtanh.pop %v734
  %v736 = vsub.f32 1.0, %v724
  %738 = vrot.lane.b32.xlu0 %v735, 96
  %v739 = vpop.permute.xlu0 %738
  %v741 = vmul.f32 %v736, %v739
  %742 = vrot.lane.b32.xlu0 %v644, 32
  %v743 = vpop.permute.xlu0 %742
  %v745 = vmul.f32 %v724, %v743
  %v746 = vadd.f32 %v741, %v745
  %748 = vrot.lane.b32.xlu0 %v746, 96
  %v749 = vpop.permute.xlu0 %748
  %v751 = vmul.f32 %v225, %v749
  %v752 = vsub.f32 1.0, %v225
  %v753 = vmul.f32 %v752, %v644
  %v754 = vadd.f32 %v751, %v753
  %v756 = vsel %vm263, %v754, 0
  %758 = vmatprep.subr.mxu0 0.0
  %759 = vmatpush1.msra.mxu0 0.0
  %760 = vmatprep.subr.mxu0 0.0
  %761 = vmatpush1.msra.mxu0 0.0
  %762 = vmatprep.subr.mxu0 0.0
  %763 = vmatpush1.msra.mxu0 0.0
  %764 = vmatprep.subr.mxu0 0.0
  %765 = vmatpush1.msra.mxu0 0.0
  %766 = vmatprep.subr.mxu0 0.0
  %767 = vmatpush1.msra.mxu0 0.0
  %768 = vmatprep.subr.mxu0 0.0
  %769 = vmatpush1.msra.mxu0 0.0
  %770 = vmatprep.subr.mxu0 0.0
  %771 = vmatpush1.msra.mxu0 0.0
  %772 = vmatprep.subr.mxu0 0.0
  %773 = vmatpush1.msra.mxu0 0.0
  %774 = vmatprep.subr.mxu0 0.0
  %775 = vmatpush1.msra.mxu0 0.0
  %776 = vmatprep.subr.mxu0 0.0
  %777 = vmatpush1.msra.mxu0 0.0
  %778 = vmatprep.subr.mxu0 0.0
  %779 = vmatpush1.msra.mxu0 0.0
  %780 = vmatprep.subr.mxu0 0.0
  %781 = vmatpush1.msra.mxu0 0.0
  %782 = vmatprep.subr.mxu0 0.0
  %783 = vmatpush1.msra.mxu0 %v420
  %784 = vmatprep.subr.mxu0 0.0
  %785 = vmatpush1.msra.mxu0 %v419
  %786 = vmatprep.subr.mxu0 0.0
  %787 = vmatpush1.msra.mxu0 %v418
  %788 = vmatprep.subr.mxu0 0.0
  %789 = vmatpush1.msra.mxu0 %v417
  %790 = vmatprep.subr.mxu0 0.0
  %791 = vmatpush2.msra.mxu0 0.0
  %792 = vmatprep.subr.mxu0 0.0
  %793 = vmatpush2.msra.mxu0 0.0
  %794 = vmatprep.subr.mxu0 0.0
  %795 = vmatpush2.msra.mxu0 0.0
  %796 = vmatprep.subr.mxu0 0.0
  %797 = vmatpush2.msra.mxu0 0.0
  %798 = vmatprep.subr.mxu0 0.0
  %799 = vmatpush2.msra.mxu0 0.0
  %800 = vmatprep.subr.mxu0 0.0
  %801 = vmatpush2.msra.mxu0 0.0
  %802 = vmatprep.subr.mxu0 0.0
  %803 = vmatpush2.msra.mxu0 0.0
  %804 = vmatprep.subr.mxu0 0.0
  %805 = vmatpush2.msra.mxu0 0.0
  %806 = vmatprep.subr.mxu0 0.0
  %807 = vmatpush2.msra.mxu0 0.0
  %808 = vmatprep.subr.mxu0 0.0
  %809 = vmatpush2.msra.mxu0 0.0
  %810 = vmatprep.subr.mxu0 0.0
  %811 = vmatpush2.msra.mxu0 0.0
  %812 = vmatprep.subr.mxu0 0.0
  %813 = vmatpush2.msra.mxu0 0.0
  %814 = vmatprep.subr.mxu0 0.0
  %815 = vmatpush2.msra.mxu0 0.0
  %816 = vmatprep.subr.mxu0 0.0
  %817 = vmatpush2.msra.mxu0 0.0
  %818 = vmatprep.subr.mxu0 0.0
  %819 = vmatpush2.msra.mxu0 0.0
  %820 = vmatprep.subr.mxu0 0.0
  %821 = vmatpush2.msra.mxu0 0.0
  %822 = vmatprep.mubr.f32.mxu0 0.0
  %823 = vmatmul.mubr.f32.gmra.mxu0 %v756
  %v824 = vpop.f32.mrf.mxu0
  %v825 = vadd.f32 %v426, %v824
  %v826 = vpop.f32.mrf.mxu0
  %827 = vdwg.mxu0
  %v828 = vadd.f32 %v394, %v825
  %v829 = vxor.u32 %v828, 2147483648
  %v830 = vmul.f32 %v829, 1.442695
  %v831 = vpow.pop %v830
  %v832 = vadd.f32 %v831, 1.0
  %v833 = vrcp.pop %v832
  %v834 = vmul.f32 1.0, %v833
  %836 = vrot.lane.b32.xlu0 %v825, 64
  %v837 = vpop.permute.xlu0 %836
  %v839 = vmul.f32 %v834, %v837
  %841 = vrot.lane.b32.xlu0 %v839, 64
  %v842 = vpop.permute.xlu0 %841
  %v844 = vadd.f32 %v394, %v842
  %v845 = vtanh.pop %v844
  %v846 = vsub.f32 1.0, %v834
  %848 = vrot.lane.b32.xlu0 %v845, 96
  %v849 = vpop.permute.xlu0 %848
  %v851 = vmul.f32 %v846, %v849
  %852 = vrot.lane.b32.xlu0 %v754, 32
  %v853 = vpop.permute.xlu0 %852
  %v855 = vmul.f32 %v834, %v853
  %v856 = vadd.f32 %v851, %v855
  %858 = vrot.lane.b32.xlu0 %v856, 96
  %v859 = vpop.permute.xlu0 %858
  %v861 = vmul.f32 %v226, %v859
  %v862 = vsub.f32 1.0, %v226
  %v863 = vmul.f32 %v862, %v754
  %v864 = vadd.f32 %v861, %v863
  %v866 = vsel %vm263, %v864, 0
  %868 = vmatprep.subr.mxu0 0.0
  %869 = vmatpush1.msra.mxu0 0.0
  %870 = vmatprep.subr.mxu0 0.0
  %871 = vmatpush1.msra.mxu0 0.0
  %872 = vmatprep.subr.mxu0 0.0
  %873 = vmatpush1.msra.mxu0 0.0
  %874 = vmatprep.subr.mxu0 0.0
  %875 = vmatpush1.msra.mxu0 0.0
  %876 = vmatprep.subr.mxu0 0.0
  %877 = vmatpush1.msra.mxu0 0.0
  %878 = vmatprep.subr.mxu0 0.0
  %879 = vmatpush1.msra.mxu0 0.0
  %880 = vmatprep.subr.mxu0 0.0
  %881 = vmatpush1.msra.mxu0 0.0
  %882 = vmatprep.subr.mxu0 0.0
  %883 = vmatpush1.msra.mxu0 0.0
  %884 = vmatprep.subr.mxu0 0.0
  %885 = vmatpush1.msra.mxu0 0.0
  %886 = vmatprep.subr.mxu0 0.0
  %887 = vmatpush1.msra.mxu0 0.0
  %888 = vmatprep.subr.mxu0 0.0
  %889 = vmatpush1.msra.mxu0 0.0
  %890 = vmatprep.subr.mxu0 0.0
  %891 = vmatpush1.msra.mxu0 0.0
  %892 = vmatprep.subr.mxu0 0.0
  %893 = vmatpush1.msra.mxu0 %v420
  %894 = vmatprep.subr.mxu0 0.0
  %895 = vmatpush1.msra.mxu0 %v419
  %896 = vmatprep.subr.mxu0 0.0
  %897 = vmatpush1.msra.mxu0 %v418
  %898 = vmatprep.subr.mxu0 0.0
  %899 = vmatpush1.msra.mxu0 %v417
  %900 = vmatprep.subr.mxu0 0.0
  %901 = vmatpush2.msra.mxu0 0.0
  %902 = vmatprep.subr.mxu0 0.0
  %903 = vmatpush2.msra.mxu0 0.0
  %904 = vmatprep.subr.mxu0 0.0
  %905 = vmatpush2.msra.mxu0 0.0
  %906 = vmatprep.subr.mxu0 0.0
  %907 = vmatpush2.msra.mxu0 0.0
  %908 = vmatprep.subr.mxu0 0.0
  %909 = vmatpush2.msra.mxu0 0.0
  %910 = vmatprep.subr.mxu0 0.0
  %911 = vmatpush2.msra.mxu0 0.0
  %912 = vmatprep.subr.mxu0 0.0
  %913 = vmatpush2.msra.mxu0 0.0
  %914 = vmatprep.subr.mxu0 0.0
  %915 = vmatpush2.msra.mxu0 0.0
  %916 = vmatprep.subr.mxu0 0.0
  %917 = vmatpush2.msra.mxu0 0.0
  %918 = vmatprep.subr.mxu0 0.0
  %919 = vmatpush2.msra.mxu0 0.0
  %920 = vmatprep.subr.mxu0 0.0
  %921 = vmatpush2.msra.mxu0 0.0
  %922 = vmatprep.subr.mxu0 0.0
  %923 = vmatpush2.msra.mxu0 0.0
  %924 = vmatprep.subr.mxu0 0.0
  %925 = vmatpush2.msra.mxu0 0.0
  %926 = vmatprep.subr.mxu0 0.0
  %927 = vmatpush2.msra.mxu0 0.0
  %928 = vmatprep.subr.mxu0 0.0
  %929 = vmatpush2.msra.mxu0 0.0
  %930 = vmatprep.subr.mxu0 0.0
  %931 = vmatpush2.msra.mxu0 0.0
  %932 = vmatprep.mubr.f32.mxu0 0.0
  %933 = vmatmul.mubr.f32.gmra.mxu0 %v866
  %v934 = vpop.f32.mrf.mxu0
  %v935 = vadd.f32 %v426, %v934
  %v936 = vpop.f32.mrf.mxu0
  %937 = vdwg.mxu0
  %v938 = vadd.f32 %v399, %v935
  %v939 = vxor.u32 %v938, 2147483648
  %v940 = vmul.f32 %v939, 1.442695
  %v941 = vpow.pop %v940
  %v942 = vadd.f32 %v941, 1.0
  %v943 = vrcp.pop %v942
  %v944 = vmul.f32 1.0, %v943
  %946 = vrot.lane.b32.xlu0 %v935, 64
  %v947 = vpop.permute.xlu0 %946
  %v949 = vmul.f32 %v944, %v947
  %951 = vrot.lane.b32.xlu0 %v949, 64
  %v952 = vpop.permute.xlu0 %951
  %v954 = vadd.f32 %v399, %v952
  %v955 = vtanh.pop %v954
  %v956 = vsub.f32 1.0, %v944
  %958 = vrot.lane.b32.xlu0 %v955, 96
  %v959 = vpop.permute.xlu0 %958
  %v961 = vmul.f32 %v956, %v959
  %962 = vrot.lane.b32.xlu0 %v864, 32
  %v963 = vpop.permute.xlu0 %962
  %v965 = vmul.f32 %v944, %v963
  %v966 = vadd.f32 %v961, %v965
  %968 = vrot.lane.b32.xlu0 %v966, 96
  %v969 = vpop.permute.xlu0 %968
  %v971 = vmul.f32 %v227, %v969
  %v972 = vsub.f32 1.0, %v227
  %v973 = vmul.f32 %v972, %v864
  %v974 = vadd.f32 %v971, %v973
  %v976 = vsel %vm263, %v974, 0
  %978 = vmatprep.subr.mxu0 0.0
  %979 = vmatpush1.msra.mxu0 0.0
  %980 = vmatprep.subr.mxu0 0.0
  %981 = vmatpush1.msra.mxu0 0.0
  %982 = vmatprep.subr.mxu0 0.0
  %983 = vmatpush1.msra.mxu0 0.0
  %984 = vmatprep.subr.mxu0 0.0
  %985 = vmatpush1.msra.mxu0 0.0
  %986 = vmatprep.subr.mxu0 0.0
  %987 = vmatpush1.msra.mxu0 0.0
  %988 = vmatprep.subr.mxu0 0.0
  %989 = vmatpush1.msra.mxu0 0.0
  %990 = vmatprep.subr.mxu0 0.0
  %991 = vmatpush1.msra.mxu0 0.0
  %992 = vmatprep.subr.mxu0 0.0
  %993 = vmatpush1.msra.mxu0 0.0
  %994 = vmatprep.subr.mxu0 0.0
  %995 = vmatpush1.msra.mxu0 0.0
  %996 = vmatprep.subr.mxu0 0.0
  %997 = vmatpush1.msra.mxu0 0.0
  %998 = vmatprep.subr.mxu0 0.0
  %999 = vmatpush1.msra.mxu0 0.0
  %1000 = vmatprep.subr.mxu0 0.0
  %1001 = vmatpush1.msra.mxu0 0.0
  %1002 = vmatprep.subr.mxu0 0.0
  %1003 = vmatpush1.msra.mxu0 %v420
  %1004 = vmatprep.subr.mxu0 0.0
  %1005 = vmatpush1.msra.mxu0 %v419
  %1006 = vmatprep.subr.mxu0 0.0
  %1007 = vmatpush1.msra.mxu0 %v418
  %1008 = vmatprep.subr.mxu0 0.0
  %1009 = vmatpush1.msra.mxu0 %v417
  %1010 = vmatprep.subr.mxu0 0.0
  %1011 = vmatpush2.msra.mxu0 0.0
  %1012 = vmatprep.subr.mxu0 0.0
  %1013 = vmatpush2.msra.mxu0 0.0
  %1014 = vmatprep.subr.mxu0 0.0
  %1015 = vmatpush2.msra.mxu0 0.0
  %1016 = vmatprep.subr.mxu0 0.0
  %1017 = vmatpush2.msra.mxu0 0.0
  %1018 = vmatprep.subr.mxu0 0.0
  %1019 = vmatpush2.msra.mxu0 0.0
  %1020 = vmatprep.subr.mxu0 0.0
  %1021 = vmatpush2.msra.mxu0 0.0
  %1022 = vmatprep.subr.mxu0 0.0
  %1023 = vmatpush2.msra.mxu0 0.0
  %1024 = vmatprep.subr.mxu0 0.0
  %1025 = vmatpush2.msra.mxu0 0.0
  %1026 = vmatprep.subr.mxu0 0.0
  %1027 = vmatpush2.msra.mxu0 0.0
  %1028 = vmatprep.subr.mxu0 0.0
  %1029 = vmatpush2.msra.mxu0 0.0
  %1030 = vmatprep.subr.mxu0 0.0
  %1031 = vmatpush2.msra.mxu0 0.0
  %1032 = vmatprep.subr.mxu0 0.0
  %1033 = vmatpush2.msra.mxu0 0.0
  %1034 = vmatprep.subr.mxu0 0.0
  %1035 = vmatpush2.msra.mxu0 0.0
  %1036 = vmatprep.subr.mxu0 0.0
  %1037 = vmatpush2.msra.mxu0 0.0
  %1038 = vmatprep.subr.mxu0 0.0
  %1039 = vmatpush2.msra.mxu0 0.0
  %1040 = vmatprep.subr.mxu0 0.0
  %1041 = vmatpush2.msra.mxu0 0.0
  %1042 = vmatprep.mubr.f32.mxu0 0.0
  %1043 = vmatmul.mubr.f32.gmra.mxu0 %v976
  %v1044 = vpop.f32.mrf.mxu0
  %v1045 = vadd.f32 %v426, %v1044
  %v1046 = vpop.f32.mrf.mxu0
  %1047 = vdwg.mxu0
  %v1048 = vadd.f32 %v404, %v1045
  %v1049 = vxor.u32 %v1048, 2147483648
  %v1050 = vmul.f32 %v1049, 1.442695
  %v1051 = vpow.pop %v1050
  %v1052 = vadd.f32 %v1051, 1.0
  %v1053 = vrcp.pop %v1052
  %v1054 = vmul.f32 1.0, %v1053
  %1056 = vrot.lane.b32.xlu0 %v1045, 64
  %v1057 = vpop.permute.xlu0 %1056
  %v1059 = vmul.f32 %v1054, %v1057
  %1061 = vrot.lane.b32.xlu0 %v1059, 64
  %v1062 = vpop.permute.xlu0 %1061
  %v1064 = vadd.f32 %v404, %v1062
  %v1065 = vtanh.pop %v1064
  %v1066 = vsub.f32 1.0, %v1054
  %1068 = vrot.lane.b32.xlu0 %v1065, 96
  %v1069 = vpop.permute.xlu0 %1068
  %v1071 = vmul.f32 %v1066, %v1069
  %1072 = vrot.lane.b32.xlu0 %v974, 32
  %v1073 = vpop.permute.xlu0 %1072
  %v1075 = vmul.f32 %v1054, %v1073
  %v1076 = vadd.f32 %v1071, %v1075
  %1078 = vrot.lane.b32.xlu0 %v1076, 96
  %v1079 = vpop.permute.xlu0 %1078
  %v1081 = vmul.f32 %v228, %v1079
  %v1082 = vsub.f32 1.0, %v228
  %v1083 = vmul.f32 %v1082, %v974
  %v1084 = vadd.f32 %v1081, %v1083
  %v1086 = vsel %vm263, %v1084, 0
  %1088 = vmatprep.subr.mxu0 0.0
  %1089 = vmatpush1.msra.mxu0 0.0
  %1090 = vmatprep.subr.mxu0 0.0
  %1091 = vmatpush1.msra.mxu0 0.0
  %1092 = vmatprep.subr.mxu0 0.0
  %1093 = vmatpush1.msra.mxu0 0.0
  %1094 = vmatprep.subr.mxu0 0.0
  %1095 = vmatpush1.msra.mxu0 0.0
  %1096 = vmatprep.subr.mxu0 0.0
  %1097 = vmatpush1.msra.mxu0 0.0
  %1098 = vmatprep.subr.mxu0 0.0
  %1099 = vmatpush1.msra.mxu0 0.0
  %1100 = vmatprep.subr.mxu0 0.0
  %1101 = vmatpush1.msra.mxu0 0.0
  %1102 = vmatprep.subr.mxu0 0.0
  %1103 = vmatpush1.msra.mxu0 0.0
  %1104 = vmatprep.subr.mxu0 0.0
  %1105 = vmatpush1.msra.mxu0 0.0
  %1106 = vmatprep.subr.mxu0 0.0
  %1107 = vmatpush1.msra.mxu0 0.0
  %1108 = vmatprep.subr.mxu0 0.0
  %1109 = vmatpush1.msra.mxu0 0.0
  %1110 = vmatprep.subr.mxu0 0.0
  %1111 = vmatpush1.msra.mxu0 0.0
  %1112 = vmatprep.subr.mxu0 0.0
  %1113 = vmatpush1.msra.mxu0 %v420
  %1114 = vmatprep.subr.mxu0 0.0
  %1115 = vmatpush1.msra.mxu0 %v419
  %1116 = vmatprep.subr.mxu0 0.0
  %1117 = vmatpush1.msra.mxu0 %v418
  %1118 = vmatprep.subr.mxu0 0.0
  %1119 = vmatpush1.msra.mxu0 %v417
  %1120 = vmatprep.subr.mxu0 0.0
  %1121 = vmatpush2.msra.mxu0 0.0
  %1122 = vmatprep.subr.mxu0 0.0
  %1123 = vmatpush2.msra.mxu0 0.0
  %1124 = vmatprep.subr.mxu0 0.0
  %1125 = vmatpush2.msra.mxu0 0.0
  %1126 = vmatprep.subr.mxu0 0.0
  %1127 = vmatpush2.msra.mxu0 0.0
  %1128 = vmatprep.subr.mxu0 0.0
  %1129 = vmatpush2.msra.mxu0 0.0
  %1130 = vmatprep.subr.mxu0 0.0
  %1131 = vmatpush2.msra.mxu0 0.0
  %1132 = vmatprep.subr.mxu0 0.0
  %1133 = vmatpush2.msra.mxu0 0.0
  %1134 = vmatprep.subr.mxu0 0.0
  %1135 = vmatpush2.msra.mxu0 0.0
  %1136 = vmatprep.subr.mxu0 0.0
  %1137 = vmatpush2.msra.mxu0 0.0
  %1138 = vmatprep.subr.mxu0 0.0
  %1139 = vmatpush2.msra.mxu0 0.0
  %1140 = vmatprep.subr.mxu0 0.0
  %1141 = vmatpush2.msra.mxu0 0.0
  %1142 = vmatprep.subr.mxu0 0.0
  %1143 = vmatpush2.msra.mxu0 0.0
  %1144 = vmatprep.subr.mxu0 0.0
  %1145 = vmatpush2.msra.mxu0 0.0
  %1146 = vmatprep.subr.mxu0 0.0
  %1147 = vmatpush2.msra.mxu0 0.0
  %1148 = vmatprep.subr.mxu0 0.0
  %1149 = vmatpush2.msra.mxu0 0.0
  %1150 = vmatprep.subr.mxu0 0.0
  %1151 = vmatpush2.msra.mxu0 0.0
  %1152 = vmatprep.mubr.f32.mxu0 0.0
  %1153 = vmatmul.mubr.f32.gmra.mxu0 %v1086
  %v1154 = vpop.f32.mrf.mxu0
  %v1155 = vadd.f32 %v426, %v1154
  %v1156 = vpop.f32.mrf.mxu0
  %1157 = vdwg.mxu0
  %v1158 = vadd.f32 %v409, %v1155
  %v1159 = vxor.u32 %v1158, 2147483648
  %v1160 = vmul.f32 %v1159, 1.442695
  %v1161 = vpow.pop %v1160
  %v1162 = vadd.f32 %v1161, 1.0
  %v1163 = vrcp.pop %v1162
  %v1164 = vmul.f32 1.0, %v1163
  %1166 = vrot.lane.b32.xlu0 %v1155, 64
  %v1167 = vpop.permute.xlu0 %1166
  %v1169 = vmul.f32 %v1164, %v1167
  %1171 = vrot.lane.b32.xlu0 %v1169, 64
  %v1172 = vpop.permute.xlu0 %1171
  %v1174 = vadd.f32 %v409, %v1172
  %v1175 = vtanh.pop %v1174
  %v1176 = vsub.f32 1.0, %v1164
  %1178 = vrot.lane.b32.xlu0 %v1175, 96
  %v1179 = vpop.permute.xlu0 %1178
  %v1181 = vmul.f32 %v1176, %v1179
  %1182 = vrot.lane.b32.xlu0 %v1084, 32
  %v1183 = vpop.permute.xlu0 %1182
  %v1185 = vmul.f32 %v1164, %v1183
  %v1186 = vadd.f32 %v1181, %v1185
  %1188 = vrot.lane.b32.xlu0 %v1186, 96
  %v1189 = vpop.permute.xlu0 %1188
  %v1191 = vmul.f32 %v229, %v1189
  %v1192 = vsub.f32 1.0, %v229
  %v1193 = vmul.f32 %v1192, %v1084
  %v1194 = vadd.f32 %v1191, %v1193
  %v1196 = vsel %vm263, %v1194, 0
  %1198 = vmatprep.subr.mxu0 0.0
  %1199 = vmatpush1.msra.mxu0 0.0
  %1200 = vmatprep.subr.mxu0 0.0
  %1201 = vmatpush1.msra.mxu0 0.0
  %1202 = vmatprep.subr.mxu0 0.0
  %1203 = vmatpush1.msra.mxu0 0.0
  %1204 = vmatprep.subr.mxu0 0.0
  %1205 = vmatpush1.msra.mxu0 0.0
  %1206 = vmatprep.subr.mxu0 0.0
  %1207 = vmatpush1.msra.mxu0 0.0
  %1208 = vmatprep.subr.mxu0 0.0
  %1209 = vmatpush1.msra.mxu0 0.0
  %1210 = vmatprep.subr.mxu0 0.0
  %1211 = vmatpush1.msra.mxu0 0.0
  %1212 = vmatprep.subr.mxu0 0.0
  %1213 = vmatpush1.msra.mxu0 0.0
  %1214 = vmatprep.subr.mxu0 0.0
  %1215 = vmatpush1.msra.mxu0 0.0
  %1216 = vmatprep.subr.mxu0 0.0
  %1217 = vmatpush1.msra.mxu0 0.0
  %1218 = vmatprep.subr.mxu0 0.0
  %1219 = vmatpush1.msra.mxu0 0.0
  %1220 = vmatprep.subr.mxu0 0.0
  %1221 = vmatpush1.msra.mxu0 0.0
  %1222 = vmatprep.subr.mxu0 0.0
  %1223 = vmatpush1.msra.mxu0 %v420
  %1224 = vmatprep.subr.mxu0 0.0
  %1225 = vmatpush1.msra.mxu0 %v419
  %1226 = vmatprep.subr.mxu0 0.0
  %1227 = vmatpush1.msra.mxu0 %v418
  %1228 = vmatprep.subr.mxu0 0.0
  %1229 = vmatpush1.msra.mxu0 %v417
  %1230 = vmatprep.subr.mxu0 0.0
  %1231 = vmatpush2.msra.mxu0 0.0
  %1232 = vmatprep.subr.mxu0 0.0
  %1233 = vmatpush2.msra.mxu0 0.0
  %1234 = vmatprep.subr.mxu0 0.0
  %1235 = vmatpush2.msra.mxu0 0.0
  %1236 = vmatprep.subr.mxu0 0.0
  %1237 = vmatpush2.msra.mxu0 0.0
  %1238 = vmatprep.subr.mxu0 0.0
  %1239 = vmatpush2.msra.mxu0 0.0
  %1240 = vmatprep.subr.mxu0 0.0
  %1241 = vmatpush2.msra.mxu0 0.0
  %1242 = vmatprep.subr.mxu0 0.0
  %1243 = vmatpush2.msra.mxu0 0.0
  %1244 = vmatprep.subr.mxu0 0.0
  %1245 = vmatpush2.msra.mxu0 0.0
  %1246 = vmatprep.subr.mxu0 0.0
  %1247 = vmatpush2.msra.mxu0 0.0
  %1248 = vmatprep.subr.mxu0 0.0
  %1249 = vmatpush2.msra.mxu0 0.0
  %1250 = vmatprep.subr.mxu0 0.0
  %1251 = vmatpush2.msra.mxu0 0.0
  %1252 = vmatprep.subr.mxu0 0.0
  %1253 = vmatpush2.msra.mxu0 0.0
  %1254 = vmatprep.subr.mxu0 0.0
  %1255 = vmatpush2.msra.mxu0 0.0
  %1256 = vmatprep.subr.mxu0 0.0
  %1257 = vmatpush2.msra.mxu0 0.0
  %1258 = vmatprep.subr.mxu0 0.0
  %1259 = vmatpush2.msra.mxu0 0.0
  %1260 = vmatprep.subr.mxu0 0.0
  %1261 = vmatpush2.msra.mxu0 0.0
  %1262 = vmatprep.mubr.f32.mxu0 0.0
  %1263 = vmatmul.mubr.f32.gmra.mxu0 %v1196
  %v1264 = vpop.f32.mrf.mxu0
  %v1265 = vadd.f32 %v426, %v1264
  %v1266 = vpop.f32.mrf.mxu0
  %1267 = vdwg.mxu0
  %v1268 = vadd.f32 %v414, %v1265
  %v1269 = vxor.u32 %v1268, 2147483648
  %v1270 = vmul.f32 %v1269, 1.442695
  %v1271 = vpow.pop %v1270
  %v1272 = vadd.f32 %v1271, 1.0
  %v1273 = vrcp.pop %v1272
  %v1274 = vmul.f32 1.0, %v1273
  %1276 = vrot.lane.b32.xlu0 %v1265, 64
  %v1277 = vpop.permute.xlu0 %1276
  %v1279 = vmul.f32 %v1274, %v1277
  %1281 = vrot.lane.b32.xlu0 %v1279, 64
  %v1282 = vpop.permute.xlu0 %1281
  %v1284 = vadd.f32 %v414, %v1282
  %v1285 = vtanh.pop %v1284
  %v1286 = vsub.f32 1.0, %v1274
  %1288 = vrot.lane.b32.xlu0 %v1285, 96
  %v1289 = vpop.permute.xlu0 %1288
  %v1291 = vmul.f32 %v1286, %v1289
  %1292 = vrot.lane.b32.xlu0 %v1194, 32
  %v1293 = vpop.permute.xlu0 %1292
  %v1295 = vmul.f32 %v1274, %v1293
  %v1296 = vadd.f32 %v1291, %v1295
  %1298 = vrot.lane.b32.xlu0 %v1296, 96
  %v1299 = vpop.permute.xlu0 %1298
  %v1301 = vmul.f32 %v230, %v1299
  %v1302 = vsub.f32 1.0, %v230
  %v1303 = vmul.f32 %v1302, %v1194
  %v1304 = vadd.f32 %v1301, %v1303
  %vm1305 = vcmask 130048
  %v1306 = vsel %vm1305, %v531, %v1301
  %v1307 = vsel %vm1305, %v641, %v1191
  %v1308 = vsel %vm1305, %v751, %v1081
  %v1309 = vsel %vm1305, %v861, %v971
  %v1310 = vsel %vm1305, %v971, %v861
  %v1311 = vsel %vm1305, %v1081, %v751
  %v1312 = vsel %vm1305, %v1191, %v641
  %v1313 = vsel %vm1305, %v1301, %v531
  %1322 = vrot.lane.b32.xlu0 %v1313, 32
  %v1323 = vpop.permute.xlu0 %1322
  %1324 = vrot.lane.b32.xlu0 %v1312, 32
  %v1325 = vpop.permute.xlu0 %1324
  %1326 = vrot.lane.b32.xlu0 %v1311, 32
  %v1327 = vpop.permute.xlu0 %1326
  %1328 = vrot.lane.b32.xlu0 %v1310, 32
  %v1329 = vpop.permute.xlu0 %1328
  %1330 = vrot.lane.b32.xlu0 %v1309, 32
  %v1331 = vpop.permute.xlu0 %1330
  %1332 = vrot.lane.b32.xlu0 %v1308, 32
  %v1333 = vpop.permute.xlu0 %1332
  %1334 = vrot.lane.b32.xlu0 %v1307, 32
  %v1335 = vpop.permute.xlu0 %1334
  %1336 = vrot.lane.b32.xlu0 %v1306, 32
  %v1337 = vpop.permute.xlu0 %1336
  %v1346 = vsel %vm263, %v1306, %v1323
  %v1347 = vsel %vm263, %v1307, %v1325
  %v1348 = vsel %vm263, %v1308, %v1327
  %v1349 = vsel %vm263, %v1309, %v1329
  %v1350 = vsel %vm263, %v1310, %v1331
  %v1351 = vsel %vm263, %v1311, %v1333
  %v1352 = vsel %vm263, %v1312, %v1335
  %v1353 = vsel %vm263, %v1313, %v1337
  %v1354 = vld [vmem:[%s7] sm:$0xff]
  %v1355 = vld [vmem:[%s7 + $0x8] sm:$0xff]
  %v1356 = vld [vmem:[%s7 + $0x10] sm:$0xff]
  %v1357 = vld [vmem:[%s7 + $0x18] sm:$0xff]
  %v1358 = vld [vmem:[%s7 + $0x20] sm:$0xff]
  %v1359 = vld [vmem:[%s7 + $0x28] sm:$0xff]
  %v1360 = vld [vmem:[%s7 + $0x30] sm:$0xff]
  %v1361 = vld [vmem:[%s7 + $0x38] sm:$0xff]
  %v1362 = vld [vmem:[%s8] sm:$0x1]
  %v1364 = vlaneseq
  %v1365 = vshrl.u32 %v1364, 7
  %v1366 = vsub.s32 0, %v1365
  %v1367 = vrot.slane %v1362, %v1366
  %v1370 = vsel %vm287, %v1346, 0
  %v1373 = vsel %vm287, %v1347, 0
  %v1376 = vsel %vm287, %v1348, 0
  %v1379 = vsel %vm287, %v1349, 0
  %v1382 = vsel %vm287, %v1350, 0
  %v1385 = vsel %vm287, %v1351, 0
  %v1388 = vsel %vm287, %v1352, 0
  %v1391 = vsel %vm287, %v1353, 0
  %1393 = vmatprep.subr.mxu0 0.0
  %1394 = vmatpush1.msra.mxu0 0.0
  %1395 = vmatprep.subr.mxu0 0.0
  %1396 = vmatpush1.msra.mxu0 0.0
  %1397 = vmatprep.subr.mxu0 0.0
  %1398 = vmatpush1.msra.mxu0 0.0
  %1399 = vmatprep.subr.mxu0 0.0
  %1400 = vmatpush1.msra.mxu0 0.0
  %1401 = vmatprep.subr.mxu0 0.0
  %1402 = vmatpush1.msra.mxu0 0.0
  %1403 = vmatprep.subr.mxu0 0.0
  %1404 = vmatpush1.msra.mxu0 0.0
  %1405 = vmatprep.subr.mxu0 0.0
  %1406 = vmatpush1.msra.mxu0 0.0
  %1407 = vmatprep.subr.mxu0 0.0
  %1408 = vmatpush1.msra.mxu0 0.0
  %1409 = vmatprep.subr.mxu0 0.0
  %1410 = vmatpush1.msra.mxu0 %v1361
  %1411 = vmatprep.subr.mxu0 0.0
  %1412 = vmatpush1.msra.mxu0 %v1360
  %1413 = vmatprep.subr.mxu0 0.0
  %1414 = vmatpush1.msra.mxu0 %v1359
  %1415 = vmatprep.subr.mxu0 0.0
  %1416 = vmatpush1.msra.mxu0 %v1358
  %1417 = vmatprep.subr.mxu0 0.0
  %1418 = vmatpush1.msra.mxu0 %v1357
  %1419 = vmatprep.subr.mxu0 0.0
  %1420 = vmatpush1.msra.mxu0 %v1356
  %1421 = vmatprep.subr.mxu0 0.0
  %1422 = vmatpush1.msra.mxu0 %v1355
  %1423 = vmatprep.subr.mxu0 0.0
  %1424 = vmatpush1.msra.mxu0 %v1354
  %1425 = vmatprep.subr.mxu0 0.0
  %1426 = vmatpush2.msra.mxu0 0.0
  %1427 = vmatprep.subr.mxu0 0.0
  %1428 = vmatpush2.msra.mxu0 0.0
  %1429 = vmatprep.subr.mxu0 0.0
  %1430 = vmatpush2.msra.mxu0 0.0
  %1431 = vmatprep.subr.mxu0 0.0
  %1432 = vmatpush2.msra.mxu0 0.0
  %1433 = vmatprep.subr.mxu0 0.0
  %1434 = vmatpush2.msra.mxu0 0.0
  %1435 = vmatprep.subr.mxu0 0.0
  %1436 = vmatpush2.msra.mxu0 0.0
  %1437 = vmatprep.subr.mxu0 0.0
  %1438 = vmatpush2.msra.mxu0 0.0
  %1439 = vmatprep.subr.mxu0 0.0
  %1440 = vmatpush2.msra.mxu0 0.0
  %1441 = vmatprep.subr.mxu0 0.0
  %1442 = vmatpush2.msra.mxu0 0.0
  %1443 = vmatprep.subr.mxu0 0.0
  %1444 = vmatpush2.msra.mxu0 0.0
  %1445 = vmatprep.subr.mxu0 0.0
  %1446 = vmatpush2.msra.mxu0 0.0
  %1447 = vmatprep.subr.mxu0 0.0
  %1448 = vmatpush2.msra.mxu0 0.0
  %1449 = vmatprep.subr.mxu0 0.0
  %1450 = vmatpush2.msra.mxu0 0.0
  %1451 = vmatprep.subr.mxu0 0.0
  %1452 = vmatpush2.msra.mxu0 0.0
  %1453 = vmatprep.subr.mxu0 0.0
  %1454 = vmatpush2.msra.mxu0 0.0
  %1455 = vmatprep.subr.mxu0 0.0
  %1456 = vmatpush2.msra.mxu0 0.0
  %1457 = vmatprep.mubr.f32.mxu0 0.0
  %1458 = vmatmul.mubr.f32.gmra.mxu0 %v1370
  %v1459 = vpop.f32.mrf.mxu0
  %v1460 = vadd.f32 %v1367, %v1459
  %v1461 = vpop.f32.mrf.mxu0
  %1462 = vmatprep.mubr.f32.mxu0 0.0
  %1463 = vmatmul.mubr.f32.gmra.mxu0 %v1373
  %v1464 = vpop.f32.mrf.mxu0
  %v1465 = vadd.f32 %v1367, %v1464
  %v1466 = vpop.f32.mrf.mxu0
  %1467 = vmatprep.mubr.f32.mxu0 0.0
  %1468 = vmatmul.mubr.f32.gmra.mxu0 %v1376
  %v1469 = vpop.f32.mrf.mxu0
  %v1470 = vadd.f32 %v1367, %v1469
  %v1471 = vpop.f32.mrf.mxu0
  %1472 = vmatprep.mubr.f32.mxu0 0.0
  %1473 = vmatmul.mubr.f32.gmra.mxu0 %v1379
  %v1474 = vpop.f32.mrf.mxu0
  %v1475 = vadd.f32 %v1367, %v1474
  %v1476 = vpop.f32.mrf.mxu0
  %1477 = vmatprep.mubr.f32.mxu0 0.0
  %1478 = vmatmul.mubr.f32.gmra.mxu0 %v1382
  %v1479 = vpop.f32.mrf.mxu0
  %v1480 = vadd.f32 %v1367, %v1479
  %v1481 = vpop.f32.mrf.mxu0
  %1482 = vmatprep.mubr.f32.mxu0 0.0
  %1483 = vmatmul.mubr.f32.gmra.mxu0 %v1385
  %v1484 = vpop.f32.mrf.mxu0
  %v1485 = vadd.f32 %v1367, %v1484
  %v1486 = vpop.f32.mrf.mxu0
  %1487 = vmatprep.mubr.f32.mxu0 0.0
  %1488 = vmatmul.mubr.f32.gmra.mxu0 %v1388
  %v1489 = vpop.f32.mrf.mxu0
  %v1490 = vadd.f32 %v1367, %v1489
  %v1491 = vpop.f32.mrf.mxu0
  %1492 = vmatprep.mubr.f32.mxu0 0.0
  %1493 = vmatmul.mubr.f32.gmra.mxu0 %v1391
  %v1494 = vpop.f32.mrf.mxu0
  %v1495 = vadd.f32 %v1367, %v1494
  %v1496 = vpop.f32.mrf.mxu0
  %1497 = vdwg.mxu0
  %v1498 = vld [vmem:[%s9] sm:$0xff]
  %v1499 = vld [vmem:[%s9 + $0x8] sm:$0xff]
  %v1500 = vld [vmem:[%s9 + $0x10] sm:$0xff]
  %v1501 = vld [vmem:[%s9 + $0x18] sm:$0xff]
  %v1502 = vld [vmem:[%s10] sm:$0x1]
  %v1504 = vlaneseq
  %v1505 = vshrl.u32 %v1504, 7
  %v1506 = vsub.s32 0, %v1505
  %v1507 = vrot.slane %v1502, %v1506
  %1509 = vmatprep.subr.mxu0 0.0
  %1510 = vmatpush1.msra.mxu0 0.0
  %1511 = vmatprep.subr.mxu0 0.0
  %1512 = vmatpush1.msra.mxu0 0.0
  %1513 = vmatprep.subr.mxu0 0.0
  %1514 = vmatpush1.msra.mxu0 0.0
  %1515 = vmatprep.subr.mxu0 0.0
  %1516 = vmatpush1.msra.mxu0 0.0
  %1517 = vmatprep.subr.mxu0 0.0
  %1518 = vmatpush1.msra.mxu0 0.0
  %1519 = vmatprep.subr.mxu0 0.0
  %1520 = vmatpush1.msra.mxu0 0.0
  %1521 = vmatprep.subr.mxu0 0.0
  %1522 = vmatpush1.msra.mxu0 0.0
  %1523 = vmatprep.subr.mxu0 0.0
  %1524 = vmatpush1.msra.mxu0 0.0
  %1525 = vmatprep.subr.mxu0 0.0
  %1526 = vmatpush1.msra.mxu0 0.0
  %1527 = vmatprep.subr.mxu0 0.0
  %1528 = vmatpush1.msra.mxu0 0.0
  %1529 = vmatprep.subr.mxu0 0.0
  %1530 = vmatpush1.msra.mxu0 0.0
  %1531 = vmatprep.subr.mxu0 0.0
  %1532 = vmatpush1.msra.mxu0 0.0
  %1533 = vmatprep.subr.mxu0 0.0
  %1534 = vmatpush1.msra.mxu0 %v1501
  %1535 = vmatprep.subr.mxu0 0.0
  %1536 = vmatpush1.msra.mxu0 %v1500
  %1537 = vmatprep.subr.mxu0 0.0
  %1538 = vmatpush1.msra.mxu0 %v1499
  %1539 = vmatprep.subr.mxu0 0.0
  %1540 = vmatpush1.msra.mxu0 %v1498
  %1541 = vmatprep.subr.mxu0 0.0
  %1542 = vmatpush2.msra.mxu0 0.0
  %1543 = vmatprep.subr.mxu0 0.0
  %1544 = vmatpush2.msra.mxu0 0.0
  %1545 = vmatprep.subr.mxu0 0.0
  %1546 = vmatpush2.msra.mxu0 0.0
  %1547 = vmatprep.subr.mxu0 0.0
  %1548 = vmatpush2.msra.mxu0 0.0
  %1549 = vmatprep.subr.mxu0 0.0
  %1550 = vmatpush2.msra.mxu0 0.0
  %1551 = vmatprep.subr.mxu0 0.0
  %1552 = vmatpush2.msra.mxu0 0.0
  %1553 = vmatprep.subr.mxu0 0.0
  %1554 = vmatpush2.msra.mxu0 0.0
  %1555 = vmatprep.subr.mxu0 0.0
  %1556 = vmatpush2.msra.mxu0 0.0
  %1557 = vmatprep.subr.mxu0 0.0
  %1558 = vmatpush2.msra.mxu0 0.0
  %1559 = vmatprep.subr.mxu0 0.0
  %1560 = vmatpush2.msra.mxu0 0.0
  %1561 = vmatprep.subr.mxu0 0.0
  %1562 = vmatpush2.msra.mxu0 0.0
  %1563 = vmatprep.subr.mxu0 0.0
  %1564 = vmatpush2.msra.mxu0 0.0
  %1565 = vmatprep.subr.mxu0 0.0
  %1566 = vmatpush2.msra.mxu0 0.0
  %1567 = vmatprep.subr.mxu0 0.0
  %1568 = vmatpush2.msra.mxu0 0.0
  %1569 = vmatprep.subr.mxu0 0.0
  %1570 = vmatpush2.msra.mxu0 0.0
  %1571 = vmatprep.subr.mxu0 0.0
  %1572 = vmatpush2.msra.mxu0 0.0
  %1573 = vmatprep.mubr.f32.mxu0 0.0
  %1574 = vmatmul.mubr.f32.gmra.mxu0 %v429
  %v1575 = vpop.f32.mrf.mxu0
  %v1576 = vadd.f32 %v1507, %v1575
  %v1577 = vpop.f32.mrf.mxu0
  %1578 = vdwg.mxu0
  %v1579 = vadd.f32 %v1460, %v1576
  %v1580 = vxor.u32 %v1579, 2147483648
  %v1581 = vmul.f32 %v1580, 1.442695
  %v1582 = vpow.pop %v1581
  %v1583 = vadd.f32 %v1582, 1.0
  %v1584 = vrcp.pop %v1583
  %v1585 = vmul.f32 1.0, %v1584
  %1587 = vrot.lane.b32.xlu0 %v1576, 64
  %v1588 = vpop.permute.xlu0 %1587
  %v1590 = vmul.f32 %v1585, %v1588
  %1592 = vrot.lane.b32.xlu0 %v1590, 64
  %v1593 = vpop.permute.xlu0 %1592
  %v1595 = vadd.f32 %v1460, %v1593
  %v1596 = vtanh.pop %v1595
  %v1597 = vsub.f32 1.0, %v1585
  %1599 = vrot.lane.b32.xlu0 %v1596, 96
  %v1600 = vpop.permute.xlu0 %1599
  %v1602 = vmul.f32 %v1597, %v1600
  %v1603 = vmul.f32 %v1585, 0.0
  %v1604 = vadd.f32 %v1602, %v1603
  %1606 = vrot.lane.b32.xlu0 %v1604, 96
  %v1607 = vpop.permute.xlu0 %1606
  %v1609 = vmul.f32 %v223, %v1607
  %v1610 = vadd.f32 %v1609, %v533
  %v1612 = vsel %vm263, %v1610, 0
  %1614 = vmatprep.subr.mxu0 0.0
  %1615 = vmatpush1.msra.mxu0 0.0
  %1616 = vmatprep.subr.mxu0 0.0
  %1617 = vmatpush1.msra.mxu0 0.0
  %1618 = vmatprep.subr.mxu0 0.0
  %1619 = vmatpush1.msra.mxu0 0.0
  %1620 = vmatprep.subr.mxu0 0.0
  %1621 = vmatpush1.msra.mxu0 0.0
  %1622 = vmatprep.subr.mxu0 0.0
  %1623 = vmatpush1.msra.mxu0 0.0
  %1624 = vmatprep.subr.mxu0 0.0
  %1625 = vmatpush1.msra.mxu0 0.0
  %1626 = vmatprep.subr.mxu0 0.0
  %1627 = vmatpush1.msra.mxu0 0.0
  %1628 = vmatprep.subr.mxu0 0.0
  %1629 = vmatpush1.msra.mxu0 0.0
  %1630 = vmatprep.subr.mxu0 0.0
  %1631 = vmatpush1.msra.mxu0 0.0
  %1632 = vmatprep.subr.mxu0 0.0
  %1633 = vmatpush1.msra.mxu0 0.0
  %1634 = vmatprep.subr.mxu0 0.0
  %1635 = vmatpush1.msra.mxu0 0.0
  %1636 = vmatprep.subr.mxu0 0.0
  %1637 = vmatpush1.msra.mxu0 0.0
  %1638 = vmatprep.subr.mxu0 0.0
  %1639 = vmatpush1.msra.mxu0 %v1501
  %1640 = vmatprep.subr.mxu0 0.0
  %1641 = vmatpush1.msra.mxu0 %v1500
  %1642 = vmatprep.subr.mxu0 0.0
  %1643 = vmatpush1.msra.mxu0 %v1499
  %1644 = vmatprep.subr.mxu0 0.0
  %1645 = vmatpush1.msra.mxu0 %v1498
  %1646 = vmatprep.subr.mxu0 0.0
  %1647 = vmatpush2.msra.mxu0 0.0
  %1648 = vmatprep.subr.mxu0 0.0
  %1649 = vmatpush2.msra.mxu0 0.0
  %1650 = vmatprep.subr.mxu0 0.0
  %1651 = vmatpush2.msra.mxu0 0.0
  %1652 = vmatprep.subr.mxu0 0.0
  %1653 = vmatpush2.msra.mxu0 0.0
  %1654 = vmatprep.subr.mxu0 0.0
  %1655 = vmatpush2.msra.mxu0 0.0
  %1656 = vmatprep.subr.mxu0 0.0
  %1657 = vmatpush2.msra.mxu0 0.0
  %1658 = vmatprep.subr.mxu0 0.0
  %1659 = vmatpush2.msra.mxu0 0.0
  %1660 = vmatprep.subr.mxu0 0.0
  %1661 = vmatpush2.msra.mxu0 0.0
  %1662 = vmatprep.subr.mxu0 0.0
  %1663 = vmatpush2.msra.mxu0 0.0
  %1664 = vmatprep.subr.mxu0 0.0
  %1665 = vmatpush2.msra.mxu0 0.0
  %1666 = vmatprep.subr.mxu0 0.0
  %1667 = vmatpush2.msra.mxu0 0.0
  %1668 = vmatprep.subr.mxu0 0.0
  %1669 = vmatpush2.msra.mxu0 0.0
  %1670 = vmatprep.subr.mxu0 0.0
  %1671 = vmatpush2.msra.mxu0 0.0
  %1672 = vmatprep.subr.mxu0 0.0
  %1673 = vmatpush2.msra.mxu0 0.0
  %1674 = vmatprep.subr.mxu0 0.0
  %1675 = vmatpush2.msra.mxu0 0.0
  %1676 = vmatprep.subr.mxu0 0.0
  %1677 = vmatpush2.msra.mxu0 0.0
  %1678 = vmatprep.mubr.f32.mxu0 0.0
  %1679 = vmatmul.mubr.f32.gmra.mxu0 %v1612
  %v1680 = vpop.f32.mrf.mxu0
  %v1681 = vadd.f32 %v1507, %v1680
  %v1682 = vpop.f32.mrf.mxu0
  %1683 = vdwg.mxu0
  %v1684 = vadd.f32 %v1465, %v1681
  %v1685 = vxor.u32 %v1684, 2147483648
  %v1686 = vmul.f32 %v1685, 1.442695
  %v1687 = vpow.pop %v1686
  %v1688 = vadd.f32 %v1687, 1.0
  %v1689 = vrcp.pop %v1688
  %v1690 = vmul.f32 1.0, %v1689
  %1692 = vrot.lane.b32.xlu0 %v1681, 64
  %v1693 = vpop.permute.xlu0 %1692
  %v1695 = vmul.f32 %v1690, %v1693
  %1697 = vrot.lane.b32.xlu0 %v1695, 64
  %v1698 = vpop.permute.xlu0 %1697
  %v1700 = vadd.f32 %v1465, %v1698
  %v1701 = vtanh.pop %v1700
  %v1702 = vsub.f32 1.0, %v1690
  %1704 = vrot.lane.b32.xlu0 %v1701, 96
  %v1705 = vpop.permute.xlu0 %1704
  %v1707 = vmul.f32 %v1702, %v1705
  %1708 = vrot.lane.b32.xlu0 %v1610, 32
  %v1709 = vpop.permute.xlu0 %1708
  %v1711 = vmul.f32 %v1690, %v1709
  %v1712 = vadd.f32 %v1707, %v1711
  %1714 = vrot.lane.b32.xlu0 %v1712, 96
  %v1715 = vpop.permute.xlu0 %1714
  %v1717 = vmul.f32 %v224, %v1715
  %v1718 = vmul.f32 %v642, %v1610
  %v1719 = vadd.f32 %v1717, %v1718
  %v1721 = vsel %vm263, %v1719, 0
  %1723 = vmatprep.subr.mxu0 0.0
  %1724 = vmatpush1.msra.mxu0 0.0
  %1725 = vmatprep.subr.mxu0 0.0
  %1726 = vmatpush1.msra.mxu0 0.0
  %1727 = vmatprep.subr.mxu0 0.0
  %1728 = vmatpush1.msra.mxu0 0.0
  %1729 = vmatprep.subr.mxu0 0.0
  %1730 = vmatpush1.msra.mxu0 0.0
  %1731 = vmatprep.subr.mxu0 0.0
  %1732 = vmatpush1.msra.mxu0 0.0
  %1733 = vmatprep.subr.mxu0 0.0
  %1734 = vmatpush1.msra.mxu0 0.0
  %1735 = vmatprep.subr.mxu0 0.0
  %1736 = vmatpush1.msra.mxu0 0.0
  %1737 = vmatprep.subr.mxu0 0.0
  %1738 = vmatpush1.msra.mxu0 0.0
  %1739 = vmatprep.subr.mxu0 0.0
  %1740 = vmatpush1.msra.mxu0 0.0
  %1741 = vmatprep.subr.mxu0 0.0
  %1742 = vmatpush1.msra.mxu0 0.0
  %1743 = vmatprep.subr.mxu0 0.0
  %1744 = vmatpush1.msra.mxu0 0.0
  %1745 = vmatprep.subr.mxu0 0.0
  %1746 = vmatpush1.msra.mxu0 0.0
  %1747 = vmatprep.subr.mxu0 0.0
  %1748 = vmatpush1.msra.mxu0 %v1501
  %1749 = vmatprep.subr.mxu0 0.0
  %1750 = vmatpush1.msra.mxu0 %v1500
  %1751 = vmatprep.subr.mxu0 0.0
  %1752 = vmatpush1.msra.mxu0 %v1499
  %1753 = vmatprep.subr.mxu0 0.0
  %1754 = vmatpush1.msra.mxu0 %v1498
  %1755 = vmatprep.subr.mxu0 0.0
  %1756 = vmatpush2.msra.mxu0 0.0
  %1757 = vmatprep.subr.mxu0 0.0
  %1758 = vmatpush2.msra.mxu0 0.0
  %1759 = vmatprep.subr.mxu0 0.0
  %1760 = vmatpush2.msra.mxu0 0.0
  %1761 = vmatprep.subr.mxu0 0.0
  %1762 = vmatpush2.msra.mxu0 0.0
  %1763 = vmatprep.subr.mxu0 0.0
  %1764 = vmatpush2.msra.mxu0 0.0
  %1765 = vmatprep.subr.mxu0 0.0
  %1766 = vmatpush2.msra.mxu0 0.0
  %1767 = vmatprep.subr.mxu0 0.0
  %1768 = vmatpush2.msra.mxu0 0.0
  %1769 = vmatprep.subr.mxu0 0.0
  %1770 = vmatpush2.msra.mxu0 0.0
  %1771 = vmatprep.subr.mxu0 0.0
  %1772 = vmatpush2.msra.mxu0 0.0
  %1773 = vmatprep.subr.mxu0 0.0
  %1774 = vmatpush2.msra.mxu0 0.0
  %1775 = vmatprep.subr.mxu0 0.0
  %1776 = vmatpush2.msra.mxu0 0.0
  %1777 = vmatprep.subr.mxu0 0.0
  %1778 = vmatpush2.msra.mxu0 0.0
  %1779 = vmatprep.subr.mxu0 0.0
  %1780 = vmatpush2.msra.mxu0 0.0
  %1781 = vmatprep.subr.mxu0 0.0
  %1782 = vmatpush2.msra.mxu0 0.0
  %1783 = vmatprep.subr.mxu0 0.0
  %1784 = vmatpush2.msra.mxu0 0.0
  %1785 = vmatprep.subr.mxu0 0.0
  %1786 = vmatpush2.msra.mxu0 0.0
  %1787 = vmatprep.mubr.f32.mxu0 0.0
  %1788 = vmatmul.mubr.f32.gmra.mxu0 %v1721
  %v1789 = vpop.f32.mrf.mxu0
  %v1790 = vadd.f32 %v1507, %v1789
  %v1791 = vpop.f32.mrf.mxu0
  %1792 = vdwg.mxu0
  %v1793 = vadd.f32 %v1470, %v1790
  %v1794 = vxor.u32 %v1793, 2147483648
  %v1795 = vmul.f32 %v1794, 1.442695
  %v1796 = vpow.pop %v1795
  %v1797 = vadd.f32 %v1796, 1.0
  %v1798 = vrcp.pop %v1797
  %v1799 = vmul.f32 1.0, %v1798
  %1801 = vrot.lane.b32.xlu0 %v1790, 64
  %v1802 = vpop.permute.xlu0 %1801
  %v1804 = vmul.f32 %v1799, %v1802
  %1806 = vrot.lane.b32.xlu0 %v1804, 64
  %v1807 = vpop.permute.xlu0 %1806
  %v1809 = vadd.f32 %v1470, %v1807
  %v1810 = vtanh.pop %v1809
  %v1811 = vsub.f32 1.0, %v1799
  %1813 = vrot.lane.b32.xlu0 %v1810, 96
  %v1814 = vpop.permute.xlu0 %1813
  %v1816 = vmul.f32 %v1811, %v1814
  %1817 = vrot.lane.b32.xlu0 %v1719, 32
  %v1818 = vpop.permute.xlu0 %1817
  %v1820 = vmul.f32 %v1799, %v1818
  %v1821 = vadd.f32 %v1816, %v1820
  %1823 = vrot.lane.b32.xlu0 %v1821, 96
  %v1824 = vpop.permute.xlu0 %1823
  %v1826 = vmul.f32 %v225, %v1824
  %v1827 = vmul.f32 %v752, %v1719
  %v1828 = vadd.f32 %v1826, %v1827
  %v1830 = vsel %vm263, %v1828, 0
  %1832 = vmatprep.subr.mxu0 0.0
  %1833 = vmatpush1.msra.mxu0 0.0
  %1834 = vmatprep.subr.mxu0 0.0
  %1835 = vmatpush1.msra.mxu0 0.0
  %1836 = vmatprep.subr.mxu0 0.0
  %1837 = vmatpush1.msra.mxu0 0.0
  %1838 = vmatprep.subr.mxu0 0.0
  %1839 = vmatpush1.msra.mxu0 0.0
  %1840 = vmatprep.subr.mxu0 0.0
  %1841 = vmatpush1.msra.mxu0 0.0
  %1842 = vmatprep.subr.mxu0 0.0
  %1843 = vmatpush1.msra.mxu0 0.0
  %1844 = vmatprep.subr.mxu0 0.0
  %1845 = vmatpush1.msra.mxu0 0.0
  %1846 = vmatprep.subr.mxu0 0.0
  %1847 = vmatpush1.msra.mxu0 0.0
  %1848 = vmatprep.subr.mxu0 0.0
  %1849 = vmatpush1.msra.mxu0 0.0
  %1850 = vmatprep.subr.mxu0 0.0
  %1851 = vmatpush1.msra.mxu0 0.0
  %1852 = vmatprep.subr.mxu0 0.0
  %1853 = vmatpush1.msra.mxu0 0.0
  %1854 = vmatprep.subr.mxu0 0.0
  %1855 = vmatpush1.msra.mxu0 0.0
  %1856 = vmatprep.subr.mxu0 0.0
  %1857 = vmatpush1.msra.mxu0 %v1501
  %1858 = vmatprep.subr.mxu0 0.0
  %1859 = vmatpush1.msra.mxu0 %v1500
  %1860 = vmatprep.subr.mxu0 0.0
  %1861 = vmatpush1.msra.mxu0 %v1499
  %1862 = vmatprep.subr.mxu0 0.0
  %1863 = vmatpush1.msra.mxu0 %v1498
  %1864 = vmatprep.subr.mxu0 0.0
  %1865 = vmatpush2.msra.mxu0 0.0
  %1866 = vmatprep.subr.mxu0 0.0
  %1867 = vmatpush2.msra.mxu0 0.0
  %1868 = vmatprep.subr.mxu0 0.0
  %1869 = vmatpush2.msra.mxu0 0.0
  %1870 = vmatprep.subr.mxu0 0.0
  %1871 = vmatpush2.msra.mxu0 0.0
  %1872 = vmatprep.subr.mxu0 0.0
  %1873 = vmatpush2.msra.mxu0 0.0
  %1874 = vmatprep.subr.mxu0 0.0
  %1875 = vmatpush2.msra.mxu0 0.0
  %1876 = vmatprep.subr.mxu0 0.0
  %1877 = vmatpush2.msra.mxu0 0.0
  %1878 = vmatprep.subr.mxu0 0.0
  %1879 = vmatpush2.msra.mxu0 0.0
  %1880 = vmatprep.subr.mxu0 0.0
  %1881 = vmatpush2.msra.mxu0 0.0
  %1882 = vmatprep.subr.mxu0 0.0
  %1883 = vmatpush2.msra.mxu0 0.0
  %1884 = vmatprep.subr.mxu0 0.0
  %1885 = vmatpush2.msra.mxu0 0.0
  %1886 = vmatprep.subr.mxu0 0.0
  %1887 = vmatpush2.msra.mxu0 0.0
  %1888 = vmatprep.subr.mxu0 0.0
  %1889 = vmatpush2.msra.mxu0 0.0
  %1890 = vmatprep.subr.mxu0 0.0
  %1891 = vmatpush2.msra.mxu0 0.0
  %1892 = vmatprep.subr.mxu0 0.0
  %1893 = vmatpush2.msra.mxu0 0.0
  %1894 = vmatprep.subr.mxu0 0.0
  %1895 = vmatpush2.msra.mxu0 0.0
  %1896 = vmatprep.mubr.f32.mxu0 0.0
  %1897 = vmatmul.mubr.f32.gmra.mxu0 %v1830
  %v1898 = vpop.f32.mrf.mxu0
  %v1899 = vadd.f32 %v1507, %v1898
  %v1900 = vpop.f32.mrf.mxu0
  %1901 = vdwg.mxu0
  %v1902 = vadd.f32 %v1475, %v1899
  %v1903 = vxor.u32 %v1902, 2147483648
  %v1904 = vmul.f32 %v1903, 1.442695
  %v1905 = vpow.pop %v1904
  %v1906 = vadd.f32 %v1905, 1.0
  %v1907 = vrcp.pop %v1906
  %v1908 = vmul.f32 1.0, %v1907
  %1910 = vrot.lane.b32.xlu0 %v1899, 64
  %v1911 = vpop.permute.xlu0 %1910
  %v1913 = vmul.f32 %v1908, %v1911
  %1915 = vrot.lane.b32.xlu0 %v1913, 64
  %v1916 = vpop.permute.xlu0 %1915
  %v1918 = vadd.f32 %v1475, %v1916
  %v1919 = vtanh.pop %v1918
  %v1920 = vsub.f32 1.0, %v1908
  %1922 = vrot.lane.b32.xlu0 %v1919, 96
  %v1923 = vpop.permute.xlu0 %1922
  %v1925 = vmul.f32 %v1920, %v1923
  %1926 = vrot.lane.b32.xlu0 %v1828, 32
  %v1927 = vpop.permute.xlu0 %1926
  %v1929 = vmul.f32 %v1908, %v1927
  %v1930 = vadd.f32 %v1925, %v1929
  %1932 = vrot.lane.b32.xlu0 %v1930, 96
  %v1933 = vpop.permute.xlu0 %1932
  %v1935 = vmul.f32 %v226, %v1933
  %v1936 = vmul.f32 %v862, %v1828
  %v1937 = vadd.f32 %v1935, %v1936
  %v1939 = vsel %vm263, %v1937, 0
  %1941 = vmatprep.subr.mxu0 0.0
  %1942 = vmatpush1.msra.mxu0 0.0
  %1943 = vmatprep.subr.mxu0 0.0
  %1944 = vmatpush1.msra.mxu0 0.0
  %1945 = vmatprep.subr.mxu0 0.0
  %1946 = vmatpush1.msra.mxu0 0.0
  %1947 = vmatprep.subr.mxu0 0.0
  %1948 = vmatpush1.msra.mxu0 0.0
  %1949 = vmatprep.subr.mxu0 0.0
  %1950 = vmatpush1.msra.mxu0 0.0
  %1951 = vmatprep.subr.mxu0 0.0
  %1952 = vmatpush1.msra.mxu0 0.0
  %1953 = vmatprep.subr.mxu0 0.0
  %1954 = vmatpush1.msra.mxu0 0.0
  %1955 = vmatprep.subr.mxu0 0.0
  %1956 = vmatpush1.msra.mxu0 0.0
  %1957 = vmatprep.subr.mxu0 0.0
  %1958 = vmatpush1.msra.mxu0 0.0
  %1959 = vmatprep.subr.mxu0 0.0
  %1960 = vmatpush1.msra.mxu0 0.0
  %1961 = vmatprep.subr.mxu0 0.0
  %1962 = vmatpush1.msra.mxu0 0.0
  %1963 = vmatprep.subr.mxu0 0.0
  %1964 = vmatpush1.msra.mxu0 0.0
  %1965 = vmatprep.subr.mxu0 0.0
  %1966 = vmatpush1.msra.mxu0 %v1501
  %1967 = vmatprep.subr.mxu0 0.0
  %1968 = vmatpush1.msra.mxu0 %v1500
  %1969 = vmatprep.subr.mxu0 0.0
  %1970 = vmatpush1.msra.mxu0 %v1499
  %1971 = vmatprep.subr.mxu0 0.0
  %1972 = vmatpush1.msra.mxu0 %v1498
  %1973 = vmatprep.subr.mxu0 0.0
  %1974 = vmatpush2.msra.mxu0 0.0
  %1975 = vmatprep.subr.mxu0 0.0
  %1976 = vmatpush2.msra.mxu0 0.0
  %1977 = vmatprep.subr.mxu0 0.0
  %1978 = vmatpush2.msra.mxu0 0.0
  %1979 = vmatprep.subr.mxu0 0.0
  %1980 = vmatpush2.msra.mxu0 0.0
  %1981 = vmatprep.subr.mxu0 0.0
  %1982 = vmatpush2.msra.mxu0 0.0
  %1983 = vmatprep.subr.mxu0 0.0
  %1984 = vmatpush2.msra.mxu0 0.0
  %1985 = vmatprep.subr.mxu0 0.0
  %1986 = vmatpush2.msra.mxu0 0.0
  %1987 = vmatprep.subr.mxu0 0.0
  %1988 = vmatpush2.msra.mxu0 0.0
  %1989 = vmatprep.subr.mxu0 0.0
  %1990 = vmatpush2.msra.mxu0 0.0
  %1991 = vmatprep.subr.mxu0 0.0
  %1992 = vmatpush2.msra.mxu0 0.0
  %1993 = vmatprep.subr.mxu0 0.0
  %1994 = vmatpush2.msra.mxu0 0.0
  %1995 = vmatprep.subr.mxu0 0.0
  %1996 = vmatpush2.msra.mxu0 0.0
  %1997 = vmatprep.subr.mxu0 0.0
  %1998 = vmatpush2.msra.mxu0 0.0
  %1999 = vmatprep.subr.mxu0 0.0
  %2000 = vmatpush2.msra.mxu0 0.0
  %2001 = vmatprep.subr.mxu0 0.0
  %2002 = vmatpush2.msra.mxu0 0.0
  %2003 = vmatprep.subr.mxu0 0.0
  %2004 = vmatpush2.msra.mxu0 0.0
  %2005 = vmatprep.mubr.f32.mxu0 0.0
  %2006 = vmatmul.mubr.f32.gmra.mxu0 %v1939
  %v2007 = vpop.f32.mrf.mxu0
  %v2008 = vadd.f32 %v1507, %v2007
  %v2009 = vpop.f32.mrf.mxu0
  %2010 = vdwg.mxu0
  %v2011 = vadd.f32 %v1480, %v2008
  %v2012 = vxor.u32 %v2011, 2147483648
  %v2013 = vmul.f32 %v2012, 1.442695
  %v2014 = vpow.pop %v2013
  %v2015 = vadd.f32 %v2014, 1.0
  %v2016 = vrcp.pop %v2015
  %v2017 = vmul.f32 1.0, %v2016
  %2019 = vrot.lane.b32.xlu0 %v2008, 64
  %v2020 = vpop.permute.xlu0 %2019
  %v2022 = vmul.f32 %v2017, %v2020
  %2024 = vrot.lane.b32.xlu0 %v2022, 64
  %v2025 = vpop.permute.xlu0 %2024
  %v2027 = vadd.f32 %v1480, %v2025
  %v2028 = vtanh.pop %v2027
  %v2029 = vsub.f32 1.0, %v2017
  %2031 = vrot.lane.b32.xlu0 %v2028, 96
  %v2032 = vpop.permute.xlu0 %2031
  %v2034 = vmul.f32 %v2029, %v2032
  %2035 = vrot.lane.b32.xlu0 %v1937, 32
  %v2036 = vpop.permute.xlu0 %2035
  %v2038 = vmul.f32 %v2017, %v2036
  %v2039 = vadd.f32 %v2034, %v2038
  %2041 = vrot.lane.b32.xlu0 %v2039, 96
  %v2042 = vpop.permute.xlu0 %2041
  %v2044 = vmul.f32 %v227, %v2042
  %v2045 = vmul.f32 %v972, %v1937
  %v2046 = vadd.f32 %v2044, %v2045
  %v2048 = vsel %vm263, %v2046, 0
  %2050 = vmatprep.subr.mxu0 0.0
  %2051 = vmatpush1.msra.mxu0 0.0
  %2052 = vmatprep.subr.mxu0 0.0
  %2053 = vmatpush1.msra.mxu0 0.0
  %2054 = vmatprep.subr.mxu0 0.0
  %2055 = vmatpush1.msra.mxu0 0.0
  %2056 = vmatprep.subr.mxu0 0.0
  %2057 = vmatpush1.msra.mxu0 0.0
  %2058 = vmatprep.subr.mxu0 0.0
  %2059 = vmatpush1.msra.mxu0 0.0
  %2060 = vmatprep.subr.mxu0 0.0
  %2061 = vmatpush1.msra.mxu0 0.0
  %2062 = vmatprep.subr.mxu0 0.0
  %2063 = vmatpush1.msra.mxu0 0.0
  %2064 = vmatprep.subr.mxu0 0.0
  %2065 = vmatpush1.msra.mxu0 0.0
  %2066 = vmatprep.subr.mxu0 0.0
  %2067 = vmatpush1.msra.mxu0 0.0
  %2068 = vmatprep.subr.mxu0 0.0
  %2069 = vmatpush1.msra.mxu0 0.0
  %2070 = vmatprep.subr.mxu0 0.0
  %2071 = vmatpush1.msra.mxu0 0.0
  %2072 = vmatprep.subr.mxu0 0.0
  %2073 = vmatpush1.msra.mxu0 0.0
  %2074 = vmatprep.subr.mxu0 0.0
  %2075 = vmatpush1.msra.mxu0 %v1501
  %2076 = vmatprep.subr.mxu0 0.0
  %2077 = vmatpush1.msra.mxu0 %v1500
  %2078 = vmatprep.subr.mxu0 0.0
  %2079 = vmatpush1.msra.mxu0 %v1499
  %2080 = vmatprep.subr.mxu0 0.0
  %2081 = vmatpush1.msra.mxu0 %v1498
  %2082 = vmatprep.subr.mxu0 0.0
  %2083 = vmatpush2.msra.mxu0 0.0
  %2084 = vmatprep.subr.mxu0 0.0
  %2085 = vmatpush2.msra.mxu0 0.0
  %2086 = vmatprep.subr.mxu0 0.0
  %2087 = vmatpush2.msra.mxu0 0.0
  %2088 = vmatprep.subr.mxu0 0.0
  %2089 = vmatpush2.msra.mxu0 0.0
  %2090 = vmatprep.subr.mxu0 0.0
  %2091 = vmatpush2.msra.mxu0 0.0
  %2092 = vmatprep.subr.mxu0 0.0
  %2093 = vmatpush2.msra.mxu0 0.0
  %2094 = vmatprep.subr.mxu0 0.0
  %2095 = vmatpush2.msra.mxu0 0.0
  %2096 = vmatprep.subr.mxu0 0.0
  %2097 = vmatpush2.msra.mxu0 0.0
  %2098 = vmatprep.subr.mxu0 0.0
  %2099 = vmatpush2.msra.mxu0 0.0
  %2100 = vmatprep.subr.mxu0 0.0
  %2101 = vmatpush2.msra.mxu0 0.0
  %2102 = vmatprep.subr.mxu0 0.0
  %2103 = vmatpush2.msra.mxu0 0.0
  %2104 = vmatprep.subr.mxu0 0.0
  %2105 = vmatpush2.msra.mxu0 0.0
  %2106 = vmatprep.subr.mxu0 0.0
  %2107 = vmatpush2.msra.mxu0 0.0
  %2108 = vmatprep.subr.mxu0 0.0
  %2109 = vmatpush2.msra.mxu0 0.0
  %2110 = vmatprep.subr.mxu0 0.0
  %2111 = vmatpush2.msra.mxu0 0.0
  %2112 = vmatprep.subr.mxu0 0.0
  %2113 = vmatpush2.msra.mxu0 0.0
  %2114 = vmatprep.mubr.f32.mxu0 0.0
  %2115 = vmatmul.mubr.f32.gmra.mxu0 %v2048
  %v2116 = vpop.f32.mrf.mxu0
  %v2117 = vadd.f32 %v1507, %v2116
  %v2118 = vpop.f32.mrf.mxu0
  %2119 = vdwg.mxu0
  %v2120 = vadd.f32 %v1485, %v2117
  %v2121 = vxor.u32 %v2120, 2147483648
  %v2122 = vmul.f32 %v2121, 1.442695
  %v2123 = vpow.pop %v2122
  %v2124 = vadd.f32 %v2123, 1.0
  %v2125 = vrcp.pop %v2124
  %v2126 = vmul.f32 1.0, %v2125
  %2128 = vrot.lane.b32.xlu0 %v2117, 64
  %v2129 = vpop.permute.xlu0 %2128
  %v2131 = vmul.f32 %v2126, %v2129
  %2133 = vrot.lane.b32.xlu0 %v2131, 64
  %v2134 = vpop.permute.xlu0 %2133
  %v2136 = vadd.f32 %v1485, %v2134
  %v2137 = vtanh.pop %v2136
  %v2138 = vsub.f32 1.0, %v2126
  %2140 = vrot.lane.b32.xlu0 %v2137, 96
  %v2141 = vpop.permute.xlu0 %2140
  %v2143 = vmul.f32 %v2138, %v2141
  %2144 = vrot.lane.b32.xlu0 %v2046, 32
  %v2145 = vpop.permute.xlu0 %2144
  %v2147 = vmul.f32 %v2126, %v2145
  %v2148 = vadd.f32 %v2143, %v2147
  %2150 = vrot.lane.b32.xlu0 %v2148, 96
  %v2151 = vpop.permute.xlu0 %2150
  %v2153 = vmul.f32 %v228, %v2151
  %v2154 = vmul.f32 %v1082, %v2046
  %v2155 = vadd.f32 %v2153, %v2154
  %v2157 = vsel %vm263, %v2155, 0
  %2159 = vmatprep.subr.mxu0 0.0
  %2160 = vmatpush1.msra.mxu0 0.0
  %2161 = vmatprep.subr.mxu0 0.0
  %2162 = vmatpush1.msra.mxu0 0.0
  %2163 = vmatprep.subr.mxu0 0.0
  %2164 = vmatpush1.msra.mxu0 0.0
  %2165 = vmatprep.subr.mxu0 0.0
  %2166 = vmatpush1.msra.mxu0 0.0
  %2167 = vmatprep.subr.mxu0 0.0
  %2168 = vmatpush1.msra.mxu0 0.0
  %2169 = vmatprep.subr.mxu0 0.0
  %2170 = vmatpush1.msra.mxu0 0.0
  %2171 = vmatprep.subr.mxu0 0.0
  %2172 = vmatpush1.msra.mxu0 0.0
  %2173 = vmatprep.subr.mxu0 0.0
  %2174 = vmatpush1.msra.mxu0 0.0
  %2175 = vmatprep.subr.mxu0 0.0
  %2176 = vmatpush1.msra.mxu0 0.0
  %2177 = vmatprep.subr.mxu0 0.0
  %2178 = vmatpush1.msra.mxu0 0.0
  %2179 = vmatprep.subr.mxu0 0.0
  %2180 = vmatpush1.msra.mxu0 0.0
  %2181 = vmatprep.subr.mxu0 0.0
  %2182 = vmatpush1.msra.mxu0 0.0
  %2183 = vmatprep.subr.mxu0 0.0
  %2184 = vmatpush1.msra.mxu0 %v1501
  %2185 = vmatprep.subr.mxu0 0.0
  %2186 = vmatpush1.msra.mxu0 %v1500
  %2187 = vmatprep.subr.mxu0 0.0
  %2188 = vmatpush1.msra.mxu0 %v1499
  %2189 = vmatprep.subr.mxu0 0.0
  %2190 = vmatpush1.msra.mxu0 %v1498
  %2191 = vmatprep.subr.mxu0 0.0
  %2192 = vmatpush2.msra.mxu0 0.0
  %2193 = vmatprep.subr.mxu0 0.0
  %2194 = vmatpush2.msra.mxu0 0.0
  %2195 = vmatprep.subr.mxu0 0.0
  %2196 = vmatpush2.msra.mxu0 0.0
  %2197 = vmatprep.subr.mxu0 0.0
  %2198 = vmatpush2.msra.mxu0 0.0
  %2199 = vmatprep.subr.mxu0 0.0
  %2200 = vmatpush2.msra.mxu0 0.0
  %2201 = vmatprep.subr.mxu0 0.0
  %2202 = vmatpush2.msra.mxu0 0.0
  %2203 = vmatprep.subr.mxu0 0.0
  %2204 = vmatpush2.msra.mxu0 0.0
  %2205 = vmatprep.subr.mxu0 0.0
  %2206 = vmatpush2.msra.mxu0 0.0
  %2207 = vmatprep.subr.mxu0 0.0
  %2208 = vmatpush2.msra.mxu0 0.0
  %2209 = vmatprep.subr.mxu0 0.0
  %2210 = vmatpush2.msra.mxu0 0.0
  %2211 = vmatprep.subr.mxu0 0.0
  %2212 = vmatpush2.msra.mxu0 0.0
  %2213 = vmatprep.subr.mxu0 0.0
  %2214 = vmatpush2.msra.mxu0 0.0
  %2215 = vmatprep.subr.mxu0 0.0
  %2216 = vmatpush2.msra.mxu0 0.0
  %2217 = vmatprep.subr.mxu0 0.0
  %2218 = vmatpush2.msra.mxu0 0.0
  %2219 = vmatprep.subr.mxu0 0.0
  %2220 = vmatpush2.msra.mxu0 0.0
  %2221 = vmatprep.subr.mxu0 0.0
  %2222 = vmatpush2.msra.mxu0 0.0
  %2223 = vmatprep.mubr.f32.mxu0 0.0
  %2224 = vmatmul.mubr.f32.gmra.mxu0 %v2157
  %v2225 = vpop.f32.mrf.mxu0
  %v2226 = vadd.f32 %v1507, %v2225
  %v2227 = vpop.f32.mrf.mxu0
  %2228 = vdwg.mxu0
  %v2229 = vadd.f32 %v1490, %v2226
  %v2230 = vxor.u32 %v2229, 2147483648
  %v2231 = vmul.f32 %v2230, 1.442695
  %v2232 = vpow.pop %v2231
  %v2233 = vadd.f32 %v2232, 1.0
  %v2234 = vrcp.pop %v2233
  %v2235 = vmul.f32 1.0, %v2234
  %2237 = vrot.lane.b32.xlu0 %v2226, 64
  %v2238 = vpop.permute.xlu0 %2237
  %v2240 = vmul.f32 %v2235, %v2238
  %2242 = vrot.lane.b32.xlu0 %v2240, 64
  %v2243 = vpop.permute.xlu0 %2242
  %v2245 = vadd.f32 %v1490, %v2243
  %v2246 = vtanh.pop %v2245
  %v2247 = vsub.f32 1.0, %v2235
  %2249 = vrot.lane.b32.xlu0 %v2246, 96
  %v2250 = vpop.permute.xlu0 %2249
  %v2252 = vmul.f32 %v2247, %v2250
  %2253 = vrot.lane.b32.xlu0 %v2155, 32
  %v2254 = vpop.permute.xlu0 %2253
  %v2256 = vmul.f32 %v2235, %v2254
  %v2257 = vadd.f32 %v2252, %v2256
  %2259 = vrot.lane.b32.xlu0 %v2257, 96
  %v2260 = vpop.permute.xlu0 %2259
  %v2262 = vmul.f32 %v229, %v2260
  %v2263 = vmul.f32 %v1192, %v2155
  %v2264 = vadd.f32 %v2262, %v2263
  %v2266 = vsel %vm263, %v2264, 0
  %2268 = vmatprep.subr.mxu0 0.0
  %2269 = vmatpush1.msra.mxu0 0.0
  %2270 = vmatprep.subr.mxu0 0.0
  %2271 = vmatpush1.msra.mxu0 0.0
  %2272 = vmatprep.subr.mxu0 0.0
  %2273 = vmatpush1.msra.mxu0 0.0
  %2274 = vmatprep.subr.mxu0 0.0
  %2275 = vmatpush1.msra.mxu0 0.0
  %2276 = vmatprep.subr.mxu0 0.0
  %2277 = vmatpush1.msra.mxu0 0.0
  %2278 = vmatprep.subr.mxu0 0.0
  %2279 = vmatpush1.msra.mxu0 0.0
  %2280 = vmatprep.subr.mxu0 0.0
  %2281 = vmatpush1.msra.mxu0 0.0
  %2282 = vmatprep.subr.mxu0 0.0
  %2283 = vmatpush1.msra.mxu0 0.0
  %2284 = vmatprep.subr.mxu0 0.0
  %2285 = vmatpush1.msra.mxu0 0.0
  %2286 = vmatprep.subr.mxu0 0.0
  %2287 = vmatpush1.msra.mxu0 0.0
  %2288 = vmatprep.subr.mxu0 0.0
  %2289 = vmatpush1.msra.mxu0 0.0
  %2290 = vmatprep.subr.mxu0 0.0
  %2291 = vmatpush1.msra.mxu0 0.0
  %2292 = vmatprep.subr.mxu0 0.0
  %2293 = vmatpush1.msra.mxu0 %v1501
  %2294 = vmatprep.subr.mxu0 0.0
  %2295 = vmatpush1.msra.mxu0 %v1500
  %2296 = vmatprep.subr.mxu0 0.0
  %2297 = vmatpush1.msra.mxu0 %v1499
  %2298 = vmatprep.subr.mxu0 0.0
  %2299 = vmatpush1.msra.mxu0 %v1498
  %2300 = vmatprep.subr.mxu0 0.0
  %2301 = vmatpush2.msra.mxu0 0.0
  %2302 = vmatprep.subr.mxu0 0.0
  %2303 = vmatpush2.msra.mxu0 0.0
  %2304 = vmatprep.subr.mxu0 0.0
  %2305 = vmatpush2.msra.mxu0 0.0
  %2306 = vmatprep.subr.mxu0 0.0
  %2307 = vmatpush2.msra.mxu0 0.0
  %2308 = vmatprep.subr.mxu0 0.0
  %2309 = vmatpush2.msra.mxu0 0.0
  %2310 = vmatprep.subr.mxu0 0.0
  %2311 = vmatpush2.msra.mxu0 0.0
  %2312 = vmatprep.subr.mxu0 0.0
  %2313 = vmatpush2.msra.mxu0 0.0
  %2314 = vmatprep.subr.mxu0 0.0
  %2315 = vmatpush2.msra.mxu0 0.0
  %2316 = vmatprep.subr.mxu0 0.0
  %2317 = vmatpush2.msra.mxu0 0.0
  %2318 = vmatprep.subr.mxu0 0.0
  %2319 = vmatpush2.msra.mxu0 0.0
  %2320 = vmatprep.subr.mxu0 0.0
  %2321 = vmatpush2.msra.mxu0 0.0
  %2322 = vmatprep.subr.mxu0 0.0
  %2323 = vmatpush2.msra.mxu0 0.0
  %2324 = vmatprep.subr.mxu0 0.0
  %2325 = vmatpush2.msra.mxu0 0.0
  %2326 = vmatprep.subr.mxu0 0.0
  %2327 = vmatpush2.msra.mxu0 0.0
  %2328 = vmatprep.subr.mxu0 0.0
  %2329 = vmatpush2.msra.mxu0 0.0
  %2330 = vmatprep.subr.mxu0 0.0
  %2331 = vmatpush2.msra.mxu0 0.0
  %2332 = vmatprep.mubr.f32.mxu0 0.0
  %2333 = vmatmul.mubr.f32.gmra.mxu0 %v2266
  %v2334 = vpop.f32.mrf.mxu0
  %v2335 = vadd.f32 %v1507, %v2334
  %v2336 = vpop.f32.mrf.mxu0
  %2337 = vdwg.mxu0
  %v2338 = vadd.f32 %v1495, %v2335
  %v2339 = vxor.u32 %v2338, 2147483648
  %v2340 = vmul.f32 %v2339, 1.442695
  %v2341 = vpow.pop %v2340
  %v2342 = vadd.f32 %v2341, 1.0
  %v2343 = vrcp.pop %v2342
  %v2344 = vmul.f32 1.0, %v2343
  %2346 = vrot.lane.b32.xlu0 %v2335, 64
  %v2347 = vpop.permute.xlu0 %2346
  %v2349 = vmul.f32 %v2344, %v2347
  %2351 = vrot.lane.b32.xlu0 %v2349, 64
  %v2352 = vpop.permute.xlu0 %2351
  %v2354 = vadd.f32 %v1495, %v2352
  %v2355 = vtanh.pop %v2354
  %v2356 = vsub.f32 1.0, %v2344
  %2358 = vrot.lane.b32.xlu0 %v2355, 96
  %v2359 = vpop.permute.xlu0 %2358
  %v2361 = vmul.f32 %v2356, %v2359
  %2362 = vrot.lane.b32.xlu0 %v2264, 32
  %v2363 = vpop.permute.xlu0 %2362
  %v2365 = vmul.f32 %v2344, %v2363
  %v2366 = vadd.f32 %v2361, %v2365
  %2368 = vrot.lane.b32.xlu0 %v2366, 96
  %v2369 = vpop.permute.xlu0 %2368
  %v2371 = vmul.f32 %v230, %v2369
  %v2372 = vmul.f32 %v1302, %v2264
  %v2373 = vadd.f32 %v2371, %v2372
  %v2374 = vsel %vm1305, %v1609, %v2371
  %v2375 = vsel %vm1305, %v1717, %v2262
  %v2376 = vsel %vm1305, %v1826, %v2153
  %v2377 = vsel %vm1305, %v1935, %v2044
  %v2378 = vsel %vm1305, %v2044, %v1935
  %v2379 = vsel %vm1305, %v2153, %v1826
  %v2380 = vsel %vm1305, %v2262, %v1717
  %v2381 = vsel %vm1305, %v2371, %v1609
  %v2382 = vsel %vm263, %v2374, 0.0
  %v2383 = vsel %vm263, %v2375, 0.0
  %v2384 = vsel %vm263, %v2376, 0.0
  %v2385 = vsel %vm263, %v2377, 0.0
  %v2386 = vsel %vm263, %v2378, 0.0
  %v2387 = vsel %vm263, %v2379, 0.0
  %v2388 = vsel %vm263, %v2380, 0.0
  %v2389 = vsel %vm263, %v2381, 0.0
  %2390 = vst [vmem:[%s11] sm:$0xff] %v2382
  %2391 = vst [vmem:[%s11 + $0x8] sm:$0xff] %v2383
  %2392 = vst [vmem:[%s11 + $0x10] sm:$0xff] %v2384
  %2393 = vst [vmem:[%s11 + $0x18] sm:$0xff] %v2385
  %2394 = vst [vmem:[%s11 + $0x20] sm:$0xff] %v2386
  %2395 = vst [vmem:[%s11 + $0x28] sm:$0xff] %v2387
  %2396 = vst [vmem:[%s11 + $0x30] sm:$0xff] %v2388
  %2397 = vst [vmem:[%s11 + $0x38] sm:$0xff] %v2389
  %2399 = vrot.lane.b32.xlu0 %v1304, 112
  %v2400 = vpop.permute.xlu0 %2399
  %2403 = vrot.lane.b32.xlu0 %v2373, 112
  %v2404 = vpop.permute.xlu0 %2403
  %v2406 = vsel %vm1305, %v1304, 0.0
  %v2407 = vsel %vm1305, %v2400, 0.0
  %v2408 = vsel %vm1305, %v2373, 0.0
  %v2409 = vsel %vm1305, %v2404, 0.0
  %2410 = vst [vmem:[%s12] sm:$0xff] %v2406
  %2411 = vst [vmem:[%s12 + $0x8] sm:$0xff] %v2407
  %2412 = vst [vmem:[%s12 + $0x10] sm:$0xff] %v2408
  %2413 = vst [vmem:[%s12 + $0x18] sm:$0xff] %v2409
  // Predicated region
  $region46: #{encoder_forward.1} parent=0 // pred_check
    _
  $region47: #{encoder_forward.1} parent=0 // pred_check_branch
    %2415 = sbr.rel (0) target = $region49
  $region48: #{encoder_forward.1} parent=0 // pred_region
    _
  $region49: #{encoder_forward.1} parent=0 // pred_fallthru
    _
  // Predicated region
  $region50: #{encoder_forward.1} parent=0 // pred_check
    _
  $region51: #{encoder_forward.1} parent=0 // pred_check_branch
    %2417 = sbr.rel (0) target = $region53
  $region52: #{encoder_forward.1} parent=0 // pred_region
    _
  $region53: #{encoder_forward.1} parent=0 // pred_fallthru
    _
  // Predicated region
  $region54: #{encoder_forward.1} parent=0 // pred_check
    _
  $region55: #{encoder_forward.1} parent=0 // pred_check_branch
    %2419 = sbr.rel (0) target = $region57
  $region56: #{encoder_forward.1} parent=0 // pred_region
    _
  $region57: #{encoder_forward.1} parent=0 // pred_fallthru
    _
  // Predicated region
  $region58: #{encoder_forward.1} parent=0 // pred_check
    _
  $region59: #{encoder_forward.1} parent=0 // pred_check_branch
    %2421 = sbr.rel (0) target = $region61
  $region60: #{encoder_forward.1} parent=0 // pred_region
    _
  $region61: #{encoder_forward.1} parent=0 // pred_fallthru
    _

</llo_original>
